<compile_context>
chip_gen: v7x
topology: tpu7x:2x2x1
jax: 0.10.0
libtpu: 0.0.40
codegen_flags: <defaults>
</compile_context>

<pallas_src>
import functools

import jax
import jax.numpy as jnp
from jax.experimental import pallas as pl
from jax.experimental.pallas import tpu as pltpu

_VMEM_LIMIT_BYTES = 48 * 1024 * 1024  # 2 x 16 MiB bf16 weight double-buffer + slack


def _linear_kernel(x_ref, w_ref, b_ref, o_ref, *, apply_relu):
    """One full (B, tn) output tile: o = x @ w + b [+ ReLU]. No K reduction axis."""
    r = jnp.dot(
        x_ref[...].astype(jnp.bfloat16),   # tiny (B, K) activation block
        w_ref[...],                        # (K, tn) bf16 weight tile
        preferred_element_type=jnp.float32,
    )
    r = r + b_ref[...]
    if apply_relu:
        r = jnp.maximum(r, 0.0)
    o_ref[...] = r.astype(o_ref.dtype)


def pallas_linear_blocked(x, w_blocked, b, *, relu):
    """x: (B, K) f32, w_blocked: (nb, K, tn) bf16, b: (1, nb*tn) f32 -> (B, nb*tn) f32.

    1-D grid over the nb output tiles; the full K dimension is consumed per
    tile (GEMV-like: weights dominate traffic, activations are tiny and stay
    resident across the grid).
    """
    B, K = x.shape
    nb, K2, tn = w_blocked.shape
    N = nb * tn
    assert K == K2, (K, K2)
    assert b.shape == (1, N), (b.shape, N)
    assert tn % 128 == 0, tn
    assert K % 128 == 0, K

    kernel = functools.partial(_linear_kernel, apply_relu=relu)
    cost = pl.CostEstimate(
        flops=2 * B * K * N,
        transcendentals=0,
        bytes_accessed=B * K * 4 + K * N * 2 + N * 4 + B * N * 4,
    )

    return pl.pallas_call(
        kernel,
        out_shape=jax.ShapeDtypeStruct((B, N), jnp.float32),
        grid_spec=pltpu.PrefetchScalarGridSpec(
            num_scalar_prefetch=0,
            grid=(nb,),
            in_specs=[
                pl.BlockSpec((B, K), lambda j: (0, 0)),            # resident activations
                pl.BlockSpec((None, K, tn), lambda j: (j, 0, 0)),  # contiguous bf16 weight tile
                pl.BlockSpec((1, tn), lambda j: (0, j)),           # bias tile
            ],
            out_specs=pl.BlockSpec((B, tn), lambda j: (0, j)),
        ),
        compiler_params=pltpu.CompilerParams(
            dimension_semantics=("parallel",),
            vmem_limit_bytes=_VMEM_LIMIT_BYTES,
        ),
        cost_estimate=cost,
    )(x, w_blocked, b)


def init_params(key, num_classes=10):
    """Deterministic init matching nn.Linear default (uniform +-1/sqrt(fan_in))."""
    dims = [(512, 4096), (4096, 4096), (4096, num_classes)]
    params = []
    for i, (fan_in, fan_out) in enumerate(dims):
        kw, kb = jax.random.split(jax.random.fold_in(key, i))
        bound = 1.0 / jnp.sqrt(jnp.float32(fan_in))
        w = jax.random.uniform(
            kw, (fan_in, fan_out), jnp.float32, minval=-bound, maxval=bound
        )
        b = jax.random.uniform(
            kb, (1, fan_out), jnp.float32, minval=-bound, maxval=bound
        )
        params.append((w, b))
    return params


def _block_weight(w_bf16, tn):
    """(K, N) -> (N//tn, K, tn): tile j is w[:, j*tn:(j+1)*tn], contiguous in HBM."""
    K, N = w_bf16.shape
    assert N % tn == 0, (N, tn)
    return w_bf16.reshape(K, N // tn, tn).transpose(1, 0, 2)


def prepare_params(params, *, tn1=2048, tn2=2048):
    """One-time prep: cast weights to bf16, pre-block into (nb, K, tn), and pad the
    final layer's output width up to a multiple of 128 lanes (hoisted off the
    per-call hot path)."""
    (w1, b1), (w2, b2), (w3, b3) = params
    num_classes = w3.shape[1]
    n_pad = ((num_classes + 127) // 128) * 128
    w3p = jnp.zeros((w3.shape[0], n_pad), jnp.float32).at[:, :num_classes].set(w3)
    b3p = jnp.zeros((1, n_pad), jnp.float32).at[:, :num_classes].set(b3)
    prepped = [
        (_block_weight(w1.astype(jnp.bfloat16), tn1), b1),
        (_block_weight(w2.astype(jnp.bfloat16), tn2), b2),
        (_block_weight(w3p.astype(jnp.bfloat16), n_pad), b3p),
    ]
    return prepped, num_classes


def vgg16_dropout_later_part(x_nchw, prepped_params, num_classes):
    """Forward pass. x_nchw: (B, C, H, W) with C*H*W == 512."""
    B = x_nchw.shape[0]
    x = x_nchw.reshape(B, -1).astype(jnp.float32)  # x.view(B, -1)

    (w1, b1), (w2, b2), (w3, b3) = prepped_params

    # TODO(synk): Dropout(0.5) is eval-mode identity here; training-mode masking
    #             would use pltpu.prng_seed / pltpu.prng_random_bits + 2x scale.
    x = pallas_linear_blocked(x, w1, b1, relu=True)    # Linear(512,4096)+ReLU (+dropout1=id)
    x = pallas_linear_blocked(x, w2, b2, relu=True)    # Linear(4096,4096)+ReLU (+dropout2=id)
    x = pallas_linear_blocked(x, w3, b3, relu=False)   # Linear(4096,num_classes), padded lanes
    return x[:, :num_classes]


if __name__ == "__main__":
    key = jax.random.PRNGKey(0)
    k_x, k_p = jax.random.split(key)

    # Input: NCHW, flattens to 512 features (32 * 4 * 4 = 512), batch = 2.
    x = jax.random.normal(k_x, (2, 32, 4, 4), dtype=jnp.float32)
    raw_params = init_params(k_p, num_classes=10)
    prepped, num_classes = prepare_params(raw_params)

    out = vgg16_dropout_later_part(x, prepped, num_classes)
    out = jax.block_until_ready(out)
    assert out.shape == (2, num_classes), out.shape

    # Sanity check against a plain-JAX reference using the same bf16 weight /
    # bf16-activation-at-the-dot, f32-accumulate recipe.
    def _ref_lin(h, w, b, relu):
        r = jnp.dot(
            h.astype(jnp.bfloat16),
            w.astype(jnp.bfloat16),
            preferred_element_type=jnp.float32,
        ) + b
        return jnp.maximum(r, 0.0) if relu else r

    xf = x.reshape(2, -1).astype(jnp.float32)
    (w1, b1), (w2, b2), (w3, b3) = raw_params
    ref = _ref_lin(xf, w1, b1, True)
    ref = _ref_lin(ref, w2, b2, True)
    ref = _ref_lin(ref, w3, b3, False)
    max_err = float(jnp.max(jnp.abs(out - ref)))
    assert jnp.allclose(out, ref, atol=1e-2, rtol=1e-2), max_err

    print("KERNEL_OK")
</pallas_src>

<mosaic_0001>
module attributes {stable_mosaic.version = 11 : i64} {
  func.func @_linear_kernel(%arg0: i32, %arg1: memref<2x512xf32, #tpu.memory_space<vmem>>, %arg2: memref<1x512x2048xbf16, #tpu.memory_space<vmem>>, %arg3: memref<1x2048xf32, #tpu.memory_space<vmem>>, %arg4: memref<2x2048xf32, #tpu.memory_space<vmem>>) attributes {dimension_semantics = [#tpu.dimension_semantics<parallel>], iteration_bounds = array<i64: 2>, scalar_prefetch = 0 : i64, scratch_operands = 0 : i64, tpu.core_type = #tpu.core_type<tc>, window_params = [{pipeline_mode = #tpu.pipeline_mode<synchronous>, transform_indices = @transform_0, window_bounds = array<i64: 2, 512>}, {transform_indices = @transform_1, window_bounds = array<i64: 1, 512, 2048>}, {transform_indices = @transform_2, window_bounds = array<i64: 1, 2048>}, {transform_indices = @transform_3, window_bounds = array<i64: 2, 2048>}]} {
    %c0 = arith.constant 0 : index
    %c0_0 = arith.constant 0 : index
    %0 = vector.load %arg1[%c0, %c0_0] : memref<2x512xf32, #tpu.memory_space<vmem>>, vector<2x512xf32>
    %1 = arith.truncf %0 : vector<2x512xf32> to vector<2x512xbf16>
    %c0_1 = arith.constant 0 : index
    %c0_2 = arith.constant 0 : index
    %c0_3 = arith.constant 0 : index
    %2 = vector.load %arg2[%c0_1, %c0_2, %c0_3] : memref<1x512x2048xbf16, #tpu.memory_space<vmem>>, vector<1x512x2048xbf16>
    %3 = vector.shape_cast %2 : vector<1x512x2048xbf16> to vector<512x2048xbf16>
    %cst = arith.constant dense<0.000000e+00> : vector<2x2048xf32>
    %4 = tpu.matmul %1, %3, %cst {dimension_numbers = #tpu.dot_dimension_numbers<[1], [0], [0], [1], [0, 0, 1, 1], [], []>} : vector<2x512xbf16>, vector<512x2048xbf16>, vector<2x2048xf32> -> vector<2x2048xf32>
    %c0_4 = arith.constant 0 : index
    %c0_5 = arith.constant 0 : index
    %5 = vector.load %arg3[%c0_4, %c0_5] : memref<1x2048xf32, #tpu.memory_space<vmem>>, vector<1x2048xf32>
    %6 = vector.broadcast %5 : vector<1x2048xf32> to vector<2x2048xf32>
    %7 = arith.addf %4, %6 : vector<2x2048xf32>
    %cst_6 = arith.constant 0.000000e+00 : f32
    %8 = vector.broadcast %cst_6 : f32 to vector<2x2048xf32>
    %9 = arith.maximumf %7, %8 : vector<2x2048xf32>
    %c0_7 = arith.constant 0 : index
    %c0_8 = arith.constant 0 : index
    %10 = vector.load %arg4[%c0_7, %c0_8] : memref<2x2048xf32, #tpu.memory_space<vmem>>, vector<2x2048xf32>
    tpu.vector_store %arg4[%c0_7, %c0_8], %9 {strides = array<i32>} : memref<2x2048xf32, #tpu.memory_space<vmem>>, vector<2x2048xf32>,
    return
  }
  func.func @transform_0(%arg0: i32) -> (i32, i32) {
    %c0_i32 = arith.constant 0 : i32
    %c0_i32_0 = arith.constant 0 : i32
    %c0_i32_1 = arith.constant 0 : i32
    return %c0_i32, %c0_i32_0 : i32, i32
  }
  func.func @transform_1(%arg0: i32) -> (i32, i32, i32) {
    %c0_i32 = arith.constant 0 : i32
    %c0_i32_0 = arith.constant 0 : i32
    %c0_i32_1 = arith.constant 0 : i32
    return %arg0, %c0_i32, %c0_i32_0 : i32, i32, i32
  }
  func.func @transform_2(%arg0: i32) -> (i32, i32) {
    %c0_i32 = arith.constant 0 : i32
    %c0_i32_0 = arith.constant 0 : i32
    return %c0_i32, %arg0 : i32, i32
  }
  func.func @transform_3(%arg0: i32) -> (i32, i32) {
    %c0_i32 = arith.constant 0 : i32
    %c0_i32_0 = arith.constant 0 : i32
    return %c0_i32, %arg0 : i32, i32
  }
}

</mosaic_0001>

<llo_original>
// kernel: tpu_custom_call.1
$region0: #{tpu_custom_call.1}
  #allocation0 [shape = 'u32[]', space=smem, size = 0x4, offset = 0x4, fixed_abs, tag = 'smem constant byte address 0x4 - core index']
  #allocation1 [shape = 'u32[144,128]{1,0:T(1,128)}', space=vmem, size = 0x12000, scoped, tag = 'internal scratch']
  %s0 = inlined_call_operand.hbm [shape: f32[2,512], index: 0, kind: input, shape index: {}]
  %s1 = inlined_call_operand.hbm [shape: bf16[2,512,2048], index: 1, kind: input, shape index: {}]
  %s2 = inlined_call_operand.hbm [shape: f32[1,4096], index: 2, kind: input, shape index: {}]
  %s3 = inlined_call_operand.hbm [shape: f32[2,4096], index: 3, kind: output, shape index: {}]
  %s4 = sld [smem:[#allocation0]]
  $region57: #{tpu_custom_call.1} parent=0
    _
  %s6 = ssub.s32 1, %s4
  %s7 = scalar_select 0, %s6, %s4
  $region1: #{tpu_custom_call.1} parent=0
    #allocation2 [shape = 'u8[4096]{0}', space=vmem, size = 0x1000, scoped, tag = 'input window, operand 0, single buffered']
    #allocation3 [shape = 's32[2]{0}', space=sflag, size = 0x8, scoped, tag = 'scoped memory for tpu_custom_call.1']
    #allocation4 [shape = 's32[2]{0}', space=sflag, size = 0x8, scoped, tag = 'scoped memory for tpu_custom_call.1']
    #allocation5 [shape = 'u8[4194304]{0}', space=vmem, size = 0x400000, scoped, tag = 'input window, operand 1']
    #allocation6 [shape = 's32[2]{0}', space=sflag, size = 0x8, scoped, tag = 'scoped memory for tpu_custom_call.1']
    #allocation7 [shape = 'u8[16384]{0}', space=vmem, size = 0x4000, scoped, tag = 'input window, operand 2']
    #allocation8 [shape = 'u8[32768]{0}', space=vmem, size = 0x8000, scoped, tag = 'output window, operand 0']
    %8 = vsyncpa [#allocation3], 0
    %9 = vsyncpa [#allocation6], 0
    %s10 = scalar_lea.sflag [#allocation6], 1
    %11 = vsyncpa %s10, 0
    %12 = vsyncpa [#allocation4], 0
    %s13 = scalar_lea.sflag [#allocation4], 1
    %14 = vsyncpa %s13, 0
    loop: start=0, step=1, limit=4
    $region2: #{tpu_custom_call.1} parent=1 // loop_pre_header
      _
    $region3: #{tpu_custom_call.1} parent=1 // loop_header
      %s16 = sphi 0, %s20
      %p17 = scmp.ge.s32.totalorder %s16, 4
      %s24 = sphi 0, %s24
      %s26 = sphi 0, %s24
      %s27 = sphi 0, %s26
      %s41 = sphi 0, %s27
      %s47 = sphi 0, %s49
      %s50 = sphi 0, %s47
      %s51 = sphi 0, %s50
      %s67 = sphi 0, %s51
      %s73 = sphi 0, %s75
      %s76 = sphi 0, %s73
      %s77 = sphi 0, %s76
      %s93 = sphi 0, %s77
      %s99 = sphi 0, %s101
      %s102 = sphi 0, %s99
      %s103 = sphi 0, %s102
      %s119 = sphi 0, %s103
    $region4: #{tpu_custom_call.1} parent=1 // loop_header_branch
      %19 = sbr.rel (%p17) target = $region8
    $region5: #{tpu_custom_call.1} parent=1 // loop_body
      %s21 = ssub.s32 %s16, 1
      %s22 = ssub.s32 %s16, 2
      %s23 = sadd.s32 %s16, 1
      %s25 = sadd.s32 %s24, 1
      %p28 = scmp.eq.s32.totalorder %s16, 1
      %p29 = scmp.ne.s32.totalorder %s24, %s26
      %p30 = scmp.eq.s32.totalorder %s16, 0
      %p31 = por %p29, %p30
      %p32 = scmp.ne.s32.totalorder %s24, %s26
      %p33 = scmp.eq.s32.totalorder %s21, 1
      %p34 = por %p32, %p33
      %p35 = scmp.ne.s32.totalorder %s26, %s27
      %p36 = scmp.eq.s32.totalorder %s21, 0
      %p37 = por %p35, %p36
      %p38 = scmp.ne.s32.totalorder %s26, %s27
      %p39 = scmp.eq.s32.totalorder %s22, 1
      %p40 = por %p38, %p39
      %p42 = scmp.ne.s32.totalorder %s27, %s41
      %p43 = scmp.eq.s32.totalorder %s22, 0
      %p44 = por %p42, %p43
      %s45 = ssub.s32 %s16, %s23
      %p46 = scmp.eq.s32.totalorder %s45, 0
      %s48 = sadd.s32 %s47, 1
      %s49 = scalar_select %p46, %s47, %s48
      %p52 = pneg %p46
      %p53 = scmp.eq.s32.totalorder %s16, 1
      %p54 = por %p52, %p53
      %p55 = scmp.ne.s32.totalorder %s47, %s50
      %p56 = scmp.eq.s32.totalorder %s16, 0
      %p57 = por %p55, %p56
      %p58 = scmp.ne.s32.totalorder %s47, %s50
      %p59 = scmp.eq.s32.totalorder %s21, 1
      %p60 = por %p58, %p59
      %p61 = scmp.ne.s32.totalorder %s50, %s51
      %p62 = scmp.eq.s32.totalorder %s21, 0
      %p63 = por %p61, %p62
      %p64 = scmp.ne.s32.totalorder %s50, %s51
      %p65 = scmp.eq.s32.totalorder %s22, 1
      %p66 = por %p64, %p65
      %p68 = scmp.ne.s32.totalorder %s51, %s67
      %p69 = scmp.eq.s32.totalorder %s22, 0
      %p70 = por %p68, %p69
      %s71 = ssub.s32 %s16, %s23
      %p72 = scmp.eq.s32.totalorder %s71, 0
      %s74 = sadd.s32 %s73, 1
      %s75 = scalar_select %p72, %s73, %s74
      %p78 = pneg %p72
      %p79 = scmp.eq.s32.totalorder %s16, 1
      %p80 = por %p78, %p79
      %p81 = scmp.ne.s32.totalorder %s73, %s76
      %p82 = scmp.eq.s32.totalorder %s16, 0
      %p83 = por %p81, %p82
      %p84 = scmp.ne.s32.totalorder %s73, %s76
      %p85 = scmp.eq.s32.totalorder %s21, 1
      %p86 = por %p84, %p85
      %p87 = scmp.ne.s32.totalorder %s76, %s77
      %p88 = scmp.eq.s32.totalorder %s21, 0
      %p89 = por %p87, %p88
      %p90 = scmp.ne.s32.totalorder %s76, %s77
      %p91 = scmp.eq.s32.totalorder %s22, 1
      %p92 = por %p90, %p91
      %p94 = scmp.ne.s32.totalorder %s77, %s93
      %p95 = scmp.eq.s32.totalorder %s22, 0
      %p96 = por %p94, %p95
      %s97 = ssub.s32 %s16, %s23
      %p98 = scmp.eq.s32.totalorder %s97, 0
      %s100 = sadd.s32 %s99, 1
      %s101 = scalar_select %p98, %s99, %s100
      %p104 = pneg %p98
      %p105 = scmp.eq.s32.totalorder %s16, 1
      %p106 = por %p104, %p105
      %p107 = scmp.ne.s32.totalorder %s99, %s102
      %p108 = scmp.eq.s32.totalorder %s16, 0
      %p109 = por %p107, %p108
      %p110 = scmp.ne.s32.totalorder %s99, %s102
      %p111 = scmp.eq.s32.totalorder %s21, 1
      %p112 = por %p110, %p111
      %p113 = scmp.ne.s32.totalorder %s102, %s103
      %p114 = scmp.eq.s32.totalorder %s21, 0
      %p115 = por %p113, %p114
      %p116 = scmp.ne.s32.totalorder %s102, %s103
      %p117 = scmp.eq.s32.totalorder %s22, 1
      %p118 = por %p116, %p117
      %p120 = scmp.ne.s32.totalorder %s103, %s119
      %p121 = scmp.eq.s32.totalorder %s22, 0
      %p122 = por %p120, %p121
      %p123 = scmp.le.s32.totalorder 1, %s16
      %p124 = scmp.lt.s32.totalorder %s16, 3
      %p125 = pnand %p123, %p124
      %p126 = pneg %p125
      // Predicated region
      $region9: #{tpu_custom_call.1} parent=5 // pred_check
        _
      $region10: #{tpu_custom_call.1} parent=5 // pred_check_branch
        %128 = sbr.rel (%p125) target = $region12
      $region11: #{tpu_custom_call.1} parent=5 // pred_region
        %s129 = ssub.s32 %s16, 1
        // Predicated region
        $region13: #{tpu_custom_call.1} parent=11 // pred_check
          %p130 = pneg %p37
        $region14: #{tpu_custom_call.1} parent=11 // pred_check_branch
          %132 = sbr.rel (%p130) target = $region16
        $region15: #{tpu_custom_call.1} parent=11 // pred_region
          %s134 = ssub.s32 128, 128
          %135 = vsyncadd [#allocation3], %s134
          %s137 = sshll.u32 [#allocation2], 4
          %s138 = int_to_ptr.vmem [resolvable:$true] %s137
          %140 = dma.hbm_to_vmem [thread:$0]  %s0, 128, %s138, [#allocation3]
        $region16: #{tpu_custom_call.1} parent=11 // pred_fallthru
          _
      $region12: #{tpu_custom_call.1} parent=5 // pred_fallthru
        _
      %p141 = scmp.lt.s32.totalorder %s16, 2
      // Predicated region
      $region17: #{tpu_custom_call.1} parent=5 // pred_check
        %p142 = pneg %p141
      $region18: #{tpu_custom_call.1} parent=5 // pred_check_branch
        %144 = sbr.rel (%p142) target = $region20
      $region19: #{tpu_custom_call.1} parent=5 // pred_region
        // Predicated region
        $region21: #{tpu_custom_call.1} parent=19 // pred_check
          %p145 = pneg %p57
        $region22: #{tpu_custom_call.1} parent=19 // pred_check_branch
          %147 = sbr.rel (%p145) target = $region24
        $region23: #{tpu_custom_call.1} parent=19 // pred_region
          %s148 = sand.u32 %s16, 1
          %s149 = scalar_lea.sflag [#allocation6], %s148
          %s150 = sand.u32 %s47, 1
          %s151 = smul.addr %s150, 4096
          %s152 = scalar_lea.vmem [#allocation5], %s151
          %s154 = ssub.s32 65536, 65536
          %155 = vsyncadd %s149, %s154
          %s156 = smul.addr %s16, 1024
          %s157 = smul.addr %s156, 64
          %s158 = scalar_lea.hbm %s1, %s157
          %s159 = sshll.u32 %s152, 4
          %s160 = int_to_ptr.vmem [resolvable:$true] %s159
          %165 = dma.hbm_to_vmem [thread:$0]  %s158, 65536, %s160, %s149, 1024, 1024, 64
        $region24: #{tpu_custom_call.1} parent=19 // pred_fallthru
          _
        // Predicated region
        $region25: #{tpu_custom_call.1} parent=19 // pred_check
          %p166 = pneg %p83
        $region26: #{tpu_custom_call.1} parent=19 // pred_check_branch
          %168 = sbr.rel (%p166) target = $region28
        $region27: #{tpu_custom_call.1} parent=19 // pred_region
          %s169 = sand.u32 %s16, 1
          %s170 = scalar_lea.sflag [#allocation6], %s169
          %s171 = sand.u32 %s73, 1
          %s172 = smul.addr %s171, 16
          %s173 = scalar_lea.vmem [#allocation7], %s172
          %s174 = smul.u32 16, %s16
          %s176 = ssub.s32 256, 256
          %177 = vsyncadd %s170, %s176
          %s178 = smul.addr %s174, 16
          %s179 = scalar_lea.hbm %s2, %s178
          %s181 = sshll.u32 %s173, 4
          %s182 = int_to_ptr.vmem [resolvable:$true] %s181
          %184 = dma.hbm_to_vmem [thread:$0]  %s179, 256, %s182, %s170
        $region28: #{tpu_custom_call.1} parent=19 // pred_fallthru
          _
      $region20: #{tpu_custom_call.1} parent=5 // pred_fallthru
        _
      %p185 = scmp.le.s32.totalorder 1, %s16
      %p186 = scmp.lt.s32.totalorder %s16, 3
      %p187 = pnand %p185, %p186
      %p188 = pneg %p187
      // Predicated region
      $region29: #{tpu_custom_call.1} parent=5 // pred_check
        _
      $region30: #{tpu_custom_call.1} parent=5 // pred_check_branch
        %190 = sbr.rel (%p187) target = $region32
      $region31: #{tpu_custom_call.1} parent=5 // pred_region
        %s191 = ssub.s32 %s16, 1
        // Predicated region
        $region33: #{tpu_custom_call.1} parent=31 // pred_check
          %p192 = pneg %p37
        $region34: #{tpu_custom_call.1} parent=31 // pred_check_branch
          %194 = sbr.rel (%p192) target = $region36
        $region35: #{tpu_custom_call.1} parent=31 // pred_region
          %195 = dma.done [#allocation3], 128
        $region36: #{tpu_custom_call.1} parent=31 // pred_fallthru
          _
        %s196 = sand.u32 %s21, 1
        %s197 = scalar_lea.sflag [#allocation6], %s196
        %s198 = sand.u32 %s50, 1
        %s199 = smul.addr %s198, 4096
        %s200 = scalar_lea.vmem [#allocation5], %s199
        // Predicated region
        $region37: #{tpu_custom_call.1} parent=31 // pred_check
          %p201 = pneg %p63
        $region38: #{tpu_custom_call.1} parent=31 // pred_check_branch
          %203 = sbr.rel (%p201) target = $region40
        $region39: #{tpu_custom_call.1} parent=31 // pred_region
          %204 = dma.done %s197, 65536
        $region40: #{tpu_custom_call.1} parent=31 // pred_fallthru
          _
        %s205 = sand.u32 %s21, 1
        %s206 = scalar_lea.sflag [#allocation6], %s205
        %s207 = sand.u32 %s76, 1
        %s208 = smul.addr %s207, 16
        %s209 = scalar_lea.vmem [#allocation7], %s208
        // Predicated region
        $region41: #{tpu_custom_call.1} parent=31 // pred_check
          %p210 = pneg %p89
        $region42: #{tpu_custom_call.1} parent=31 // pred_check_branch
          %212 = sbr.rel (%p210) target = $region44
        $region43: #{tpu_custom_call.1} parent=31 // pred_region
          %213 = dma.done %s206, 256
        $region44: #{tpu_custom_call.1} parent=31 // pred_fallthru
          _
        %p214 = pneg %p37
        %p215 = pneg %p34
        %s216 = sand.u32 %s21, 1
        %s217 = scalar_lea.sflag [#allocation6], %s216
        %s218 = sand.u32 %s50, 1
        %s219 = smul.addr %s218, 4096
        %s220 = scalar_lea.vmem [#allocation5], %s219
        %p221 = pneg %p63
        %p222 = pneg %p60
        %s223 = sand.u32 %s21, 1
        %s224 = scalar_lea.sflag [#allocation6], %s223
        %s225 = sand.u32 %s76, 1
        %s226 = smul.addr %s225, 16
        %s227 = scalar_lea.vmem [#allocation7], %s226
        %p228 = pneg %p89
        %p229 = pneg %p86
        %p230 = pneg %p115
        %p231 = pneg %p112
        %s232 = sand.u32 %s102, 1
        %s233 = scalar_lea.sflag [#allocation4], %s232
        %s234 = sand.u32 %s102, 1
        %s235 = smul.addr %s234, 32
        %s236 = scalar_lea.vmem [#allocation8], %s235
        %s237 = smul.u32 16, %s21
        %s238 = smul.u32 16, %s21
        %v239 = vld [vmem:[#allocation2] sm:$0xff]
        %v241 = vcombine.high %v239, %v239
        %v243 = vunpack.c.l.s4 1983009808
        %v244 = vunpack.c.0.s8 %v243
        %v245 = vlaneseq
        %v246 = vshrl.u32 %v245, 7
        %v247 = vsub.s32 %v244, %v246
        %v248 = vrot.slane %v239, %v247
        %v250 = vunpack.c.l.s4 1983009808
        %v251 = vunpack.c.0.s8 %v250
        %v252 = vlaneseq
        %v253 = vshrl.u32 %v252, 7
        %v254 = vsub.s32 %v251, %v253
        %v255 = vrot.slane %v241, %v254
        %v256 = vcombine.high %v248, %v248
        %v257 = vcombine.high %v255, %v255
        %v262 = vpack.c.bf16 %v248, %v248
        %v263 = vpack.c.bf16 %v256, %v256
        %v264 = vpack.c.bf16 %v255, %v255
        %v265 = vpack.c.bf16 %v257, %v257
        %v266 = vld [vmem:[%s200] sm:$0xff]
        %v267 = vld [vmem:[%s200 + $0x8] sm:$0xff]
        %v268 = vld [vmem:[%s200 + $0x10] sm:$0xff]
        %v269 = vld [vmem:[%s200 + $0x18] sm:$0xff]
        %v270 = vld [vmem:[%s200 + $0x20] sm:$0xff]
        %v271 = vld [vmem:[%s200 + $0x28] sm:$0xff]
        %v272 = vld [vmem:[%s200 + $0x30] sm:$0xff]
        %v273 = vld [vmem:[%s200 + $0x38] sm:$0xff]
        %v274 = vld [vmem:[%s200 + $0x40] sm:$0xff]
        %v275 = vld [vmem:[%s200 + $0x48] sm:$0xff]
        %v276 = vld [vmem:[%s200 + $0x50] sm:$0xff]
        %v277 = vld [vmem:[%s200 + $0x58] sm:$0xff]
        %v278 = vld [vmem:[%s200 + $0x60] sm:$0xff]
        %v279 = vld [vmem:[%s200 + $0x68] sm:$0xff]
        %v280 = vld [vmem:[%s200 + $0x70] sm:$0xff]
        %v281 = vld [vmem:[%s200 + $0x78] sm:$0xff]
        %v282 = vld [vmem:[%s200 + $0x80] sm:$0xff]
        %v283 = vld [vmem:[%s200 + $0x88] sm:$0xff]
        %v284 = vld [vmem:[%s200 + $0x90] sm:$0xff]
        %v285 = vld [vmem:[%s200 + $0x98] sm:$0xff]
        %v286 = vld [vmem:[%s200 + $0xa0] sm:$0xff]
        %v287 = vld [vmem:[%s200 + $0xa8] sm:$0xff]
        %v288 = vld [vmem:[%s200 + $0xb0] sm:$0xff]
        %v289 = vld [vmem:[%s200 + $0xb8] sm:$0xff]
        %v290 = vld [vmem:[%s200 + $0xc0] sm:$0xff]
        %v291 = vld [vmem:[%s200 + $0xc8] sm:$0xff]
        %v292 = vld [vmem:[%s200 + $0xd0] sm:$0xff]
        %v293 = vld [vmem:[%s200 + $0xd8] sm:$0xff]
        %v294 = vld [vmem:[%s200 + $0xe0] sm:$0xff]
        %v295 = vld [vmem:[%s200 + $0xe8] sm:$0xff]
        %v296 = vld [vmem:[%s200 + $0xf0] sm:$0xff]
        %v297 = vld [vmem:[%s200 + $0xf8] sm:$0xff]
        %v298 = vld [vmem:[%s200 + $0x100] sm:$0xff]
        %v299 = vld [vmem:[%s200 + $0x108] sm:$0xff]
        %v300 = vld [vmem:[%s200 + $0x110] sm:$0xff]
        %v301 = vld [vmem:[%s200 + $0x118] sm:$0xff]
        %v302 = vld [vmem:[%s200 + $0x120] sm:$0xff]
        %v303 = vld [vmem:[%s200 + $0x128] sm:$0xff]
        %v304 = vld [vmem:[%s200 + $0x130] sm:$0xff]
        %v305 = vld [vmem:[%s200 + $0x138] sm:$0xff]
        %v306 = vld [vmem:[%s200 + $0x140] sm:$0xff]
        %v307 = vld [vmem:[%s200 + $0x148] sm:$0xff]
        %v308 = vld [vmem:[%s200 + $0x150] sm:$0xff]
        %v309 = vld [vmem:[%s200 + $0x158] sm:$0xff]
        %v310 = vld [vmem:[%s200 + $0x160] sm:$0xff]
        %v311 = vld [vmem:[%s200 + $0x168] sm:$0xff]
        %v312 = vld [vmem:[%s200 + $0x170] sm:$0xff]
        %v313 = vld [vmem:[%s200 + $0x178] sm:$0xff]
        %v314 = vld [vmem:[%s200 + $0x180] sm:$0xff]
        %v315 = vld [vmem:[%s200 + $0x188] sm:$0xff]
        %v316 = vld [vmem:[%s200 + $0x190] sm:$0xff]
        %v317 = vld [vmem:[%s200 + $0x198] sm:$0xff]
        %v318 = vld [vmem:[%s200 + $0x1a0] sm:$0xff]
        %v319 = vld [vmem:[%s200 + $0x1a8] sm:$0xff]
        %v320 = vld [vmem:[%s200 + $0x1b0] sm:$0xff]
        %v321 = vld [vmem:[%s200 + $0x1b8] sm:$0xff]
        %v322 = vld [vmem:[%s200 + $0x1c0] sm:$0xff]
        %v323 = vld [vmem:[%s200 + $0x1c8] sm:$0xff]
        %v324 = vld [vmem:[%s200 + $0x1d0] sm:$0xff]
        %v325 = vld [vmem:[%s200 + $0x1d8] sm:$0xff]
        %v326 = vld [vmem:[%s200 + $0x1e0] sm:$0xff]
        %v327 = vld [vmem:[%s200 + $0x1e8] sm:$0xff]
        %v328 = vld [vmem:[%s200 + $0x1f0] sm:$0xff]
        %v329 = vld [vmem:[%s200 + $0x1f8] sm:$0xff]
        %v330 = vld [vmem:[%s200 + $0x200] sm:$0xff]
        %v331 = vld [vmem:[%s200 + $0x208] sm:$0xff]
        %v332 = vld [vmem:[%s200 + $0x210] sm:$0xff]
        %v333 = vld [vmem:[%s200 + $0x218] sm:$0xff]
        %v334 = vld [vmem:[%s200 + $0x220] sm:$0xff]
        %v335 = vld [vmem:[%s200 + $0x228] sm:$0xff]
        %v336 = vld [vmem:[%s200 + $0x230] sm:$0xff]
        %v337 = vld [vmem:[%s200 + $0x238] sm:$0xff]
        %v338 = vld [vmem:[%s200 + $0x240] sm:$0xff]
        %v339 = vld [vmem:[%s200 + $0x248] sm:$0xff]
        %v340 = vld [vmem:[%s200 + $0x250] sm:$0xff]
        %v341 = vld [vmem:[%s200 + $0x258] sm:$0xff]
        %v342 = vld [vmem:[%s200 + $0x260] sm:$0xff]
        %v343 = vld [vmem:[%s200 + $0x268] sm:$0xff]
        %v344 = vld [vmem:[%s200 + $0x270] sm:$0xff]
        %v345 = vld [vmem:[%s200 + $0x278] sm:$0xff]
        %v346 = vld [vmem:[%s200 + $0x280] sm:$0xff]
        %v347 = vld [vmem:[%s200 + $0x288] sm:$0xff]
        %v348 = vld [vmem:[%s200 + $0x290] sm:$0xff]
        %v349 = vld [vmem:[%s200 + $0x298] sm:$0xff]
        %v350 = vld [vmem:[%s200 + $0x2a0] sm:$0xff]
        %v351 = vld [vmem:[%s200 + $0x2a8] sm:$0xff]
        %v352 = vld [vmem:[%s200 + $0x2b0] sm:$0xff]
        %v353 = vld [vmem:[%s200 + $0x2b8] sm:$0xff]
        %v354 = vld [vmem:[%s200 + $0x2c0] sm:$0xff]
        %v355 = vld [vmem:[%s200 + $0x2c8] sm:$0xff]
        %v356 = vld [vmem:[%s200 + $0x2d0] sm:$0xff]
        %v357 = vld [vmem:[%s200 + $0x2d8] sm:$0xff]
        %v358 = vld [vmem:[%s200 + $0x2e0] sm:$0xff]
        %v359 = vld [vmem:[%s200 + $0x2e8] sm:$0xff]
        %v360 = vld [vmem:[%s200 + $0x2f0] sm:$0xff]
        %v361 = vld [vmem:[%s200 + $0x2f8] sm:$0xff]
        %v362 = vld [vmem:[%s200 + $0x300] sm:$0xff]
        %v363 = vld [vmem:[%s200 + $0x308] sm:$0xff]
        %v364 = vld [vmem:[%s200 + $0x310] sm:$0xff]
        %v365 = vld [vmem:[%s200 + $0x318] sm:$0xff]
        %v366 = vld [vmem:[%s200 + $0x320] sm:$0xff]
        %v367 = vld [vmem:[%s200 + $0x328] sm:$0xff]
        %v368 = vld [vmem:[%s200 + $0x330] sm:$0xff]
        %v369 = vld [vmem:[%s200 + $0x338] sm:$0xff]
        %v370 = vld [vmem:[%s200 + $0x340] sm:$0xff]
        %v371 = vld [vmem:[%s200 + $0x348] sm:$0xff]
        %v372 = vld [vmem:[%s200 + $0x350] sm:$0xff]
        %v373 = vld [vmem:[%s200 + $0x358] sm:$0xff]
        %v374 = vld [vmem:[%s200 + $0x360] sm:$0xff]
        %v375 = vld [vmem:[%s200 + $0x368] sm:$0xff]
        %v376 = vld [vmem:[%s200 + $0x370] sm:$0xff]
        %v377 = vld [vmem:[%s200 + $0x378] sm:$0xff]
        %v378 = vld [vmem:[%s200 + $0x380] sm:$0xff]
        %v379 = vld [vmem:[%s200 + $0x388] sm:$0xff]
        %v380 = vld [vmem:[%s200 + $0x390] sm:$0xff]
        %v381 = vld [vmem:[%s200 + $0x398] sm:$0xff]
        %v382 = vld [vmem:[%s200 + $0x3a0] sm:$0xff]
        %v383 = vld [vmem:[%s200 + $0x3a8] sm:$0xff]
        %v384 = vld [vmem:[%s200 + $0x3b0] sm:$0xff]
        %v385 = vld [vmem:[%s200 + $0x3b8] sm:$0xff]
        %v386 = vld [vmem:[%s200 + $0x3c0] sm:$0xff]
        %v387 = vld [vmem:[%s200 + $0x3c8] sm:$0xff]
        %v388 = vld [vmem:[%s200 + $0x3d0] sm:$0xff]
        %v389 = vld [vmem:[%s200 + $0x3d8] sm:$0xff]
        %v390 = vld [vmem:[%s200 + $0x3e0] sm:$0xff]
        %v391 = vld [vmem:[%s200 + $0x3e8] sm:$0xff]
        %v392 = vld [vmem:[%s200 + $0x3f0] sm:$0xff]
        %v393 = vld [vmem:[%s200 + $0x3f8] sm:$0xff]
        %v394 = vld [vmem:[%s200 + $0x400] sm:$0xff]
        %v395 = vld [vmem:[%s200 + $0x408] sm:$0xff]
        %v396 = vld [vmem:[%s200 + $0x410] sm:$0xff]
        %v397 = vld [vmem:[%s200 + $0x418] sm:$0xff]
        %v398 = vld [vmem:[%s200 + $0x420] sm:$0xff]
        %v399 = vld [vmem:[%s200 + $0x428] sm:$0xff]
        %v400 = vld [vmem:[%s200 + $0x430] sm:$0xff]
        %v401 = vld [vmem:[%s200 + $0x438] sm:$0xff]
        %v402 = vld [vmem:[%s200 + $0x440] sm:$0xff]
        %v403 = vld [vmem:[%s200 + $0x448] sm:$0xff]
        %v404 = vld [vmem:[%s200 + $0x450] sm:$0xff]
        %v405 = vld [vmem:[%s200 + $0x458] sm:$0xff]
        %v406 = vld [vmem:[%s200 + $0x460] sm:$0xff]
        %v407 = vld [vmem:[%s200 + $0x468] sm:$0xff]
        %v408 = vld [vmem:[%s200 + $0x470] sm:$0xff]
        %v409 = vld [vmem:[%s200 + $0x478] sm:$0xff]
        %v410 = vld [vmem:[%s200 + $0x480] sm:$0xff]
        %v411 = vld [vmem:[%s200 + $0x488] sm:$0xff]
        %v412 = vld [vmem:[%s200 + $0x490] sm:$0xff]
        %v413 = vld [vmem:[%s200 + $0x498] sm:$0xff]
        %v414 = vld [vmem:[%s200 + $0x4a0] sm:$0xff]
        %v415 = vld [vmem:[%s200 + $0x4a8] sm:$0xff]
        %v416 = vld [vmem:[%s200 + $0x4b0] sm:$0xff]
        %v417 = vld [vmem:[%s200 + $0x4b8] sm:$0xff]
        %v418 = vld [vmem:[%s200 + $0x4c0] sm:$0xff]
        %v419 = vld [vmem:[%s200 + $0x4c8] sm:$0xff]
        %v420 = vld [vmem:[%s200 + $0x4d0] sm:$0xff]
        %v421 = vld [vmem:[%s200 + $0x4d8] sm:$0xff]
        %v422 = vld [vmem:[%s200 + $0x4e0] sm:$0xff]
        %v423 = vld [vmem:[%s200 + $0x4e8] sm:$0xff]
        %v424 = vld [vmem:[%s200 + $0x4f0] sm:$0xff]
        %v425 = vld [vmem:[%s200 + $0x4f8] sm:$0xff]
        %v426 = vld [vmem:[%s200 + $0x500] sm:$0xff]
        %v427 = vld [vmem:[%s200 + $0x508] sm:$0xff]
        %v428 = vld [vmem:[%s200 + $0x510] sm:$0xff]
        %v429 = vld [vmem:[%s200 + $0x518] sm:$0xff]
        %v430 = vld [vmem:[%s200 + $0x520] sm:$0xff]
        %v431 = vld [vmem:[%s200 + $0x528] sm:$0xff]
        %v432 = vld [vmem:[%s200 + $0x530] sm:$0xff]
        %v433 = vld [vmem:[%s200 + $0x538] sm:$0xff]
        %v434 = vld [vmem:[%s200 + $0x540] sm:$0xff]
        %v435 = vld [vmem:[%s200 + $0x548] sm:$0xff]
        %v436 = vld [vmem:[%s200 + $0x550] sm:$0xff]
        %v437 = vld [vmem:[%s200 + $0x558] sm:$0xff]
        %v438 = vld [vmem:[%s200 + $0x560] sm:$0xff]
        %v439 = vld [vmem:[%s200 + $0x568] sm:$0xff]
        %v440 = vld [vmem:[%s200 + $0x570] sm:$0xff]
        %v441 = vld [vmem:[%s200 + $0x578] sm:$0xff]
        %v442 = vld [vmem:[%s200 + $0x580] sm:$0xff]
        %v443 = vld [vmem:[%s200 + $0x588] sm:$0xff]
        %v444 = vld [vmem:[%s200 + $0x590] sm:$0xff]
        %v445 = vld [vmem:[%s200 + $0x598] sm:$0xff]
        %v446 = vld [vmem:[%s200 + $0x5a0] sm:$0xff]
        %v447 = vld [vmem:[%s200 + $0x5a8] sm:$0xff]
        %v448 = vld [vmem:[%s200 + $0x5b0] sm:$0xff]
        %v449 = vld [vmem:[%s200 + $0x5b8] sm:$0xff]
        %v450 = vld [vmem:[%s200 + $0x5c0] sm:$0xff]
        %v451 = vld [vmem:[%s200 + $0x5c8] sm:$0xff]
        %v452 = vld [vmem:[%s200 + $0x5d0] sm:$0xff]
        %v453 = vld [vmem:[%s200 + $0x5d8] sm:$0xff]
        %v454 = vld [vmem:[%s200 + $0x5e0] sm:$0xff]
        %v455 = vld [vmem:[%s200 + $0x5e8] sm:$0xff]
        %v456 = vld [vmem:[%s200 + $0x5f0] sm:$0xff]
        %v457 = vld [vmem:[%s200 + $0x5f8] sm:$0xff]
        %v458 = vld [vmem:[%s200 + $0x600] sm:$0xff]
        %v459 = vld [vmem:[%s200 + $0x608] sm:$0xff]
        %v460 = vld [vmem:[%s200 + $0x610] sm:$0xff]
        %v461 = vld [vmem:[%s200 + $0x618] sm:$0xff]
        %v462 = vld [vmem:[%s200 + $0x620] sm:$0xff]
        %v463 = vld [vmem:[%s200 + $0x628] sm:$0xff]
        %v464 = vld [vmem:[%s200 + $0x630] sm:$0xff]
        %v465 = vld [vmem:[%s200 + $0x638] sm:$0xff]
        %v466 = vld [vmem:[%s200 + $0x640] sm:$0xff]
        %v467 = vld [vmem:[%s200 + $0x648] sm:$0xff]
        %v468 = vld [vmem:[%s200 + $0x650] sm:$0xff]
        %v469 = vld [vmem:[%s200 + $0x658] sm:$0xff]
        %v470 = vld [vmem:[%s200 + $0x660] sm:$0xff]
        %v471 = vld [vmem:[%s200 + $0x668] sm:$0xff]
        %v472 = vld [vmem:[%s200 + $0x670] sm:$0xff]
        %v473 = vld [vmem:[%s200 + $0x678] sm:$0xff]
        %v474 = vld [vmem:[%s200 + $0x680] sm:$0xff]
        %v475 = vld [vmem:[%s200 + $0x688] sm:$0xff]
        %v476 = vld [vmem:[%s200 + $0x690] sm:$0xff]
        %v477 = vld [vmem:[%s200 + $0x698] sm:$0xff]
        %v478 = vld [vmem:[%s200 + $0x6a0] sm:$0xff]
        %v479 = vld [vmem:[%s200 + $0x6a8] sm:$0xff]
        %v480 = vld [vmem:[%s200 + $0x6b0] sm:$0xff]
        %v481 = vld [vmem:[%s200 + $0x6b8] sm:$0xff]
        %v482 = vld [vmem:[%s200 + $0x6c0] sm:$0xff]
        %v483 = vld [vmem:[%s200 + $0x6c8] sm:$0xff]
        %v484 = vld [vmem:[%s200 + $0x6d0] sm:$0xff]
        %v485 = vld [vmem:[%s200 + $0x6d8] sm:$0xff]
        %v486 = vld [vmem:[%s200 + $0x6e0] sm:$0xff]
        %v487 = vld [vmem:[%s200 + $0x6e8] sm:$0xff]
        %v488 = vld [vmem:[%s200 + $0x6f0] sm:$0xff]
        %v489 = vld [vmem:[%s200 + $0x6f8] sm:$0xff]
        %v490 = vld [vmem:[%s200 + $0x700] sm:$0xff]
        %v491 = vld [vmem:[%s200 + $0x708] sm:$0xff]
        %v492 = vld [vmem:[%s200 + $0x710] sm:$0xff]
        %v493 = vld [vmem:[%s200 + $0x718] sm:$0xff]
        %v494 = vld [vmem:[%s200 + $0x720] sm:$0xff]
        %v495 = vld [vmem:[%s200 + $0x728] sm:$0xff]
        %v496 = vld [vmem:[%s200 + $0x730] sm:$0xff]
        %v497 = vld [vmem:[%s200 + $0x738] sm:$0xff]
        %v498 = vld [vmem:[%s200 + $0x740] sm:$0xff]
        %v499 = vld [vmem:[%s200 + $0x748] sm:$0xff]
        %v500 = vld [vmem:[%s200 + $0x750] sm:$0xff]
        %v501 = vld [vmem:[%s200 + $0x758] sm:$0xff]
        %v502 = vld [vmem:[%s200 + $0x760] sm:$0xff]
        %v503 = vld [vmem:[%s200 + $0x768] sm:$0xff]
        %v504 = vld [vmem:[%s200 + $0x770] sm:$0xff]
        %v505 = vld [vmem:[%s200 + $0x778] sm:$0xff]
        %v506 = vld [vmem:[%s200 + $0x780] sm:$0xff]
        %v507 = vld [vmem:[%s200 + $0x788] sm:$0xff]
        %v508 = vld [vmem:[%s200 + $0x790] sm:$0xff]
        %v509 = vld [vmem:[%s200 + $0x798] sm:$0xff]
        %v510 = vld [vmem:[%s200 + $0x7a0] sm:$0xff]
        %v511 = vld [vmem:[%s200 + $0x7a8] sm:$0xff]
        %v512 = vld [vmem:[%s200 + $0x7b0] sm:$0xff]
        %v513 = vld [vmem:[%s200 + $0x7b8] sm:$0xff]
        %v514 = vld [vmem:[%s200 + $0x7c0] sm:$0xff]
        %v515 = vld [vmem:[%s200 + $0x7c8] sm:$0xff]
        %v516 = vld [vmem:[%s200 + $0x7d0] sm:$0xff]
        %v517 = vld [vmem:[%s200 + $0x7d8] sm:$0xff]
        %v518 = vld [vmem:[%s200 + $0x7e0] sm:$0xff]
        %v519 = vld [vmem:[%s200 + $0x7e8] sm:$0xff]
        %v520 = vld [vmem:[%s200 + $0x7f0] sm:$0xff]
        %v521 = vld [vmem:[%s200 + $0x7f8] sm:$0xff]
        %v522 = vld [vmem:[%s200 + $0x800] sm:$0xff]
        %v523 = vld [vmem:[%s200 + $0x808] sm:$0xff]
        %v524 = vld [vmem:[%s200 + $0x810] sm:$0xff]
        %v525 = vld [vmem:[%s200 + $0x818] sm:$0xff]
        %v526 = vld [vmem:[%s200 + $0x820] sm:$0xff]
        %v527 = vld [vmem:[%s200 + $0x828] sm:$0xff]
        %v528 = vld [vmem:[%s200 + $0x830] sm:$0xff]
        %v529 = vld [vmem:[%s200 + $0x838] sm:$0xff]
        %v530 = vld [vmem:[%s200 + $0x840] sm:$0xff]
        %v531 = vld [vmem:[%s200 + $0x848] sm:$0xff]
        %v532 = vld [vmem:[%s200 + $0x850] sm:$0xff]
        %v533 = vld [vmem:[%s200 + $0x858] sm:$0xff]
        %v534 = vld [vmem:[%s200 + $0x860] sm:$0xff]
        %v535 = vld [vmem:[%s200 + $0x868] sm:$0xff]
        %v536 = vld [vmem:[%s200 + $0x870] sm:$0xff]
        %v537 = vld [vmem:[%s200 + $0x878] sm:$0xff]
        %v538 = vld [vmem:[%s200 + $0x880] sm:$0xff]
        %v539 = vld [vmem:[%s200 + $0x888] sm:$0xff]
        %v540 = vld [vmem:[%s200 + $0x890] sm:$0xff]
        %v541 = vld [vmem:[%s200 + $0x898] sm:$0xff]
        %v542 = vld [vmem:[%s200 + $0x8a0] sm:$0xff]
        %v543 = vld [vmem:[%s200 + $0x8a8] sm:$0xff]
        %v544 = vld [vmem:[%s200 + $0x8b0] sm:$0xff]
        %v545 = vld [vmem:[%s200 + $0x8b8] sm:$0xff]
        %v546 = vld [vmem:[%s200 + $0x8c0] sm:$0xff]
        %v547 = vld [vmem:[%s200 + $0x8c8] sm:$0xff]
        %v548 = vld [vmem:[%s200 + $0x8d0] sm:$0xff]
        %v549 = vld [vmem:[%s200 + $0x8d8] sm:$0xff]
        %v550 = vld [vmem:[%s200 + $0x8e0] sm:$0xff]
        %v551 = vld [vmem:[%s200 + $0x8e8] sm:$0xff]
        %v552 = vld [vmem:[%s200 + $0x8f0] sm:$0xff]
        %v553 = vld [vmem:[%s200 + $0x8f8] sm:$0xff]
        %v554 = vld [vmem:[%s200 + $0x900] sm:$0xff]
        %v555 = vld [vmem:[%s200 + $0x908] sm:$0xff]
        %v556 = vld [vmem:[%s200 + $0x910] sm:$0xff]
        %v557 = vld [vmem:[%s200 + $0x918] sm:$0xff]
        %v558 = vld [vmem:[%s200 + $0x920] sm:$0xff]
        %v559 = vld [vmem:[%s200 + $0x928] sm:$0xff]
        %v560 = vld [vmem:[%s200 + $0x930] sm:$0xff]
        %v561 = vld [vmem:[%s200 + $0x938] sm:$0xff]
        %v562 = vld [vmem:[%s200 + $0x940] sm:$0xff]
        %v563 = vld [vmem:[%s200 + $0x948] sm:$0xff]
        %v564 = vld [vmem:[%s200 + $0x950] sm:$0xff]
        %v565 = vld [vmem:[%s200 + $0x958] sm:$0xff]
        %v566 = vld [vmem:[%s200 + $0x960] sm:$0xff]
        %v567 = vld [vmem:[%s200 + $0x968] sm:$0xff]
        %v568 = vld [vmem:[%s200 + $0x970] sm:$0xff]
        %v569 = vld [vmem:[%s200 + $0x978] sm:$0xff]
        %v570 = vld [vmem:[%s200 + $0x980] sm:$0xff]
        %v571 = vld [vmem:[%s200 + $0x988] sm:$0xff]
        %v572 = vld [vmem:[%s200 + $0x990] sm:$0xff]
        %v573 = vld [vmem:[%s200 + $0x998] sm:$0xff]
        %v574 = vld [vmem:[%s200 + $0x9a0] sm:$0xff]
        %v575 = vld [vmem:[%s200 + $0x9a8] sm:$0xff]
        %v576 = vld [vmem:[%s200 + $0x9b0] sm:$0xff]
        %v577 = vld [vmem:[%s200 + $0x9b8] sm:$0xff]
        %v578 = vld [vmem:[%s200 + $0x9c0] sm:$0xff]
        %v579 = vld [vmem:[%s200 + $0x9c8] sm:$0xff]
        %v580 = vld [vmem:[%s200 + $0x9d0] sm:$0xff]
        %v581 = vld [vmem:[%s200 + $0x9d8] sm:$0xff]
        %v582 = vld [vmem:[%s200 + $0x9e0] sm:$0xff]
        %v583 = vld [vmem:[%s200 + $0x9e8] sm:$0xff]
        %v584 = vld [vmem:[%s200 + $0x9f0] sm:$0xff]
        %v585 = vld [vmem:[%s200 + $0x9f8] sm:$0xff]
        %v586 = vld [vmem:[%s200 + $0xa00] sm:$0xff]
        %v587 = vld [vmem:[%s200 + $0xa08] sm:$0xff]
        %v588 = vld [vmem:[%s200 + $0xa10] sm:$0xff]
        %v589 = vld [vmem:[%s200 + $0xa18] sm:$0xff]
        %v590 = vld [vmem:[%s200 + $0xa20] sm:$0xff]
        %v591 = vld [vmem:[%s200 + $0xa28] sm:$0xff]
        %v592 = vld [vmem:[%s200 + $0xa30] sm:$0xff]
        %v593 = vld [vmem:[%s200 + $0xa38] sm:$0xff]
        %v594 = vld [vmem:[%s200 + $0xa40] sm:$0xff]
        %v595 = vld [vmem:[%s200 + $0xa48] sm:$0xff]
        %v596 = vld [vmem:[%s200 + $0xa50] sm:$0xff]
        %v597 = vld [vmem:[%s200 + $0xa58] sm:$0xff]
        %v598 = vld [vmem:[%s200 + $0xa60] sm:$0xff]
        %v599 = vld [vmem:[%s200 + $0xa68] sm:$0xff]
        %v600 = vld [vmem:[%s200 + $0xa70] sm:$0xff]
        %v601 = vld [vmem:[%s200 + $0xa78] sm:$0xff]
        %v602 = vld [vmem:[%s200 + $0xa80] sm:$0xff]
        %v603 = vld [vmem:[%s200 + $0xa88] sm:$0xff]
        %v604 = vld [vmem:[%s200 + $0xa90] sm:$0xff]
        %v605 = vld [vmem:[%s200 + $0xa98] sm:$0xff]
        %v606 = vld [vmem:[%s200 + $0xaa0] sm:$0xff]
        %v607 = vld [vmem:[%s200 + $0xaa8] sm:$0xff]
        %v608 = vld [vmem:[%s200 + $0xab0] sm:$0xff]
        %v609 = vld [vmem:[%s200 + $0xab8] sm:$0xff]
        %v610 = vld [vmem:[%s200 + $0xac0] sm:$0xff]
        %v611 = vld [vmem:[%s200 + $0xac8] sm:$0xff]
        %v612 = vld [vmem:[%s200 + $0xad0] sm:$0xff]
        %v613 = vld [vmem:[%s200 + $0xad8] sm:$0xff]
        %v614 = vld [vmem:[%s200 + $0xae0] sm:$0xff]
        %v615 = vld [vmem:[%s200 + $0xae8] sm:$0xff]
        %v616 = vld [vmem:[%s200 + $0xaf0] sm:$0xff]
        %v617 = vld [vmem:[%s200 + $0xaf8] sm:$0xff]
        %v618 = vld [vmem:[%s200 + $0xb00] sm:$0xff]
        %v619 = vld [vmem:[%s200 + $0xb08] sm:$0xff]
        %v620 = vld [vmem:[%s200 + $0xb10] sm:$0xff]
        %v621 = vld [vmem:[%s200 + $0xb18] sm:$0xff]
        %v622 = vld [vmem:[%s200 + $0xb20] sm:$0xff]
        %v623 = vld [vmem:[%s200 + $0xb28] sm:$0xff]
        %v624 = vld [vmem:[%s200 + $0xb30] sm:$0xff]
        %v625 = vld [vmem:[%s200 + $0xb38] sm:$0xff]
        %v626 = vld [vmem:[%s200 + $0xb40] sm:$0xff]
        %v627 = vld [vmem:[%s200 + $0xb48] sm:$0xff]
        %v628 = vld [vmem:[%s200 + $0xb50] sm:$0xff]
        %v629 = vld [vmem:[%s200 + $0xb58] sm:$0xff]
        %v630 = vld [vmem:[%s200 + $0xb60] sm:$0xff]
        %v631 = vld [vmem:[%s200 + $0xb68] sm:$0xff]
        %v632 = vld [vmem:[%s200 + $0xb70] sm:$0xff]
        %v633 = vld [vmem:[%s200 + $0xb78] sm:$0xff]
        %v634 = vld [vmem:[%s200 + $0xb80] sm:$0xff]
        %v635 = vld [vmem:[%s200 + $0xb88] sm:$0xff]
        %v636 = vld [vmem:[%s200 + $0xb90] sm:$0xff]
        %v637 = vld [vmem:[%s200 + $0xb98] sm:$0xff]
        %v638 = vld [vmem:[%s200 + $0xba0] sm:$0xff]
        %v639 = vld [vmem:[%s200 + $0xba8] sm:$0xff]
        %v640 = vld [vmem:[%s200 + $0xbb0] sm:$0xff]
        %v641 = vld [vmem:[%s200 + $0xbb8] sm:$0xff]
        %v642 = vld [vmem:[%s200 + $0xbc0] sm:$0xff]
        %v643 = vld [vmem:[%s200 + $0xbc8] sm:$0xff]
        %v644 = vld [vmem:[%s200 + $0xbd0] sm:$0xff]
        %v645 = vld [vmem:[%s200 + $0xbd8] sm:$0xff]
        %v646 = vld [vmem:[%s200 + $0xbe0] sm:$0xff]
        %v647 = vld [vmem:[%s200 + $0xbe8] sm:$0xff]
        %v648 = vld [vmem:[%s200 + $0xbf0] sm:$0xff]
        %v649 = vld [vmem:[%s200 + $0xbf8] sm:$0xff]
        %v650 = vld [vmem:[%s200 + $0xc00] sm:$0xff]
        %v651 = vld [vmem:[%s200 + $0xc08] sm:$0xff]
        %v652 = vld [vmem:[%s200 + $0xc10] sm:$0xff]
        %v653 = vld [vmem:[%s200 + $0xc18] sm:$0xff]
        %v654 = vld [vmem:[%s200 + $0xc20] sm:$0xff]
        %v655 = vld [vmem:[%s200 + $0xc28] sm:$0xff]
        %v656 = vld [vmem:[%s200 + $0xc30] sm:$0xff]
        %v657 = vld [vmem:[%s200 + $0xc38] sm:$0xff]
        %v658 = vld [vmem:[%s200 + $0xc40] sm:$0xff]
        %v659 = vld [vmem:[%s200 + $0xc48] sm:$0xff]
        %v660 = vld [vmem:[%s200 + $0xc50] sm:$0xff]
        %v661 = vld [vmem:[%s200 + $0xc58] sm:$0xff]
        %v662 = vld [vmem:[%s200 + $0xc60] sm:$0xff]
        %v663 = vld [vmem:[%s200 + $0xc68] sm:$0xff]
        %v664 = vld [vmem:[%s200 + $0xc70] sm:$0xff]
        %v665 = vld [vmem:[%s200 + $0xc78] sm:$0xff]
        %v666 = vld [vmem:[%s200 + $0xc80] sm:$0xff]
        %v667 = vld [vmem:[%s200 + $0xc88] sm:$0xff]
        %v668 = vld [vmem:[%s200 + $0xc90] sm:$0xff]
        %v669 = vld [vmem:[%s200 + $0xc98] sm:$0xff]
        %v670 = vld [vmem:[%s200 + $0xca0] sm:$0xff]
        %v671 = vld [vmem:[%s200 + $0xca8] sm:$0xff]
        %v672 = vld [vmem:[%s200 + $0xcb0] sm:$0xff]
        %v673 = vld [vmem:[%s200 + $0xcb8] sm:$0xff]
        %v674 = vld [vmem:[%s200 + $0xcc0] sm:$0xff]
        %v675 = vld [vmem:[%s200 + $0xcc8] sm:$0xff]
        %v676 = vld [vmem:[%s200 + $0xcd0] sm:$0xff]
        %v677 = vld [vmem:[%s200 + $0xcd8] sm:$0xff]
        %v678 = vld [vmem:[%s200 + $0xce0] sm:$0xff]
        %v679 = vld [vmem:[%s200 + $0xce8] sm:$0xff]
        %v680 = vld [vmem:[%s200 + $0xcf0] sm:$0xff]
        %v681 = vld [vmem:[%s200 + $0xcf8] sm:$0xff]
        %v682 = vld [vmem:[%s200 + $0xd00] sm:$0xff]
        %v683 = vld [vmem:[%s200 + $0xd08] sm:$0xff]
        %v684 = vld [vmem:[%s200 + $0xd10] sm:$0xff]
        %v685 = vld [vmem:[%s200 + $0xd18] sm:$0xff]
        %v686 = vld [vmem:[%s200 + $0xd20] sm:$0xff]
        %v687 = vld [vmem:[%s200 + $0xd28] sm:$0xff]
        %v688 = vld [vmem:[%s200 + $0xd30] sm:$0xff]
        %v689 = vld [vmem:[%s200 + $0xd38] sm:$0xff]
        %v690 = vld [vmem:[%s200 + $0xd40] sm:$0xff]
        %v691 = vld [vmem:[%s200 + $0xd48] sm:$0xff]
        %v692 = vld [vmem:[%s200 + $0xd50] sm:$0xff]
        %v693 = vld [vmem:[%s200 + $0xd58] sm:$0xff]
        %v694 = vld [vmem:[%s200 + $0xd60] sm:$0xff]
        %v695 = vld [vmem:[%s200 + $0xd68] sm:$0xff]
        %v696 = vld [vmem:[%s200 + $0xd70] sm:$0xff]
        %v697 = vld [vmem:[%s200 + $0xd78] sm:$0xff]
        %v698 = vld [vmem:[%s200 + $0xd80] sm:$0xff]
        %v699 = vld [vmem:[%s200 + $0xd88] sm:$0xff]
        %v700 = vld [vmem:[%s200 + $0xd90] sm:$0xff]
        %v701 = vld [vmem:[%s200 + $0xd98] sm:$0xff]
        %v702 = vld [vmem:[%s200 + $0xda0] sm:$0xff]
        %v703 = vld [vmem:[%s200 + $0xda8] sm:$0xff]
        %v704 = vld [vmem:[%s200 + $0xdb0] sm:$0xff]
        %v705 = vld [vmem:[%s200 + $0xdb8] sm:$0xff]
        %v706 = vld [vmem:[%s200 + $0xdc0] sm:$0xff]
        %v707 = vld [vmem:[%s200 + $0xdc8] sm:$0xff]
        %v708 = vld [vmem:[%s200 + $0xdd0] sm:$0xff]
        %v709 = vld [vmem:[%s200 + $0xdd8] sm:$0xff]
        %v710 = vld [vmem:[%s200 + $0xde0] sm:$0xff]
        %v711 = vld [vmem:[%s200 + $0xde8] sm:$0xff]
        %v712 = vld [vmem:[%s200 + $0xdf0] sm:$0xff]
        %v713 = vld [vmem:[%s200 + $0xdf8] sm:$0xff]
        %v714 = vld [vmem:[%s200 + $0xe00] sm:$0xff]
        %v715 = vld [vmem:[%s200 + $0xe08] sm:$0xff]
        %v716 = vld [vmem:[%s200 + $0xe10] sm:$0xff]
        %v717 = vld [vmem:[%s200 + $0xe18] sm:$0xff]
        %v718 = vld [vmem:[%s200 + $0xe20] sm:$0xff]
        %v719 = vld [vmem:[%s200 + $0xe28] sm:$0xff]
        %v720 = vld [vmem:[%s200 + $0xe30] sm:$0xff]
        %v721 = vld [vmem:[%s200 + $0xe38] sm:$0xff]
        %v722 = vld [vmem:[%s200 + $0xe40] sm:$0xff]
        %v723 = vld [vmem:[%s200 + $0xe48] sm:$0xff]
        %v724 = vld [vmem:[%s200 + $0xe50] sm:$0xff]
        %v725 = vld [vmem:[%s200 + $0xe58] sm:$0xff]
        %v726 = vld [vmem:[%s200 + $0xe60] sm:$0xff]
        %v727 = vld [vmem:[%s200 + $0xe68] sm:$0xff]
        %v728 = vld [vmem:[%s200 + $0xe70] sm:$0xff]
        %v729 = vld [vmem:[%s200 + $0xe78] sm:$0xff]
        %v730 = vld [vmem:[%s200 + $0xe80] sm:$0xff]
        %v731 = vld [vmem:[%s200 + $0xe88] sm:$0xff]
        %v732 = vld [vmem:[%s200 + $0xe90] sm:$0xff]
        %v733 = vld [vmem:[%s200 + $0xe98] sm:$0xff]
        %v734 = vld [vmem:[%s200 + $0xea0] sm:$0xff]
        %v735 = vld [vmem:[%s200 + $0xea8] sm:$0xff]
        %v736 = vld [vmem:[%s200 + $0xeb0] sm:$0xff]
        %v737 = vld [vmem:[%s200 + $0xeb8] sm:$0xff]
        %v738 = vld [vmem:[%s200 + $0xec0] sm:$0xff]
        %v739 = vld [vmem:[%s200 + $0xec8] sm:$0xff]
        %v740 = vld [vmem:[%s200 + $0xed0] sm:$0xff]
        %v741 = vld [vmem:[%s200 + $0xed8] sm:$0xff]
        %v742 = vld [vmem:[%s200 + $0xee0] sm:$0xff]
        %v743 = vld [vmem:[%s200 + $0xee8] sm:$0xff]
        %v744 = vld [vmem:[%s200 + $0xef0] sm:$0xff]
        %v745 = vld [vmem:[%s200 + $0xef8] sm:$0xff]
        %v746 = vld [vmem:[%s200 + $0xf00] sm:$0xff]
        %v747 = vld [vmem:[%s200 + $0xf08] sm:$0xff]
        %v748 = vld [vmem:[%s200 + $0xf10] sm:$0xff]
        %v749 = vld [vmem:[%s200 + $0xf18] sm:$0xff]
        %v750 = vld [vmem:[%s200 + $0xf20] sm:$0xff]
        %v751 = vld [vmem:[%s200 + $0xf28] sm:$0xff]
        %v752 = vld [vmem:[%s200 + $0xf30] sm:$0xff]
        %v753 = vld [vmem:[%s200 + $0xf38] sm:$0xff]
        %v754 = vld [vmem:[%s200 + $0xf40] sm:$0xff]
        %v755 = vld [vmem:[%s200 + $0xf48] sm:$0xff]
        %v756 = vld [vmem:[%s200 + $0xf50] sm:$0xff]
        %v757 = vld [vmem:[%s200 + $0xf58] sm:$0xff]
        %v758 = vld [vmem:[%s200 + $0xf60] sm:$0xff]
        %v759 = vld [vmem:[%s200 + $0xf68] sm:$0xff]
        %v760 = vld [vmem:[%s200 + $0xf70] sm:$0xff]
        %v761 = vld [vmem:[%s200 + $0xf78] sm:$0xff]
        %v762 = vld [vmem:[%s200 + $0xf80] sm:$0xff]
        %v763 = vld [vmem:[%s200 + $0xf88] sm:$0xff]
        %v764 = vld [vmem:[%s200 + $0xf90] sm:$0xff]
        %v765 = vld [vmem:[%s200 + $0xf98] sm:$0xff]
        %v766 = vld [vmem:[%s200 + $0xfa0] sm:$0xff]
        %v767 = vld [vmem:[%s200 + $0xfa8] sm:$0xff]
        %v768 = vld [vmem:[%s200 + $0xfb0] sm:$0xff]
        %v769 = vld [vmem:[%s200 + $0xfb8] sm:$0xff]
        %v770 = vld [vmem:[%s200 + $0xfc0] sm:$0xff]
        %v771 = vld [vmem:[%s200 + $0xfc8] sm:$0xff]
        %v772 = vld [vmem:[%s200 + $0xfd0] sm:$0xff]
        %v773 = vld [vmem:[%s200 + $0xfd8] sm:$0xff]
        %v774 = vld [vmem:[%s200 + $0xfe0] sm:$0xff]
        %v775 = vld [vmem:[%s200 + $0xfe8] sm:$0xff]
        %v776 = vld [vmem:[%s200 + $0xff0] sm:$0xff]
        %v777 = vld [vmem:[%s200 + $0xff8] sm:$0xff]
        %v778 = vld [vmem:[%s209] sm:$0xff]
        %v779 = vld [vmem:[%s209 + $0x8] sm:$0xff]
        %v782 = vlaneseq
        %v783 = vshrl.u32 %v782, 7
        %v784 = vsub.s32 0, %v783
        %v785 = vrot.slane %v778, %v784
        %v786 = vlaneseq
        %v787 = vshrl.u32 %v786, 7
        %v788 = vsub.s32 1, %v787
        %v789 = vrot.slane %v778, %v788
        %v790 = vlaneseq
        %v791 = vshrl.u32 %v790, 7
        %v792 = vsub.s32 2, %v791
        %v793 = vrot.slane %v778, %v792
        %v794 = vlaneseq
        %v795 = vshrl.u32 %v794, 7
        %v796 = vsub.s32 3, %v795
        %v797 = vrot.slane %v778, %v796
        %v798 = vlaneseq
        %v799 = vshrl.u32 %v798, 7
        %v800 = vsub.s32 4, %v799
        %v801 = vrot.slane %v778, %v800
        %v802 = vlaneseq
        %v803 = vshrl.u32 %v802, 7
        %v804 = vsub.s32 5, %v803
        %v805 = vrot.slane %v778, %v804
        %v806 = vlaneseq
        %v807 = vshrl.u32 %v806, 7
        %v808 = vsub.s32 6, %v807
        %v809 = vrot.slane %v778, %v808
        %v810 = vlaneseq
        %v811 = vshrl.u32 %v810, 7
        %v812 = vsub.s32 7, %v811
        %v813 = vrot.slane %v778, %v812
        %v814 = vlaneseq
        %v815 = vshrl.u32 %v814, 7
        %v816 = vsub.s32 0, %v815
        %v817 = vrot.slane %v779, %v816
        %v818 = vlaneseq
        %v819 = vshrl.u32 %v818, 7
        %v820 = vsub.s32 1, %v819
        %v821 = vrot.slane %v779, %v820
        %v822 = vlaneseq
        %v823 = vshrl.u32 %v822, 7
        %v824 = vsub.s32 2, %v823
        %v825 = vrot.slane %v779, %v824
        %v826 = vlaneseq
        %v827 = vshrl.u32 %v826, 7
        %v828 = vsub.s32 3, %v827
        %v829 = vrot.slane %v779, %v828
        %v830 = vlaneseq
        %v831 = vshrl.u32 %v830, 7
        %v832 = vsub.s32 4, %v831
        %v833 = vrot.slane %v779, %v832
        %v834 = vlaneseq
        %v835 = vshrl.u32 %v834, 7
        %v836 = vsub.s32 5, %v835
        %v837 = vrot.slane %v779, %v836
        %v838 = vlaneseq
        %v839 = vshrl.u32 %v838, 7
        %v840 = vsub.s32 6, %v839
        %v841 = vrot.slane %v779, %v840
        %v842 = vlaneseq
        %v843 = vshrl.u32 %v842, 7
        %v844 = vsub.s32 7, %v843
        %v845 = vrot.slane %v779, %v844
        %v1374 = vunpack.c.l.b16 %v266
        %v1375 = vunpack.c.h.b16 %v266
        %v1376 = vunpack.c.l.b16 %v267
        %v1377 = vunpack.c.h.b16 %v267
        %v1378 = vunpack.c.l.b16 %v268
        %v1379 = vunpack.c.h.b16 %v268
        %v1380 = vunpack.c.l.b16 %v269
        %v1381 = vunpack.c.h.b16 %v269
        %v1382 = vunpack.c.l.b16 %v270
        %v1383 = vunpack.c.h.b16 %v270
        %v1384 = vunpack.c.l.b16 %v271
        %v1385 = vunpack.c.h.b16 %v271
        %v1386 = vunpack.c.l.b16 %v272
        %v1387 = vunpack.c.h.b16 %v272
        %v1388 = vunpack.c.l.b16 %v273
        %v1389 = vunpack.c.h.b16 %v273
        %v1390 = vunpack.c.l.b16 %v274
        %v1391 = vunpack.c.h.b16 %v274
        %v1392 = vunpack.c.l.b16 %v275
        %v1393 = vunpack.c.h.b16 %v275
        %v1394 = vunpack.c.l.b16 %v276
        %v1395 = vunpack.c.h.b16 %v276
        %v1396 = vunpack.c.l.b16 %v277
        %v1397 = vunpack.c.h.b16 %v277
        %v1398 = vunpack.c.l.b16 %v278
        %v1399 = vunpack.c.h.b16 %v278
        %v1400 = vunpack.c.l.b16 %v279
        %v1401 = vunpack.c.h.b16 %v279
        %v1402 = vunpack.c.l.b16 %v280
        %v1403 = vunpack.c.h.b16 %v280
        %v1404 = vunpack.c.l.b16 %v281
        %v1405 = vunpack.c.h.b16 %v281
        %v1406 = vunpack.c.l.b16 %v282
        %v1407 = vunpack.c.h.b16 %v282
        %v1408 = vunpack.c.l.b16 %v283
        %v1409 = vunpack.c.h.b16 %v283
        %v1410 = vunpack.c.l.b16 %v284
        %v1411 = vunpack.c.h.b16 %v284
        %v1412 = vunpack.c.l.b16 %v285
        %v1413 = vunpack.c.h.b16 %v285
        %v1414 = vunpack.c.l.b16 %v286
        %v1415 = vunpack.c.h.b16 %v286
        %v1416 = vunpack.c.l.b16 %v287
        %v1417 = vunpack.c.h.b16 %v287
        %v1418 = vunpack.c.l.b16 %v288
        %v1419 = vunpack.c.h.b16 %v288
        %v1420 = vunpack.c.l.b16 %v289
        %v1421 = vunpack.c.h.b16 %v289
        %v1422 = vunpack.c.l.b16 %v290
        %v1423 = vunpack.c.h.b16 %v290
        %v1424 = vunpack.c.l.b16 %v291
        %v1425 = vunpack.c.h.b16 %v291
        %v1426 = vunpack.c.l.b16 %v292
        %v1427 = vunpack.c.h.b16 %v292
        %v1428 = vunpack.c.l.b16 %v293
        %v1429 = vunpack.c.h.b16 %v293
        %v1430 = vunpack.c.l.b16 %v294
        %v1431 = vunpack.c.h.b16 %v294
        %v1432 = vunpack.c.l.b16 %v295
        %v1433 = vunpack.c.h.b16 %v295
        %v1434 = vunpack.c.l.b16 %v296
        %v1435 = vunpack.c.h.b16 %v296
        %v1436 = vunpack.c.l.b16 %v297
        %v1437 = vunpack.c.h.b16 %v297
        %v1438 = vunpack.c.l.b16 %v298
        %v1439 = vunpack.c.h.b16 %v298
        %v1440 = vunpack.c.l.b16 %v299
        %v1441 = vunpack.c.h.b16 %v299
        %v1442 = vunpack.c.l.b16 %v300
        %v1443 = vunpack.c.h.b16 %v300
        %v1444 = vunpack.c.l.b16 %v301
        %v1445 = vunpack.c.h.b16 %v301
        %v1446 = vunpack.c.l.b16 %v302
        %v1447 = vunpack.c.h.b16 %v302
        %v1448 = vunpack.c.l.b16 %v303
        %v1449 = vunpack.c.h.b16 %v303
        %v1450 = vunpack.c.l.b16 %v304
        %v1451 = vunpack.c.h.b16 %v304
        %v1452 = vunpack.c.l.b16 %v305
        %v1453 = vunpack.c.h.b16 %v305
        %v1454 = vunpack.c.l.b16 %v306
        %v1455 = vunpack.c.h.b16 %v306
        %v1456 = vunpack.c.l.b16 %v307
        %v1457 = vunpack.c.h.b16 %v307
        %v1458 = vunpack.c.l.b16 %v308
        %v1459 = vunpack.c.h.b16 %v308
        %v1460 = vunpack.c.l.b16 %v309
        %v1461 = vunpack.c.h.b16 %v309
        %v1462 = vunpack.c.l.b16 %v310
        %v1463 = vunpack.c.h.b16 %v310
        %v1464 = vunpack.c.l.b16 %v311
        %v1465 = vunpack.c.h.b16 %v311
        %v1466 = vunpack.c.l.b16 %v312
        %v1467 = vunpack.c.h.b16 %v312
        %v1468 = vunpack.c.l.b16 %v313
        %v1469 = vunpack.c.h.b16 %v313
        %v1470 = vunpack.c.l.b16 %v314
        %v1471 = vunpack.c.h.b16 %v314
        %v1472 = vunpack.c.l.b16 %v315
        %v1473 = vunpack.c.h.b16 %v315
        %v1474 = vunpack.c.l.b16 %v316
        %v1475 = vunpack.c.h.b16 %v316
        %v1476 = vunpack.c.l.b16 %v317
        %v1477 = vunpack.c.h.b16 %v317
        %v1478 = vunpack.c.l.b16 %v318
        %v1479 = vunpack.c.h.b16 %v318
        %v1480 = vunpack.c.l.b16 %v319
        %v1481 = vunpack.c.h.b16 %v319
        %v1482 = vunpack.c.l.b16 %v320
        %v1483 = vunpack.c.h.b16 %v320
        %v1484 = vunpack.c.l.b16 %v321
        %v1485 = vunpack.c.h.b16 %v321
        %v1486 = vunpack.c.l.b16 %v322
        %v1487 = vunpack.c.h.b16 %v322
        %v1488 = vunpack.c.l.b16 %v323
        %v1489 = vunpack.c.h.b16 %v323
        %v1490 = vunpack.c.l.b16 %v324
        %v1491 = vunpack.c.h.b16 %v324
        %v1492 = vunpack.c.l.b16 %v325
        %v1493 = vunpack.c.h.b16 %v325
        %v1494 = vunpack.c.l.b16 %v326
        %v1495 = vunpack.c.h.b16 %v326
        %v1496 = vunpack.c.l.b16 %v327
        %v1497 = vunpack.c.h.b16 %v327
        %v1498 = vunpack.c.l.b16 %v328
        %v1499 = vunpack.c.h.b16 %v328
        %v1500 = vunpack.c.l.b16 %v329
        %v1501 = vunpack.c.h.b16 %v329
        %v1502 = vunpack.c.l.b16 %v330
        %v1503 = vunpack.c.h.b16 %v330
        %v1504 = vunpack.c.l.b16 %v331
        %v1505 = vunpack.c.h.b16 %v331
        %v1506 = vunpack.c.l.b16 %v332
        %v1507 = vunpack.c.h.b16 %v332
        %v1508 = vunpack.c.l.b16 %v333
        %v1509 = vunpack.c.h.b16 %v333
        %v1510 = vunpack.c.l.b16 %v334
        %v1511 = vunpack.c.h.b16 %v334
        %v1512 = vunpack.c.l.b16 %v335
        %v1513 = vunpack.c.h.b16 %v335
        %v1514 = vunpack.c.l.b16 %v336
        %v1515 = vunpack.c.h.b16 %v336
        %v1516 = vunpack.c.l.b16 %v337
        %v1517 = vunpack.c.h.b16 %v337
        %v1518 = vunpack.c.l.b16 %v338
        %v1519 = vunpack.c.h.b16 %v338
        %v1520 = vunpack.c.l.b16 %v339
        %v1521 = vunpack.c.h.b16 %v339
        %v1522 = vunpack.c.l.b16 %v340
        %v1523 = vunpack.c.h.b16 %v340
        %v1524 = vunpack.c.l.b16 %v341
        %v1525 = vunpack.c.h.b16 %v341
        %v1526 = vunpack.c.l.b16 %v342
        %v1527 = vunpack.c.h.b16 %v342
        %v1528 = vunpack.c.l.b16 %v343
        %v1529 = vunpack.c.h.b16 %v343
        %v1530 = vunpack.c.l.b16 %v344
        %v1531 = vunpack.c.h.b16 %v344
        %v1532 = vunpack.c.l.b16 %v345
        %v1533 = vunpack.c.h.b16 %v345
        %v1534 = vunpack.c.l.b16 %v346
        %v1535 = vunpack.c.h.b16 %v346
        %v1536 = vunpack.c.l.b16 %v347
        %v1537 = vunpack.c.h.b16 %v347
        %v1538 = vunpack.c.l.b16 %v348
        %v1539 = vunpack.c.h.b16 %v348
        %v1540 = vunpack.c.l.b16 %v349
        %v1541 = vunpack.c.h.b16 %v349
        %v1542 = vunpack.c.l.b16 %v350
        %v1543 = vunpack.c.h.b16 %v350
        %v1544 = vunpack.c.l.b16 %v351
        %v1545 = vunpack.c.h.b16 %v351
        %v1546 = vunpack.c.l.b16 %v352
        %v1547 = vunpack.c.h.b16 %v352
        %v1548 = vunpack.c.l.b16 %v353
        %v1549 = vunpack.c.h.b16 %v353
        %v1550 = vunpack.c.l.b16 %v354
        %v1551 = vunpack.c.h.b16 %v354
        %v1552 = vunpack.c.l.b16 %v355
        %v1553 = vunpack.c.h.b16 %v355
        %v1554 = vunpack.c.l.b16 %v356
        %v1555 = vunpack.c.h.b16 %v356
        %v1556 = vunpack.c.l.b16 %v357
        %v1557 = vunpack.c.h.b16 %v357
        %v1558 = vunpack.c.l.b16 %v358
        %v1559 = vunpack.c.h.b16 %v358
        %v1560 = vunpack.c.l.b16 %v359
        %v1561 = vunpack.c.h.b16 %v359
        %v1562 = vunpack.c.l.b16 %v360
        %v1563 = vunpack.c.h.b16 %v360
        %v1564 = vunpack.c.l.b16 %v361
        %v1565 = vunpack.c.h.b16 %v361
        %v1566 = vunpack.c.l.b16 %v362
        %v1567 = vunpack.c.h.b16 %v362
        %v1568 = vunpack.c.l.b16 %v363
        %v1569 = vunpack.c.h.b16 %v363
        %v1570 = vunpack.c.l.b16 %v364
        %v1571 = vunpack.c.h.b16 %v364
        %v1572 = vunpack.c.l.b16 %v365
        %v1573 = vunpack.c.h.b16 %v365
        %v1574 = vunpack.c.l.b16 %v366
        %v1575 = vunpack.c.h.b16 %v366
        %v1576 = vunpack.c.l.b16 %v367
        %v1577 = vunpack.c.h.b16 %v367
        %v1578 = vunpack.c.l.b16 %v368
        %v1579 = vunpack.c.h.b16 %v368
        %v1580 = vunpack.c.l.b16 %v369
        %v1581 = vunpack.c.h.b16 %v369
        %v1582 = vunpack.c.l.b16 %v370
        %v1583 = vunpack.c.h.b16 %v370
        %v1584 = vunpack.c.l.b16 %v371
        %v1585 = vunpack.c.h.b16 %v371
        %v1586 = vunpack.c.l.b16 %v372
        %v1587 = vunpack.c.h.b16 %v372
        %v1588 = vunpack.c.l.b16 %v373
        %v1589 = vunpack.c.h.b16 %v373
        %v1590 = vunpack.c.l.b16 %v374
        %v1591 = vunpack.c.h.b16 %v374
        %v1592 = vunpack.c.l.b16 %v375
        %v1593 = vunpack.c.h.b16 %v375
        %v1594 = vunpack.c.l.b16 %v376
        %v1595 = vunpack.c.h.b16 %v376
        %v1596 = vunpack.c.l.b16 %v377
        %v1597 = vunpack.c.h.b16 %v377
        %v1598 = vunpack.c.l.b16 %v378
        %v1599 = vunpack.c.h.b16 %v378
        %v1600 = vunpack.c.l.b16 %v379
        %v1601 = vunpack.c.h.b16 %v379
        %v1602 = vunpack.c.l.b16 %v380
        %v1603 = vunpack.c.h.b16 %v380
        %v1604 = vunpack.c.l.b16 %v381
        %v1605 = vunpack.c.h.b16 %v381
        %v1606 = vunpack.c.l.b16 %v382
        %v1607 = vunpack.c.h.b16 %v382
        %v1608 = vunpack.c.l.b16 %v383
        %v1609 = vunpack.c.h.b16 %v383
        %v1610 = vunpack.c.l.b16 %v384
        %v1611 = vunpack.c.h.b16 %v384
        %v1612 = vunpack.c.l.b16 %v385
        %v1613 = vunpack.c.h.b16 %v385
        %v1614 = vunpack.c.l.b16 %v386
        %v1615 = vunpack.c.h.b16 %v386
        %v1616 = vunpack.c.l.b16 %v387
        %v1617 = vunpack.c.h.b16 %v387
        %v1618 = vunpack.c.l.b16 %v388
        %v1619 = vunpack.c.h.b16 %v388
        %v1620 = vunpack.c.l.b16 %v389
        %v1621 = vunpack.c.h.b16 %v389
        %v1622 = vunpack.c.l.b16 %v390
        %v1623 = vunpack.c.h.b16 %v390
        %v1624 = vunpack.c.l.b16 %v391
        %v1625 = vunpack.c.h.b16 %v391
        %v1626 = vunpack.c.l.b16 %v392
        %v1627 = vunpack.c.h.b16 %v392
        %v1628 = vunpack.c.l.b16 %v393
        %v1629 = vunpack.c.h.b16 %v393
        %v1630 = vunpack.c.l.b16 %v394
        %v1631 = vunpack.c.h.b16 %v394
        %v1632 = vunpack.c.l.b16 %v395
        %v1633 = vunpack.c.h.b16 %v395
        %v1634 = vunpack.c.l.b16 %v396
        %v1635 = vunpack.c.h.b16 %v396
        %v1636 = vunpack.c.l.b16 %v397
        %v1637 = vunpack.c.h.b16 %v397
        %v1638 = vunpack.c.l.b16 %v398
        %v1639 = vunpack.c.h.b16 %v398
        %v1640 = vunpack.c.l.b16 %v399
        %v1641 = vunpack.c.h.b16 %v399
        %v1642 = vunpack.c.l.b16 %v400
        %v1643 = vunpack.c.h.b16 %v400
        %v1644 = vunpack.c.l.b16 %v401
        %v1645 = vunpack.c.h.b16 %v401
        %v1646 = vunpack.c.l.b16 %v402
        %v1647 = vunpack.c.h.b16 %v402
        %v1648 = vunpack.c.l.b16 %v403
        %v1649 = vunpack.c.h.b16 %v403
        %v1650 = vunpack.c.l.b16 %v404
        %v1651 = vunpack.c.h.b16 %v404
        %v1652 = vunpack.c.l.b16 %v405
        %v1653 = vunpack.c.h.b16 %v405
        %v1654 = vunpack.c.l.b16 %v406
        %v1655 = vunpack.c.h.b16 %v406
        %v1656 = vunpack.c.l.b16 %v407
        %v1657 = vunpack.c.h.b16 %v407
        %v1658 = vunpack.c.l.b16 %v408
        %v1659 = vunpack.c.h.b16 %v408
        %v1660 = vunpack.c.l.b16 %v409
        %v1661 = vunpack.c.h.b16 %v409
        %v1662 = vunpack.c.l.b16 %v410
        %v1663 = vunpack.c.h.b16 %v410
        %v1664 = vunpack.c.l.b16 %v411
        %v1665 = vunpack.c.h.b16 %v411
        %v1666 = vunpack.c.l.b16 %v412
        %v1667 = vunpack.c.h.b16 %v412
        %v1668 = vunpack.c.l.b16 %v413
        %v1669 = vunpack.c.h.b16 %v413
        %v1670 = vunpack.c.l.b16 %v414
        %v1671 = vunpack.c.h.b16 %v414
        %v1672 = vunpack.c.l.b16 %v415
        %v1673 = vunpack.c.h.b16 %v415
        %v1674 = vunpack.c.l.b16 %v416
        %v1675 = vunpack.c.h.b16 %v416
        %v1676 = vunpack.c.l.b16 %v417
        %v1677 = vunpack.c.h.b16 %v417
        %v1678 = vunpack.c.l.b16 %v418
        %v1679 = vunpack.c.h.b16 %v418
        %v1680 = vunpack.c.l.b16 %v419
        %v1681 = vunpack.c.h.b16 %v419
        %v1682 = vunpack.c.l.b16 %v420
        %v1683 = vunpack.c.h.b16 %v420
        %v1684 = vunpack.c.l.b16 %v421
        %v1685 = vunpack.c.h.b16 %v421
        %v1686 = vunpack.c.l.b16 %v422
        %v1687 = vunpack.c.h.b16 %v422
        %v1688 = vunpack.c.l.b16 %v423
        %v1689 = vunpack.c.h.b16 %v423
        %v1690 = vunpack.c.l.b16 %v424
        %v1691 = vunpack.c.h.b16 %v424
        %v1692 = vunpack.c.l.b16 %v425
        %v1693 = vunpack.c.h.b16 %v425
        %v1694 = vunpack.c.l.b16 %v426
        %v1695 = vunpack.c.h.b16 %v426
        %v1696 = vunpack.c.l.b16 %v427
        %v1697 = vunpack.c.h.b16 %v427
        %v1698 = vunpack.c.l.b16 %v428
        %v1699 = vunpack.c.h.b16 %v428
        %v1700 = vunpack.c.l.b16 %v429
        %v1701 = vunpack.c.h.b16 %v429
        %v1702 = vunpack.c.l.b16 %v430
        %v1703 = vunpack.c.h.b16 %v430
        %v1704 = vunpack.c.l.b16 %v431
        %v1705 = vunpack.c.h.b16 %v431
        %v1706 = vunpack.c.l.b16 %v432
        %v1707 = vunpack.c.h.b16 %v432
        %v1708 = vunpack.c.l.b16 %v433
        %v1709 = vunpack.c.h.b16 %v433
        %v1710 = vunpack.c.l.b16 %v434
        %v1711 = vunpack.c.h.b16 %v434
        %v1712 = vunpack.c.l.b16 %v435
        %v1713 = vunpack.c.h.b16 %v435
        %v1714 = vunpack.c.l.b16 %v436
        %v1715 = vunpack.c.h.b16 %v436
        %v1716 = vunpack.c.l.b16 %v437
        %v1717 = vunpack.c.h.b16 %v437
        %v1718 = vunpack.c.l.b16 %v438
        %v1719 = vunpack.c.h.b16 %v438
        %v1720 = vunpack.c.l.b16 %v439
        %v1721 = vunpack.c.h.b16 %v439
        %v1722 = vunpack.c.l.b16 %v440
        %v1723 = vunpack.c.h.b16 %v440
        %v1724 = vunpack.c.l.b16 %v441
        %v1725 = vunpack.c.h.b16 %v441
        %v1726 = vunpack.c.l.b16 %v442
        %v1727 = vunpack.c.h.b16 %v442
        %v1728 = vunpack.c.l.b16 %v443
        %v1729 = vunpack.c.h.b16 %v443
        %v1730 = vunpack.c.l.b16 %v444
        %v1731 = vunpack.c.h.b16 %v444
        %v1732 = vunpack.c.l.b16 %v445
        %v1733 = vunpack.c.h.b16 %v445
        %v1734 = vunpack.c.l.b16 %v446
        %v1735 = vunpack.c.h.b16 %v446
        %v1736 = vunpack.c.l.b16 %v447
        %v1737 = vunpack.c.h.b16 %v447
        %v1738 = vunpack.c.l.b16 %v448
        %v1739 = vunpack.c.h.b16 %v448
        %v1740 = vunpack.c.l.b16 %v449
        %v1741 = vunpack.c.h.b16 %v449
        %v1742 = vunpack.c.l.b16 %v450
        %v1743 = vunpack.c.h.b16 %v450
        %v1744 = vunpack.c.l.b16 %v451
        %v1745 = vunpack.c.h.b16 %v451
        %v1746 = vunpack.c.l.b16 %v452
        %v1747 = vunpack.c.h.b16 %v452
        %v1748 = vunpack.c.l.b16 %v453
        %v1749 = vunpack.c.h.b16 %v453
        %v1750 = vunpack.c.l.b16 %v454
        %v1751 = vunpack.c.h.b16 %v454
        %v1752 = vunpack.c.l.b16 %v455
        %v1753 = vunpack.c.h.b16 %v455
        %v1754 = vunpack.c.l.b16 %v456
        %v1755 = vunpack.c.h.b16 %v456
        %v1756 = vunpack.c.l.b16 %v457
        %v1757 = vunpack.c.h.b16 %v457
        %v1758 = vunpack.c.l.b16 %v458
        %v1759 = vunpack.c.h.b16 %v458
        %v1760 = vunpack.c.l.b16 %v459
        %v1761 = vunpack.c.h.b16 %v459
        %v1762 = vunpack.c.l.b16 %v460
        %v1763 = vunpack.c.h.b16 %v460
        %v1764 = vunpack.c.l.b16 %v461
        %v1765 = vunpack.c.h.b16 %v461
        %v1766 = vunpack.c.l.b16 %v462
        %v1767 = vunpack.c.h.b16 %v462
        %v1768 = vunpack.c.l.b16 %v463
        %v1769 = vunpack.c.h.b16 %v463
        %v1770 = vunpack.c.l.b16 %v464
        %v1771 = vunpack.c.h.b16 %v464
        %v1772 = vunpack.c.l.b16 %v465
        %v1773 = vunpack.c.h.b16 %v465
        %v1774 = vunpack.c.l.b16 %v466
        %v1775 = vunpack.c.h.b16 %v466
        %v1776 = vunpack.c.l.b16 %v467
        %v1777 = vunpack.c.h.b16 %v467
        %v1778 = vunpack.c.l.b16 %v468
        %v1779 = vunpack.c.h.b16 %v468
        %v1780 = vunpack.c.l.b16 %v469
        %v1781 = vunpack.c.h.b16 %v469
        %v1782 = vunpack.c.l.b16 %v470
        %v1783 = vunpack.c.h.b16 %v470
        %v1784 = vunpack.c.l.b16 %v471
        %v1785 = vunpack.c.h.b16 %v471
        %v1786 = vunpack.c.l.b16 %v472
        %v1787 = vunpack.c.h.b16 %v472
        %v1788 = vunpack.c.l.b16 %v473
        %v1789 = vunpack.c.h.b16 %v473
        %v1790 = vunpack.c.l.b16 %v474
        %v1791 = vunpack.c.h.b16 %v474
        %v1792 = vunpack.c.l.b16 %v475
        %v1793 = vunpack.c.h.b16 %v475
        %v1794 = vunpack.c.l.b16 %v476
        %v1795 = vunpack.c.h.b16 %v476
        %v1796 = vunpack.c.l.b16 %v477
        %v1797 = vunpack.c.h.b16 %v477
        %v1798 = vunpack.c.l.b16 %v478
        %v1799 = vunpack.c.h.b16 %v478
        %v1800 = vunpack.c.l.b16 %v479
        %v1801 = vunpack.c.h.b16 %v479
        %v1802 = vunpack.c.l.b16 %v480
        %v1803 = vunpack.c.h.b16 %v480
        %v1804 = vunpack.c.l.b16 %v481
        %v1805 = vunpack.c.h.b16 %v481
        %v1806 = vunpack.c.l.b16 %v482
        %v1807 = vunpack.c.h.b16 %v482
        %v1808 = vunpack.c.l.b16 %v483
        %v1809 = vunpack.c.h.b16 %v483
        %v1810 = vunpack.c.l.b16 %v484
        %v1811 = vunpack.c.h.b16 %v484
        %v1812 = vunpack.c.l.b16 %v485
        %v1813 = vunpack.c.h.b16 %v485
        %v1814 = vunpack.c.l.b16 %v486
        %v1815 = vunpack.c.h.b16 %v486
        %v1816 = vunpack.c.l.b16 %v487
        %v1817 = vunpack.c.h.b16 %v487
        %v1818 = vunpack.c.l.b16 %v488
        %v1819 = vunpack.c.h.b16 %v488
        %v1820 = vunpack.c.l.b16 %v489
        %v1821 = vunpack.c.h.b16 %v489
        %v1822 = vunpack.c.l.b16 %v490
        %v1823 = vunpack.c.h.b16 %v490
        %v1824 = vunpack.c.l.b16 %v491
        %v1825 = vunpack.c.h.b16 %v491
        %v1826 = vunpack.c.l.b16 %v492
        %v1827 = vunpack.c.h.b16 %v492
        %v1828 = vunpack.c.l.b16 %v493
        %v1829 = vunpack.c.h.b16 %v493
        %v1830 = vunpack.c.l.b16 %v494
        %v1831 = vunpack.c.h.b16 %v494
        %v1832 = vunpack.c.l.b16 %v495
        %v1833 = vunpack.c.h.b16 %v495
        %v1834 = vunpack.c.l.b16 %v496
        %v1835 = vunpack.c.h.b16 %v496
        %v1836 = vunpack.c.l.b16 %v497
        %v1837 = vunpack.c.h.b16 %v497
        %v1838 = vunpack.c.l.b16 %v498
        %v1839 = vunpack.c.h.b16 %v498
        %v1840 = vunpack.c.l.b16 %v499
        %v1841 = vunpack.c.h.b16 %v499
        %v1842 = vunpack.c.l.b16 %v500
        %v1843 = vunpack.c.h.b16 %v500
        %v1844 = vunpack.c.l.b16 %v501
        %v1845 = vunpack.c.h.b16 %v501
        %v1846 = vunpack.c.l.b16 %v502
        %v1847 = vunpack.c.h.b16 %v502
        %v1848 = vunpack.c.l.b16 %v503
        %v1849 = vunpack.c.h.b16 %v503
        %v1850 = vunpack.c.l.b16 %v504
        %v1851 = vunpack.c.h.b16 %v504
        %v1852 = vunpack.c.l.b16 %v505
        %v1853 = vunpack.c.h.b16 %v505
        %v1854 = vunpack.c.l.b16 %v506
        %v1855 = vunpack.c.h.b16 %v506
        %v1856 = vunpack.c.l.b16 %v507
        %v1857 = vunpack.c.h.b16 %v507
        %v1858 = vunpack.c.l.b16 %v508
        %v1859 = vunpack.c.h.b16 %v508
        %v1860 = vunpack.c.l.b16 %v509
        %v1861 = vunpack.c.h.b16 %v509
        %v1862 = vunpack.c.l.b16 %v510
        %v1863 = vunpack.c.h.b16 %v510
        %v1864 = vunpack.c.l.b16 %v511
        %v1865 = vunpack.c.h.b16 %v511
        %v1866 = vunpack.c.l.b16 %v512
        %v1867 = vunpack.c.h.b16 %v512
        %v1868 = vunpack.c.l.b16 %v513
        %v1869 = vunpack.c.h.b16 %v513
        %v1870 = vunpack.c.l.b16 %v514
        %v1871 = vunpack.c.h.b16 %v514
        %v1872 = vunpack.c.l.b16 %v515
        %v1873 = vunpack.c.h.b16 %v515
        %v1874 = vunpack.c.l.b16 %v516
        %v1875 = vunpack.c.h.b16 %v516
        %v1876 = vunpack.c.l.b16 %v517
        %v1877 = vunpack.c.h.b16 %v517
        %v1878 = vunpack.c.l.b16 %v518
        %v1879 = vunpack.c.h.b16 %v518
        %v1880 = vunpack.c.l.b16 %v519
        %v1881 = vunpack.c.h.b16 %v519
        %v1882 = vunpack.c.l.b16 %v520
        %v1883 = vunpack.c.h.b16 %v520
        %v1884 = vunpack.c.l.b16 %v521
        %v1885 = vunpack.c.h.b16 %v521
        %v1886 = vunpack.c.l.b16 %v522
        %v1887 = vunpack.c.h.b16 %v522
        %v1888 = vunpack.c.l.b16 %v523
        %v1889 = vunpack.c.h.b16 %v523
        %v1890 = vunpack.c.l.b16 %v524
        %v1891 = vunpack.c.h.b16 %v524
        %v1892 = vunpack.c.l.b16 %v525
        %v1893 = vunpack.c.h.b16 %v525
        %v1894 = vunpack.c.l.b16 %v526
        %v1895 = vunpack.c.h.b16 %v526
        %v1896 = vunpack.c.l.b16 %v527
        %v1897 = vunpack.c.h.b16 %v527
        %v1898 = vunpack.c.l.b16 %v528
        %v1899 = vunpack.c.h.b16 %v528
        %v1900 = vunpack.c.l.b16 %v529
        %v1901 = vunpack.c.h.b16 %v529
        %v1902 = vunpack.c.l.b16 %v530
        %v1903 = vunpack.c.h.b16 %v530
        %v1904 = vunpack.c.l.b16 %v531
        %v1905 = vunpack.c.h.b16 %v531
        %v1906 = vunpack.c.l.b16 %v532
        %v1907 = vunpack.c.h.b16 %v532
        %v1908 = vunpack.c.l.b16 %v533
        %v1909 = vunpack.c.h.b16 %v533
        %v1910 = vunpack.c.l.b16 %v534
        %v1911 = vunpack.c.h.b16 %v534
        %v1912 = vunpack.c.l.b16 %v535
        %v1913 = vunpack.c.h.b16 %v535
        %v1914 = vunpack.c.l.b16 %v536
        %v1915 = vunpack.c.h.b16 %v536
        %v1916 = vunpack.c.l.b16 %v537
        %v1917 = vunpack.c.h.b16 %v537
        %v1918 = vunpack.c.l.b16 %v538
        %v1919 = vunpack.c.h.b16 %v538
        %v1920 = vunpack.c.l.b16 %v539
        %v1921 = vunpack.c.h.b16 %v539
        %v1922 = vunpack.c.l.b16 %v540
        %v1923 = vunpack.c.h.b16 %v540
        %v1924 = vunpack.c.l.b16 %v541
        %v1925 = vunpack.c.h.b16 %v541
        %v1926 = vunpack.c.l.b16 %v542
        %v1927 = vunpack.c.h.b16 %v542
        %v1928 = vunpack.c.l.b16 %v543
        %v1929 = vunpack.c.h.b16 %v543
        %v1930 = vunpack.c.l.b16 %v544
        %v1931 = vunpack.c.h.b16 %v544
        %v1932 = vunpack.c.l.b16 %v545
        %v1933 = vunpack.c.h.b16 %v545
        %v1934 = vunpack.c.l.b16 %v546
        %v1935 = vunpack.c.h.b16 %v546
        %v1936 = vunpack.c.l.b16 %v547
        %v1937 = vunpack.c.h.b16 %v547
        %v1938 = vunpack.c.l.b16 %v548
        %v1939 = vunpack.c.h.b16 %v548
        %v1940 = vunpack.c.l.b16 %v549
        %v1941 = vunpack.c.h.b16 %v549
        %v1942 = vunpack.c.l.b16 %v550
        %v1943 = vunpack.c.h.b16 %v550
        %v1944 = vunpack.c.l.b16 %v551
        %v1945 = vunpack.c.h.b16 %v551
        %v1946 = vunpack.c.l.b16 %v552
        %v1947 = vunpack.c.h.b16 %v552
        %v1948 = vunpack.c.l.b16 %v553
        %v1949 = vunpack.c.h.b16 %v553
        %v1950 = vunpack.c.l.b16 %v554
        %v1951 = vunpack.c.h.b16 %v554
        %v1952 = vunpack.c.l.b16 %v555
        %v1953 = vunpack.c.h.b16 %v555
        %v1954 = vunpack.c.l.b16 %v556
        %v1955 = vunpack.c.h.b16 %v556
        %v1956 = vunpack.c.l.b16 %v557
        %v1957 = vunpack.c.h.b16 %v557
        %v1958 = vunpack.c.l.b16 %v558
        %v1959 = vunpack.c.h.b16 %v558
        %v1960 = vunpack.c.l.b16 %v559
        %v1961 = vunpack.c.h.b16 %v559
        %v1962 = vunpack.c.l.b16 %v560
        %v1963 = vunpack.c.h.b16 %v560
        %v1964 = vunpack.c.l.b16 %v561
        %v1965 = vunpack.c.h.b16 %v561
        %v1966 = vunpack.c.l.b16 %v562
        %v1967 = vunpack.c.h.b16 %v562
        %v1968 = vunpack.c.l.b16 %v563
        %v1969 = vunpack.c.h.b16 %v563
        %v1970 = vunpack.c.l.b16 %v564
        %v1971 = vunpack.c.h.b16 %v564
        %v1972 = vunpack.c.l.b16 %v565
        %v1973 = vunpack.c.h.b16 %v565
        %v1974 = vunpack.c.l.b16 %v566
        %v1975 = vunpack.c.h.b16 %v566
        %v1976 = vunpack.c.l.b16 %v567
        %v1977 = vunpack.c.h.b16 %v567
        %v1978 = vunpack.c.l.b16 %v568
        %v1979 = vunpack.c.h.b16 %v568
        %v1980 = vunpack.c.l.b16 %v569
        %v1981 = vunpack.c.h.b16 %v569
        %v1982 = vunpack.c.l.b16 %v570
        %v1983 = vunpack.c.h.b16 %v570
        %v1984 = vunpack.c.l.b16 %v571
        %v1985 = vunpack.c.h.b16 %v571
        %v1986 = vunpack.c.l.b16 %v572
        %v1987 = vunpack.c.h.b16 %v572
        %v1988 = vunpack.c.l.b16 %v573
        %v1989 = vunpack.c.h.b16 %v573
        %v1990 = vunpack.c.l.b16 %v574
        %v1991 = vunpack.c.h.b16 %v574
        %v1992 = vunpack.c.l.b16 %v575
        %v1993 = vunpack.c.h.b16 %v575
        %v1994 = vunpack.c.l.b16 %v576
        %v1995 = vunpack.c.h.b16 %v576
        %v1996 = vunpack.c.l.b16 %v577
        %v1997 = vunpack.c.h.b16 %v577
        %v1998 = vunpack.c.l.b16 %v578
        %v1999 = vunpack.c.h.b16 %v578
        %v2000 = vunpack.c.l.b16 %v579
        %v2001 = vunpack.c.h.b16 %v579
        %v2002 = vunpack.c.l.b16 %v580
        %v2003 = vunpack.c.h.b16 %v580
        %v2004 = vunpack.c.l.b16 %v581
        %v2005 = vunpack.c.h.b16 %v581
        %v2006 = vunpack.c.l.b16 %v582
        %v2007 = vunpack.c.h.b16 %v582
        %v2008 = vunpack.c.l.b16 %v583
        %v2009 = vunpack.c.h.b16 %v583
        %v2010 = vunpack.c.l.b16 %v584
        %v2011 = vunpack.c.h.b16 %v584
        %v2012 = vunpack.c.l.b16 %v585
        %v2013 = vunpack.c.h.b16 %v585
        %v2014 = vunpack.c.l.b16 %v586
        %v2015 = vunpack.c.h.b16 %v586
        %v2016 = vunpack.c.l.b16 %v587
        %v2017 = vunpack.c.h.b16 %v587
        %v2018 = vunpack.c.l.b16 %v588
        %v2019 = vunpack.c.h.b16 %v588
        %v2020 = vunpack.c.l.b16 %v589
        %v2021 = vunpack.c.h.b16 %v589
        %v2022 = vunpack.c.l.b16 %v590
        %v2023 = vunpack.c.h.b16 %v590
        %v2024 = vunpack.c.l.b16 %v591
        %v2025 = vunpack.c.h.b16 %v591
        %v2026 = vunpack.c.l.b16 %v592
        %v2027 = vunpack.c.h.b16 %v592
        %v2028 = vunpack.c.l.b16 %v593
        %v2029 = vunpack.c.h.b16 %v593
        %v2030 = vunpack.c.l.b16 %v594
        %v2031 = vunpack.c.h.b16 %v594
        %v2032 = vunpack.c.l.b16 %v595
        %v2033 = vunpack.c.h.b16 %v595
        %v2034 = vunpack.c.l.b16 %v596
        %v2035 = vunpack.c.h.b16 %v596
        %v2036 = vunpack.c.l.b16 %v597
        %v2037 = vunpack.c.h.b16 %v597
        %v2038 = vunpack.c.l.b16 %v598
        %v2039 = vunpack.c.h.b16 %v598
        %v2040 = vunpack.c.l.b16 %v599
        %v2041 = vunpack.c.h.b16 %v599
        %v2042 = vunpack.c.l.b16 %v600
        %v2043 = vunpack.c.h.b16 %v600
        %v2044 = vunpack.c.l.b16 %v601
        %v2045 = vunpack.c.h.b16 %v601
        %v2046 = vunpack.c.l.b16 %v602
        %v2047 = vunpack.c.h.b16 %v602
        %v2048 = vunpack.c.l.b16 %v603
        %v2049 = vunpack.c.h.b16 %v603
        %v2050 = vunpack.c.l.b16 %v604
        %v2051 = vunpack.c.h.b16 %v604
        %v2052 = vunpack.c.l.b16 %v605
        %v2053 = vunpack.c.h.b16 %v605
        %v2054 = vunpack.c.l.b16 %v606
        %v2055 = vunpack.c.h.b16 %v606
        %v2056 = vunpack.c.l.b16 %v607
        %v2057 = vunpack.c.h.b16 %v607
        %v2058 = vunpack.c.l.b16 %v608
        %v2059 = vunpack.c.h.b16 %v608
        %v2060 = vunpack.c.l.b16 %v609
        %v2061 = vunpack.c.h.b16 %v609
        %v2062 = vunpack.c.l.b16 %v610
        %v2063 = vunpack.c.h.b16 %v610
        %v2064 = vunpack.c.l.b16 %v611
        %v2065 = vunpack.c.h.b16 %v611
        %v2066 = vunpack.c.l.b16 %v612
        %v2067 = vunpack.c.h.b16 %v612
        %v2068 = vunpack.c.l.b16 %v613
        %v2069 = vunpack.c.h.b16 %v613
        %v2070 = vunpack.c.l.b16 %v614
        %v2071 = vunpack.c.h.b16 %v614
        %v2072 = vunpack.c.l.b16 %v615
        %v2073 = vunpack.c.h.b16 %v615
        %v2074 = vunpack.c.l.b16 %v616
        %v2075 = vunpack.c.h.b16 %v616
        %v2076 = vunpack.c.l.b16 %v617
        %v2077 = vunpack.c.h.b16 %v617
        %v2078 = vunpack.c.l.b16 %v618
        %v2079 = vunpack.c.h.b16 %v618
        %v2080 = vunpack.c.l.b16 %v619
        %v2081 = vunpack.c.h.b16 %v619
        %v2082 = vunpack.c.l.b16 %v620
        %v2083 = vunpack.c.h.b16 %v620
        %v2084 = vunpack.c.l.b16 %v621
        %v2085 = vunpack.c.h.b16 %v621
        %v2086 = vunpack.c.l.b16 %v622
        %v2087 = vunpack.c.h.b16 %v622
        %v2088 = vunpack.c.l.b16 %v623
        %v2089 = vunpack.c.h.b16 %v623
        %v2090 = vunpack.c.l.b16 %v624
        %v2091 = vunpack.c.h.b16 %v624
        %v2092 = vunpack.c.l.b16 %v625
        %v2093 = vunpack.c.h.b16 %v625
        %v2094 = vunpack.c.l.b16 %v626
        %v2095 = vunpack.c.h.b16 %v626
        %v2096 = vunpack.c.l.b16 %v627
        %v2097 = vunpack.c.h.b16 %v627
        %v2098 = vunpack.c.l.b16 %v628
        %v2099 = vunpack.c.h.b16 %v628
        %v2100 = vunpack.c.l.b16 %v629
        %v2101 = vunpack.c.h.b16 %v629
        %v2102 = vunpack.c.l.b16 %v630
        %v2103 = vunpack.c.h.b16 %v630
        %v2104 = vunpack.c.l.b16 %v631
        %v2105 = vunpack.c.h.b16 %v631
        %v2106 = vunpack.c.l.b16 %v632
        %v2107 = vunpack.c.h.b16 %v632
        %v2108 = vunpack.c.l.b16 %v633
        %v2109 = vunpack.c.h.b16 %v633
        %v2110 = vunpack.c.l.b16 %v634
        %v2111 = vunpack.c.h.b16 %v634
        %v2112 = vunpack.c.l.b16 %v635
        %v2113 = vunpack.c.h.b16 %v635
        %v2114 = vunpack.c.l.b16 %v636
        %v2115 = vunpack.c.h.b16 %v636
        %v2116 = vunpack.c.l.b16 %v637
        %v2117 = vunpack.c.h.b16 %v637
        %v2118 = vunpack.c.l.b16 %v638
        %v2119 = vunpack.c.h.b16 %v638
        %v2120 = vunpack.c.l.b16 %v639
        %v2121 = vunpack.c.h.b16 %v639
        %v2122 = vunpack.c.l.b16 %v640
        %v2123 = vunpack.c.h.b16 %v640
        %v2124 = vunpack.c.l.b16 %v641
        %v2125 = vunpack.c.h.b16 %v641
        %v2126 = vunpack.c.l.b16 %v642
        %v2127 = vunpack.c.h.b16 %v642
        %v2128 = vunpack.c.l.b16 %v643
        %v2129 = vunpack.c.h.b16 %v643
        %v2130 = vunpack.c.l.b16 %v644
        %v2131 = vunpack.c.h.b16 %v644
        %v2132 = vunpack.c.l.b16 %v645
        %v2133 = vunpack.c.h.b16 %v645
        %v2134 = vunpack.c.l.b16 %v646
        %v2135 = vunpack.c.h.b16 %v646
        %v2136 = vunpack.c.l.b16 %v647
        %v2137 = vunpack.c.h.b16 %v647
        %v2138 = vunpack.c.l.b16 %v648
        %v2139 = vunpack.c.h.b16 %v648
        %v2140 = vunpack.c.l.b16 %v649
        %v2141 = vunpack.c.h.b16 %v649
        %v2142 = vunpack.c.l.b16 %v650
        %v2143 = vunpack.c.h.b16 %v650
        %v2144 = vunpack.c.l.b16 %v651
        %v2145 = vunpack.c.h.b16 %v651
        %v2146 = vunpack.c.l.b16 %v652
        %v2147 = vunpack.c.h.b16 %v652
        %v2148 = vunpack.c.l.b16 %v653
        %v2149 = vunpack.c.h.b16 %v653
        %v2150 = vunpack.c.l.b16 %v654
        %v2151 = vunpack.c.h.b16 %v654
        %v2152 = vunpack.c.l.b16 %v655
        %v2153 = vunpack.c.h.b16 %v655
        %v2154 = vunpack.c.l.b16 %v656
        %v2155 = vunpack.c.h.b16 %v656
        %v2156 = vunpack.c.l.b16 %v657
        %v2157 = vunpack.c.h.b16 %v657
        %v2158 = vunpack.c.l.b16 %v658
        %v2159 = vunpack.c.h.b16 %v658
        %v2160 = vunpack.c.l.b16 %v659
        %v2161 = vunpack.c.h.b16 %v659
        %v2162 = vunpack.c.l.b16 %v660
        %v2163 = vunpack.c.h.b16 %v660
        %v2164 = vunpack.c.l.b16 %v661
        %v2165 = vunpack.c.h.b16 %v661
        %v2166 = vunpack.c.l.b16 %v662
        %v2167 = vunpack.c.h.b16 %v662
        %v2168 = vunpack.c.l.b16 %v663
        %v2169 = vunpack.c.h.b16 %v663
        %v2170 = vunpack.c.l.b16 %v664
        %v2171 = vunpack.c.h.b16 %v664
        %v2172 = vunpack.c.l.b16 %v665
        %v2173 = vunpack.c.h.b16 %v665
        %v2174 = vunpack.c.l.b16 %v666
        %v2175 = vunpack.c.h.b16 %v666
        %v2176 = vunpack.c.l.b16 %v667
        %v2177 = vunpack.c.h.b16 %v667
        %v2178 = vunpack.c.l.b16 %v668
        %v2179 = vunpack.c.h.b16 %v668
        %v2180 = vunpack.c.l.b16 %v669
        %v2181 = vunpack.c.h.b16 %v669
        %v2182 = vunpack.c.l.b16 %v670
        %v2183 = vunpack.c.h.b16 %v670
        %v2184 = vunpack.c.l.b16 %v671
        %v2185 = vunpack.c.h.b16 %v671
        %v2186 = vunpack.c.l.b16 %v672
        %v2187 = vunpack.c.h.b16 %v672
        %v2188 = vunpack.c.l.b16 %v673
        %v2189 = vunpack.c.h.b16 %v673
        %v2190 = vunpack.c.l.b16 %v674
        %v2191 = vunpack.c.h.b16 %v674
        %v2192 = vunpack.c.l.b16 %v675
        %v2193 = vunpack.c.h.b16 %v675
        %v2194 = vunpack.c.l.b16 %v676
        %v2195 = vunpack.c.h.b16 %v676
        %v2196 = vunpack.c.l.b16 %v677
        %v2197 = vunpack.c.h.b16 %v677
        %v2198 = vunpack.c.l.b16 %v678
        %v2199 = vunpack.c.h.b16 %v678
        %v2200 = vunpack.c.l.b16 %v679
        %v2201 = vunpack.c.h.b16 %v679
        %v2202 = vunpack.c.l.b16 %v680
        %v2203 = vunpack.c.h.b16 %v680
        %v2204 = vunpack.c.l.b16 %v681
        %v2205 = vunpack.c.h.b16 %v681
        %v2206 = vunpack.c.l.b16 %v682
        %v2207 = vunpack.c.h.b16 %v682
        %v2208 = vunpack.c.l.b16 %v683
        %v2209 = vunpack.c.h.b16 %v683
        %v2210 = vunpack.c.l.b16 %v684
        %v2211 = vunpack.c.h.b16 %v684
        %v2212 = vunpack.c.l.b16 %v685
        %v2213 = vunpack.c.h.b16 %v685
        %v2214 = vunpack.c.l.b16 %v686
        %v2215 = vunpack.c.h.b16 %v686
        %v2216 = vunpack.c.l.b16 %v687
        %v2217 = vunpack.c.h.b16 %v687
        %v2218 = vunpack.c.l.b16 %v688
        %v2219 = vunpack.c.h.b16 %v688
        %v2220 = vunpack.c.l.b16 %v689
        %v2221 = vunpack.c.h.b16 %v689
        %v2222 = vunpack.c.l.b16 %v690
        %v2223 = vunpack.c.h.b16 %v690
        %v2224 = vunpack.c.l.b16 %v691
        %v2225 = vunpack.c.h.b16 %v691
        %v2226 = vunpack.c.l.b16 %v692
        %v2227 = vunpack.c.h.b16 %v692
        %v2228 = vunpack.c.l.b16 %v693
        %v2229 = vunpack.c.h.b16 %v693
        %v2230 = vunpack.c.l.b16 %v694
        %v2231 = vunpack.c.h.b16 %v694
        %v2232 = vunpack.c.l.b16 %v695
        %v2233 = vunpack.c.h.b16 %v695
        %v2234 = vunpack.c.l.b16 %v696
        %v2235 = vunpack.c.h.b16 %v696
        %v2236 = vunpack.c.l.b16 %v697
        %v2237 = vunpack.c.h.b16 %v697
        %v2238 = vunpack.c.l.b16 %v698
        %v2239 = vunpack.c.h.b16 %v698
        %v2240 = vunpack.c.l.b16 %v699
        %v2241 = vunpack.c.h.b16 %v699
        %v2242 = vunpack.c.l.b16 %v700
        %v2243 = vunpack.c.h.b16 %v700
        %v2244 = vunpack.c.l.b16 %v701
        %v2245 = vunpack.c.h.b16 %v701
        %v2246 = vunpack.c.l.b16 %v702
        %v2247 = vunpack.c.h.b16 %v702
        %v2248 = vunpack.c.l.b16 %v703
        %v2249 = vunpack.c.h.b16 %v703
        %v2250 = vunpack.c.l.b16 %v704
        %v2251 = vunpack.c.h.b16 %v704
        %v2252 = vunpack.c.l.b16 %v705
        %v2253 = vunpack.c.h.b16 %v705
        %v2254 = vunpack.c.l.b16 %v706
        %v2255 = vunpack.c.h.b16 %v706
        %v2256 = vunpack.c.l.b16 %v707
        %v2257 = vunpack.c.h.b16 %v707
        %v2258 = vunpack.c.l.b16 %v708
        %v2259 = vunpack.c.h.b16 %v708
        %v2260 = vunpack.c.l.b16 %v709
        %v2261 = vunpack.c.h.b16 %v709
        %v2262 = vunpack.c.l.b16 %v710
        %v2263 = vunpack.c.h.b16 %v710
        %v2264 = vunpack.c.l.b16 %v711
        %v2265 = vunpack.c.h.b16 %v711
        %v2266 = vunpack.c.l.b16 %v712
        %v2267 = vunpack.c.h.b16 %v712
        %v2268 = vunpack.c.l.b16 %v713
        %v2269 = vunpack.c.h.b16 %v713
        %v2270 = vunpack.c.l.b16 %v714
        %v2271 = vunpack.c.h.b16 %v714
        %v2272 = vunpack.c.l.b16 %v715
        %v2273 = vunpack.c.h.b16 %v715
        %v2274 = vunpack.c.l.b16 %v716
        %v2275 = vunpack.c.h.b16 %v716
        %v2276 = vunpack.c.l.b16 %v717
        %v2277 = vunpack.c.h.b16 %v717
        %v2278 = vunpack.c.l.b16 %v718
        %v2279 = vunpack.c.h.b16 %v718
        %v2280 = vunpack.c.l.b16 %v719
        %v2281 = vunpack.c.h.b16 %v719
        %v2282 = vunpack.c.l.b16 %v720
        %v2283 = vunpack.c.h.b16 %v720
        %v2284 = vunpack.c.l.b16 %v721
        %v2285 = vunpack.c.h.b16 %v721
        %v2286 = vunpack.c.l.b16 %v722
        %v2287 = vunpack.c.h.b16 %v722
        %v2288 = vunpack.c.l.b16 %v723
        %v2289 = vunpack.c.h.b16 %v723
        %v2290 = vunpack.c.l.b16 %v724
        %v2291 = vunpack.c.h.b16 %v724
        %v2292 = vunpack.c.l.b16 %v725
        %v2293 = vunpack.c.h.b16 %v725
        %v2294 = vunpack.c.l.b16 %v726
        %v2295 = vunpack.c.h.b16 %v726
        %v2296 = vunpack.c.l.b16 %v727
        %v2297 = vunpack.c.h.b16 %v727
        %v2298 = vunpack.c.l.b16 %v728
        %v2299 = vunpack.c.h.b16 %v728
        %v2300 = vunpack.c.l.b16 %v729
        %v2301 = vunpack.c.h.b16 %v729
        %v2302 = vunpack.c.l.b16 %v730
        %v2303 = vunpack.c.h.b16 %v730
        %v2304 = vunpack.c.l.b16 %v731
        %v2305 = vunpack.c.h.b16 %v731
        %v2306 = vunpack.c.l.b16 %v732
        %v2307 = vunpack.c.h.b16 %v732
        %v2308 = vunpack.c.l.b16 %v733
        %v2309 = vunpack.c.h.b16 %v733
        %v2310 = vunpack.c.l.b16 %v734
        %v2311 = vunpack.c.h.b16 %v734
        %v2312 = vunpack.c.l.b16 %v735
        %v2313 = vunpack.c.h.b16 %v735
        %v2314 = vunpack.c.l.b16 %v736
        %v2315 = vunpack.c.h.b16 %v736
        %v2316 = vunpack.c.l.b16 %v737
        %v2317 = vunpack.c.h.b16 %v737
        %v2318 = vunpack.c.l.b16 %v738
        %v2319 = vunpack.c.h.b16 %v738
        %v2320 = vunpack.c.l.b16 %v739
        %v2321 = vunpack.c.h.b16 %v739
        %v2322 = vunpack.c.l.b16 %v740
        %v2323 = vunpack.c.h.b16 %v740
        %v2324 = vunpack.c.l.b16 %v741
        %v2325 = vunpack.c.h.b16 %v741
        %v2326 = vunpack.c.l.b16 %v742
        %v2327 = vunpack.c.h.b16 %v742
        %v2328 = vunpack.c.l.b16 %v743
        %v2329 = vunpack.c.h.b16 %v743
        %v2330 = vunpack.c.l.b16 %v744
        %v2331 = vunpack.c.h.b16 %v744
        %v2332 = vunpack.c.l.b16 %v745
        %v2333 = vunpack.c.h.b16 %v745
        %v2334 = vunpack.c.l.b16 %v746
        %v2335 = vunpack.c.h.b16 %v746
        %v2336 = vunpack.c.l.b16 %v747
        %v2337 = vunpack.c.h.b16 %v747
        %v2338 = vunpack.c.l.b16 %v748
        %v2339 = vunpack.c.h.b16 %v748
        %v2340 = vunpack.c.l.b16 %v749
        %v2341 = vunpack.c.h.b16 %v749
        %v2342 = vunpack.c.l.b16 %v750
        %v2343 = vunpack.c.h.b16 %v750
        %v2344 = vunpack.c.l.b16 %v751
        %v2345 = vunpack.c.h.b16 %v751
        %v2346 = vunpack.c.l.b16 %v752
        %v2347 = vunpack.c.h.b16 %v752
        %v2348 = vunpack.c.l.b16 %v753
        %v2349 = vunpack.c.h.b16 %v753
        %v2350 = vunpack.c.l.b16 %v754
        %v2351 = vunpack.c.h.b16 %v754
        %v2352 = vunpack.c.l.b16 %v755
        %v2353 = vunpack.c.h.b16 %v755
        %v2354 = vunpack.c.l.b16 %v756
        %v2355 = vunpack.c.h.b16 %v756
        %v2356 = vunpack.c.l.b16 %v757
        %v2357 = vunpack.c.h.b16 %v757
        %v2358 = vunpack.c.l.b16 %v758
        %v2359 = vunpack.c.h.b16 %v758
        %v2360 = vunpack.c.l.b16 %v759
        %v2361 = vunpack.c.h.b16 %v759
        %v2362 = vunpack.c.l.b16 %v760
        %v2363 = vunpack.c.h.b16 %v760
        %v2364 = vunpack.c.l.b16 %v761
        %v2365 = vunpack.c.h.b16 %v761
        %v2366 = vunpack.c.l.b16 %v762
        %v2367 = vunpack.c.h.b16 %v762
        %v2368 = vunpack.c.l.b16 %v763
        %v2369 = vunpack.c.h.b16 %v763
        %v2370 = vunpack.c.l.b16 %v764
        %v2371 = vunpack.c.h.b16 %v764
        %v2372 = vunpack.c.l.b16 %v765
        %v2373 = vunpack.c.h.b16 %v765
        %v2374 = vunpack.c.l.b16 %v766
        %v2375 = vunpack.c.h.b16 %v766
        %v2376 = vunpack.c.l.b16 %v767
        %v2377 = vunpack.c.h.b16 %v767
        %v2378 = vunpack.c.l.b16 %v768
        %v2379 = vunpack.c.h.b16 %v768
        %v2380 = vunpack.c.l.b16 %v769
        %v2381 = vunpack.c.h.b16 %v769
        %v2382 = vunpack.c.l.b16 %v770
        %v2383 = vunpack.c.h.b16 %v770
        %v2384 = vunpack.c.l.b16 %v771
        %v2385 = vunpack.c.h.b16 %v771
        %v2386 = vunpack.c.l.b16 %v772
        %v2387 = vunpack.c.h.b16 %v772
        %v2388 = vunpack.c.l.b16 %v773
        %v2389 = vunpack.c.h.b16 %v773
        %v2390 = vunpack.c.l.b16 %v774
        %v2391 = vunpack.c.h.b16 %v774
        %v2392 = vunpack.c.l.b16 %v775
        %v2393 = vunpack.c.h.b16 %v775
        %v2394 = vunpack.c.l.b16 %v776
        %v2395 = vunpack.c.h.b16 %v776
        %v2396 = vunpack.c.l.b16 %v777
        %v2397 = vunpack.c.h.b16 %v777
        %v2398 = vpack.c.b16 %v1390, %v1374
        %v2399 = vpack.c.b16 %v1391, %v1375
        %v2400 = vpack.c.b16 %v1392, %v1376
        %v2401 = vpack.c.b16 %v1393, %v1377
        %v2402 = vpack.c.b16 %v1394, %v1378
        %v2403 = vpack.c.b16 %v1395, %v1379
        %v2404 = vpack.c.b16 %v1396, %v1380
        %v2405 = vpack.c.b16 %v1397, %v1381
        %v2406 = vpack.c.b16 %v1398, %v1382
        %v2407 = vpack.c.b16 %v1399, %v1383
        %v2408 = vpack.c.b16 %v1400, %v1384
        %v2409 = vpack.c.b16 %v1401, %v1385
        %v2410 = vpack.c.b16 %v1402, %v1386
        %v2411 = vpack.c.b16 %v1403, %v1387
        %v2412 = vpack.c.b16 %v1404, %v1388
        %v2413 = vpack.c.b16 %v1405, %v1389
        %v2414 = vpack.c.b16 %v1422, %v1406
        %v2415 = vpack.c.b16 %v1423, %v1407
        %v2416 = vpack.c.b16 %v1424, %v1408
        %v2417 = vpack.c.b16 %v1425, %v1409
        %v2418 = vpack.c.b16 %v1426, %v1410
        %v2419 = vpack.c.b16 %v1427, %v1411
        %v2420 = vpack.c.b16 %v1428, %v1412
        %v2421 = vpack.c.b16 %v1429, %v1413
        %v2422 = vpack.c.b16 %v1430, %v1414
        %v2423 = vpack.c.b16 %v1431, %v1415
        %v2424 = vpack.c.b16 %v1432, %v1416
        %v2425 = vpack.c.b16 %v1433, %v1417
        %v2426 = vpack.c.b16 %v1434, %v1418
        %v2427 = vpack.c.b16 %v1435, %v1419
        %v2428 = vpack.c.b16 %v1436, %v1420
        %v2429 = vpack.c.b16 %v1437, %v1421
        %v2430 = vpack.c.b16 %v1454, %v1438
        %v2431 = vpack.c.b16 %v1455, %v1439
        %v2432 = vpack.c.b16 %v1456, %v1440
        %v2433 = vpack.c.b16 %v1457, %v1441
        %v2434 = vpack.c.b16 %v1458, %v1442
        %v2435 = vpack.c.b16 %v1459, %v1443
        %v2436 = vpack.c.b16 %v1460, %v1444
        %v2437 = vpack.c.b16 %v1461, %v1445
        %v2438 = vpack.c.b16 %v1462, %v1446
        %v2439 = vpack.c.b16 %v1463, %v1447
        %v2440 = vpack.c.b16 %v1464, %v1448
        %v2441 = vpack.c.b16 %v1465, %v1449
        %v2442 = vpack.c.b16 %v1466, %v1450
        %v2443 = vpack.c.b16 %v1467, %v1451
        %v2444 = vpack.c.b16 %v1468, %v1452
        %v2445 = vpack.c.b16 %v1469, %v1453
        %v2446 = vpack.c.b16 %v1486, %v1470
        %v2447 = vpack.c.b16 %v1487, %v1471
        %v2448 = vpack.c.b16 %v1488, %v1472
        %v2449 = vpack.c.b16 %v1489, %v1473
        %v2450 = vpack.c.b16 %v1490, %v1474
        %v2451 = vpack.c.b16 %v1491, %v1475
        %v2452 = vpack.c.b16 %v1492, %v1476
        %v2453 = vpack.c.b16 %v1493, %v1477
        %v2454 = vpack.c.b16 %v1494, %v1478
        %v2455 = vpack.c.b16 %v1495, %v1479
        %v2456 = vpack.c.b16 %v1496, %v1480
        %v2457 = vpack.c.b16 %v1497, %v1481
        %v2458 = vpack.c.b16 %v1498, %v1482
        %v2459 = vpack.c.b16 %v1499, %v1483
        %v2460 = vpack.c.b16 %v1500, %v1484
        %v2461 = vpack.c.b16 %v1501, %v1485
        %v2462 = vpack.c.b16 %v1518, %v1502
        %v2463 = vpack.c.b16 %v1519, %v1503
        %v2464 = vpack.c.b16 %v1520, %v1504
        %v2465 = vpack.c.b16 %v1521, %v1505
        %v2466 = vpack.c.b16 %v1522, %v1506
        %v2467 = vpack.c.b16 %v1523, %v1507
        %v2468 = vpack.c.b16 %v1524, %v1508
        %v2469 = vpack.c.b16 %v1525, %v1509
        %v2470 = vpack.c.b16 %v1526, %v1510
        %v2471 = vpack.c.b16 %v1527, %v1511
        %v2472 = vpack.c.b16 %v1528, %v1512
        %v2473 = vpack.c.b16 %v1529, %v1513
        %v2474 = vpack.c.b16 %v1530, %v1514
        %v2475 = vpack.c.b16 %v1531, %v1515
        %v2476 = vpack.c.b16 %v1532, %v1516
        %v2477 = vpack.c.b16 %v1533, %v1517
        %v2478 = vpack.c.b16 %v1550, %v1534
        %v2479 = vpack.c.b16 %v1551, %v1535
        %v2480 = vpack.c.b16 %v1552, %v1536
        %v2481 = vpack.c.b16 %v1553, %v1537
        %v2482 = vpack.c.b16 %v1554, %v1538
        %v2483 = vpack.c.b16 %v1555, %v1539
        %v2484 = vpack.c.b16 %v1556, %v1540
        %v2485 = vpack.c.b16 %v1557, %v1541
        %v2486 = vpack.c.b16 %v1558, %v1542
        %v2487 = vpack.c.b16 %v1559, %v1543
        %v2488 = vpack.c.b16 %v1560, %v1544
        %v2489 = vpack.c.b16 %v1561, %v1545
        %v2490 = vpack.c.b16 %v1562, %v1546
        %v2491 = vpack.c.b16 %v1563, %v1547
        %v2492 = vpack.c.b16 %v1564, %v1548
        %v2493 = vpack.c.b16 %v1565, %v1549
        %v2494 = vpack.c.b16 %v1582, %v1566
        %v2495 = vpack.c.b16 %v1583, %v1567
        %v2496 = vpack.c.b16 %v1584, %v1568
        %v2497 = vpack.c.b16 %v1585, %v1569
        %v2498 = vpack.c.b16 %v1586, %v1570
        %v2499 = vpack.c.b16 %v1587, %v1571
        %v2500 = vpack.c.b16 %v1588, %v1572
        %v2501 = vpack.c.b16 %v1589, %v1573
        %v2502 = vpack.c.b16 %v1590, %v1574
        %v2503 = vpack.c.b16 %v1591, %v1575
        %v2504 = vpack.c.b16 %v1592, %v1576
        %v2505 = vpack.c.b16 %v1593, %v1577
        %v2506 = vpack.c.b16 %v1594, %v1578
        %v2507 = vpack.c.b16 %v1595, %v1579
        %v2508 = vpack.c.b16 %v1596, %v1580
        %v2509 = vpack.c.b16 %v1597, %v1581
        %v2510 = vpack.c.b16 %v1614, %v1598
        %v2511 = vpack.c.b16 %v1615, %v1599
        %v2512 = vpack.c.b16 %v1616, %v1600
        %v2513 = vpack.c.b16 %v1617, %v1601
        %v2514 = vpack.c.b16 %v1618, %v1602
        %v2515 = vpack.c.b16 %v1619, %v1603
        %v2516 = vpack.c.b16 %v1620, %v1604
        %v2517 = vpack.c.b16 %v1621, %v1605
        %v2518 = vpack.c.b16 %v1622, %v1606
        %v2519 = vpack.c.b16 %v1623, %v1607
        %v2520 = vpack.c.b16 %v1624, %v1608
        %v2521 = vpack.c.b16 %v1625, %v1609
        %v2522 = vpack.c.b16 %v1626, %v1610
        %v2523 = vpack.c.b16 %v1627, %v1611
        %v2524 = vpack.c.b16 %v1628, %v1612
        %v2525 = vpack.c.b16 %v1629, %v1613
        %v2526 = vpack.c.b16 %v1646, %v1630
        %v2527 = vpack.c.b16 %v1647, %v1631
        %v2528 = vpack.c.b16 %v1648, %v1632
        %v2529 = vpack.c.b16 %v1649, %v1633
        %v2530 = vpack.c.b16 %v1650, %v1634
        %v2531 = vpack.c.b16 %v1651, %v1635
        %v2532 = vpack.c.b16 %v1652, %v1636
        %v2533 = vpack.c.b16 %v1653, %v1637
        %v2534 = vpack.c.b16 %v1654, %v1638
        %v2535 = vpack.c.b16 %v1655, %v1639
        %v2536 = vpack.c.b16 %v1656, %v1640
        %v2537 = vpack.c.b16 %v1657, %v1641
        %v2538 = vpack.c.b16 %v1658, %v1642
        %v2539 = vpack.c.b16 %v1659, %v1643
        %v2540 = vpack.c.b16 %v1660, %v1644
        %v2541 = vpack.c.b16 %v1661, %v1645
        %v2542 = vpack.c.b16 %v1678, %v1662
        %v2543 = vpack.c.b16 %v1679, %v1663
        %v2544 = vpack.c.b16 %v1680, %v1664
        %v2545 = vpack.c.b16 %v1681, %v1665
        %v2546 = vpack.c.b16 %v1682, %v1666
        %v2547 = vpack.c.b16 %v1683, %v1667
        %v2548 = vpack.c.b16 %v1684, %v1668
        %v2549 = vpack.c.b16 %v1685, %v1669
        %v2550 = vpack.c.b16 %v1686, %v1670
        %v2551 = vpack.c.b16 %v1687, %v1671
        %v2552 = vpack.c.b16 %v1688, %v1672
        %v2553 = vpack.c.b16 %v1689, %v1673
        %v2554 = vpack.c.b16 %v1690, %v1674
        %v2555 = vpack.c.b16 %v1691, %v1675
        %v2556 = vpack.c.b16 %v1692, %v1676
        %v2557 = vpack.c.b16 %v1693, %v1677
        %v2558 = vpack.c.b16 %v1710, %v1694
        %v2559 = vpack.c.b16 %v1711, %v1695
        %v2560 = vpack.c.b16 %v1712, %v1696
        %v2561 = vpack.c.b16 %v1713, %v1697
        %v2562 = vpack.c.b16 %v1714, %v1698
        %v2563 = vpack.c.b16 %v1715, %v1699
        %v2564 = vpack.c.b16 %v1716, %v1700
        %v2565 = vpack.c.b16 %v1717, %v1701
        %v2566 = vpack.c.b16 %v1718, %v1702
        %v2567 = vpack.c.b16 %v1719, %v1703
        %v2568 = vpack.c.b16 %v1720, %v1704
        %v2569 = vpack.c.b16 %v1721, %v1705
        %v2570 = vpack.c.b16 %v1722, %v1706
        %v2571 = vpack.c.b16 %v1723, %v1707
        %v2572 = vpack.c.b16 %v1724, %v1708
        %v2573 = vpack.c.b16 %v1725, %v1709
        %v2574 = vpack.c.b16 %v1742, %v1726
        %v2575 = vpack.c.b16 %v1743, %v1727
        %v2576 = vpack.c.b16 %v1744, %v1728
        %v2577 = vpack.c.b16 %v1745, %v1729
        %v2578 = vpack.c.b16 %v1746, %v1730
        %v2579 = vpack.c.b16 %v1747, %v1731
        %v2580 = vpack.c.b16 %v1748, %v1732
        %v2581 = vpack.c.b16 %v1749, %v1733
        %v2582 = vpack.c.b16 %v1750, %v1734
        %v2583 = vpack.c.b16 %v1751, %v1735
        %v2584 = vpack.c.b16 %v1752, %v1736
        %v2585 = vpack.c.b16 %v1753, %v1737
        %v2586 = vpack.c.b16 %v1754, %v1738
        %v2587 = vpack.c.b16 %v1755, %v1739
        %v2588 = vpack.c.b16 %v1756, %v1740
        %v2589 = vpack.c.b16 %v1757, %v1741
        %v2590 = vpack.c.b16 %v1774, %v1758
        %v2591 = vpack.c.b16 %v1775, %v1759
        %v2592 = vpack.c.b16 %v1776, %v1760
        %v2593 = vpack.c.b16 %v1777, %v1761
        %v2594 = vpack.c.b16 %v1778, %v1762
        %v2595 = vpack.c.b16 %v1779, %v1763
        %v2596 = vpack.c.b16 %v1780, %v1764
        %v2597 = vpack.c.b16 %v1781, %v1765
        %v2598 = vpack.c.b16 %v1782, %v1766
        %v2599 = vpack.c.b16 %v1783, %v1767
        %v2600 = vpack.c.b16 %v1784, %v1768
        %v2601 = vpack.c.b16 %v1785, %v1769
        %v2602 = vpack.c.b16 %v1786, %v1770
        %v2603 = vpack.c.b16 %v1787, %v1771
        %v2604 = vpack.c.b16 %v1788, %v1772
        %v2605 = vpack.c.b16 %v1789, %v1773
        %v2606 = vpack.c.b16 %v1806, %v1790
        %v2607 = vpack.c.b16 %v1807, %v1791
        %v2608 = vpack.c.b16 %v1808, %v1792
        %v2609 = vpack.c.b16 %v1809, %v1793
        %v2610 = vpack.c.b16 %v1810, %v1794
        %v2611 = vpack.c.b16 %v1811, %v1795
        %v2612 = vpack.c.b16 %v1812, %v1796
        %v2613 = vpack.c.b16 %v1813, %v1797
        %v2614 = vpack.c.b16 %v1814, %v1798
        %v2615 = vpack.c.b16 %v1815, %v1799
        %v2616 = vpack.c.b16 %v1816, %v1800
        %v2617 = vpack.c.b16 %v1817, %v1801
        %v2618 = vpack.c.b16 %v1818, %v1802
        %v2619 = vpack.c.b16 %v1819, %v1803
        %v2620 = vpack.c.b16 %v1820, %v1804
        %v2621 = vpack.c.b16 %v1821, %v1805
        %v2622 = vpack.c.b16 %v1838, %v1822
        %v2623 = vpack.c.b16 %v1839, %v1823
        %v2624 = vpack.c.b16 %v1840, %v1824
        %v2625 = vpack.c.b16 %v1841, %v1825
        %v2626 = vpack.c.b16 %v1842, %v1826
        %v2627 = vpack.c.b16 %v1843, %v1827
        %v2628 = vpack.c.b16 %v1844, %v1828
        %v2629 = vpack.c.b16 %v1845, %v1829
        %v2630 = vpack.c.b16 %v1846, %v1830
        %v2631 = vpack.c.b16 %v1847, %v1831
        %v2632 = vpack.c.b16 %v1848, %v1832
        %v2633 = vpack.c.b16 %v1849, %v1833
        %v2634 = vpack.c.b16 %v1850, %v1834
        %v2635 = vpack.c.b16 %v1851, %v1835
        %v2636 = vpack.c.b16 %v1852, %v1836
        %v2637 = vpack.c.b16 %v1853, %v1837
        %v2638 = vpack.c.b16 %v1870, %v1854
        %v2639 = vpack.c.b16 %v1871, %v1855
        %v2640 = vpack.c.b16 %v1872, %v1856
        %v2641 = vpack.c.b16 %v1873, %v1857
        %v2642 = vpack.c.b16 %v1874, %v1858
        %v2643 = vpack.c.b16 %v1875, %v1859
        %v2644 = vpack.c.b16 %v1876, %v1860
        %v2645 = vpack.c.b16 %v1877, %v1861
        %v2646 = vpack.c.b16 %v1878, %v1862
        %v2647 = vpack.c.b16 %v1879, %v1863
        %v2648 = vpack.c.b16 %v1880, %v1864
        %v2649 = vpack.c.b16 %v1881, %v1865
        %v2650 = vpack.c.b16 %v1882, %v1866
        %v2651 = vpack.c.b16 %v1883, %v1867
        %v2652 = vpack.c.b16 %v1884, %v1868
        %v2653 = vpack.c.b16 %v1885, %v1869
        %v2654 = vpack.c.b16 %v1902, %v1886
        %v2655 = vpack.c.b16 %v1903, %v1887
        %v2656 = vpack.c.b16 %v1904, %v1888
        %v2657 = vpack.c.b16 %v1905, %v1889
        %v2658 = vpack.c.b16 %v1906, %v1890
        %v2659 = vpack.c.b16 %v1907, %v1891
        %v2660 = vpack.c.b16 %v1908, %v1892
        %v2661 = vpack.c.b16 %v1909, %v1893
        %v2662 = vpack.c.b16 %v1910, %v1894
        %v2663 = vpack.c.b16 %v1911, %v1895
        %v2664 = vpack.c.b16 %v1912, %v1896
        %v2665 = vpack.c.b16 %v1913, %v1897
        %v2666 = vpack.c.b16 %v1914, %v1898
        %v2667 = vpack.c.b16 %v1915, %v1899
        %v2668 = vpack.c.b16 %v1916, %v1900
        %v2669 = vpack.c.b16 %v1917, %v1901
        %v2670 = vpack.c.b16 %v1934, %v1918
        %v2671 = vpack.c.b16 %v1935, %v1919
        %v2672 = vpack.c.b16 %v1936, %v1920
        %v2673 = vpack.c.b16 %v1937, %v1921
        %v2674 = vpack.c.b16 %v1938, %v1922
        %v2675 = vpack.c.b16 %v1939, %v1923
        %v2676 = vpack.c.b16 %v1940, %v1924
        %v2677 = vpack.c.b16 %v1941, %v1925
        %v2678 = vpack.c.b16 %v1942, %v1926
        %v2679 = vpack.c.b16 %v1943, %v1927
        %v2680 = vpack.c.b16 %v1944, %v1928
        %v2681 = vpack.c.b16 %v1945, %v1929
        %v2682 = vpack.c.b16 %v1946, %v1930
        %v2683 = vpack.c.b16 %v1947, %v1931
        %v2684 = vpack.c.b16 %v1948, %v1932
        %v2685 = vpack.c.b16 %v1949, %v1933
        %v2686 = vpack.c.b16 %v1966, %v1950
        %v2687 = vpack.c.b16 %v1967, %v1951
        %v2688 = vpack.c.b16 %v1968, %v1952
        %v2689 = vpack.c.b16 %v1969, %v1953
        %v2690 = vpack.c.b16 %v1970, %v1954
        %v2691 = vpack.c.b16 %v1971, %v1955
        %v2692 = vpack.c.b16 %v1972, %v1956
        %v2693 = vpack.c.b16 %v1973, %v1957
        %v2694 = vpack.c.b16 %v1974, %v1958
        %v2695 = vpack.c.b16 %v1975, %v1959
        %v2696 = vpack.c.b16 %v1976, %v1960
        %v2697 = vpack.c.b16 %v1977, %v1961
        %v2698 = vpack.c.b16 %v1978, %v1962
        %v2699 = vpack.c.b16 %v1979, %v1963
        %v2700 = vpack.c.b16 %v1980, %v1964
        %v2701 = vpack.c.b16 %v1981, %v1965
        %v2702 = vpack.c.b16 %v1998, %v1982
        %v2703 = vpack.c.b16 %v1999, %v1983
        %v2704 = vpack.c.b16 %v2000, %v1984
        %v2705 = vpack.c.b16 %v2001, %v1985
        %v2706 = vpack.c.b16 %v2002, %v1986
        %v2707 = vpack.c.b16 %v2003, %v1987
        %v2708 = vpack.c.b16 %v2004, %v1988
        %v2709 = vpack.c.b16 %v2005, %v1989
        %v2710 = vpack.c.b16 %v2006, %v1990
        %v2711 = vpack.c.b16 %v2007, %v1991
        %v2712 = vpack.c.b16 %v2008, %v1992
        %v2713 = vpack.c.b16 %v2009, %v1993
        %v2714 = vpack.c.b16 %v2010, %v1994
        %v2715 = vpack.c.b16 %v2011, %v1995
        %v2716 = vpack.c.b16 %v2012, %v1996
        %v2717 = vpack.c.b16 %v2013, %v1997
        %v2718 = vpack.c.b16 %v2030, %v2014
        %v2719 = vpack.c.b16 %v2031, %v2015
        %v2720 = vpack.c.b16 %v2032, %v2016
        %v2721 = vpack.c.b16 %v2033, %v2017
        %v2722 = vpack.c.b16 %v2034, %v2018
        %v2723 = vpack.c.b16 %v2035, %v2019
        %v2724 = vpack.c.b16 %v2036, %v2020
        %v2725 = vpack.c.b16 %v2037, %v2021
        %v2726 = vpack.c.b16 %v2038, %v2022
        %v2727 = vpack.c.b16 %v2039, %v2023
        %v2728 = vpack.c.b16 %v2040, %v2024
        %v2729 = vpack.c.b16 %v2041, %v2025
        %v2730 = vpack.c.b16 %v2042, %v2026
        %v2731 = vpack.c.b16 %v2043, %v2027
        %v2732 = vpack.c.b16 %v2044, %v2028
        %v2733 = vpack.c.b16 %v2045, %v2029
        %v2734 = vpack.c.b16 %v2062, %v2046
        %v2735 = vpack.c.b16 %v2063, %v2047
        %v2736 = vpack.c.b16 %v2064, %v2048
        %v2737 = vpack.c.b16 %v2065, %v2049
        %v2738 = vpack.c.b16 %v2066, %v2050
        %v2739 = vpack.c.b16 %v2067, %v2051
        %v2740 = vpack.c.b16 %v2068, %v2052
        %v2741 = vpack.c.b16 %v2069, %v2053
        %v2742 = vpack.c.b16 %v2070, %v2054
        %v2743 = vpack.c.b16 %v2071, %v2055
        %v2744 = vpack.c.b16 %v2072, %v2056
        %v2745 = vpack.c.b16 %v2073, %v2057
        %v2746 = vpack.c.b16 %v2074, %v2058
        %v2747 = vpack.c.b16 %v2075, %v2059
        %v2748 = vpack.c.b16 %v2076, %v2060
        %v2749 = vpack.c.b16 %v2077, %v2061
        %v2750 = vpack.c.b16 %v2094, %v2078
        %v2751 = vpack.c.b16 %v2095, %v2079
        %v2752 = vpack.c.b16 %v2096, %v2080
        %v2753 = vpack.c.b16 %v2097, %v2081
        %v2754 = vpack.c.b16 %v2098, %v2082
        %v2755 = vpack.c.b16 %v2099, %v2083
        %v2756 = vpack.c.b16 %v2100, %v2084
        %v2757 = vpack.c.b16 %v2101, %v2085
        %v2758 = vpack.c.b16 %v2102, %v2086
        %v2759 = vpack.c.b16 %v2103, %v2087
        %v2760 = vpack.c.b16 %v2104, %v2088
        %v2761 = vpack.c.b16 %v2105, %v2089
        %v2762 = vpack.c.b16 %v2106, %v2090
        %v2763 = vpack.c.b16 %v2107, %v2091
        %v2764 = vpack.c.b16 %v2108, %v2092
        %v2765 = vpack.c.b16 %v2109, %v2093
        %v2766 = vpack.c.b16 %v2126, %v2110
        %v2767 = vpack.c.b16 %v2127, %v2111
        %v2768 = vpack.c.b16 %v2128, %v2112
        %v2769 = vpack.c.b16 %v2129, %v2113
        %v2770 = vpack.c.b16 %v2130, %v2114
        %v2771 = vpack.c.b16 %v2131, %v2115
        %v2772 = vpack.c.b16 %v2132, %v2116
        %v2773 = vpack.c.b16 %v2133, %v2117
        %v2774 = vpack.c.b16 %v2134, %v2118
        %v2775 = vpack.c.b16 %v2135, %v2119
        %v2776 = vpack.c.b16 %v2136, %v2120
        %v2777 = vpack.c.b16 %v2137, %v2121
        %v2778 = vpack.c.b16 %v2138, %v2122
        %v2779 = vpack.c.b16 %v2139, %v2123
        %v2780 = vpack.c.b16 %v2140, %v2124
        %v2781 = vpack.c.b16 %v2141, %v2125
        %v2782 = vpack.c.b16 %v2158, %v2142
        %v2783 = vpack.c.b16 %v2159, %v2143
        %v2784 = vpack.c.b16 %v2160, %v2144
        %v2785 = vpack.c.b16 %v2161, %v2145
        %v2786 = vpack.c.b16 %v2162, %v2146
        %v2787 = vpack.c.b16 %v2163, %v2147
        %v2788 = vpack.c.b16 %v2164, %v2148
        %v2789 = vpack.c.b16 %v2165, %v2149
        %v2790 = vpack.c.b16 %v2166, %v2150
        %v2791 = vpack.c.b16 %v2167, %v2151
        %v2792 = vpack.c.b16 %v2168, %v2152
        %v2793 = vpack.c.b16 %v2169, %v2153
        %v2794 = vpack.c.b16 %v2170, %v2154
        %v2795 = vpack.c.b16 %v2171, %v2155
        %v2796 = vpack.c.b16 %v2172, %v2156
        %v2797 = vpack.c.b16 %v2173, %v2157
        %v2798 = vpack.c.b16 %v2190, %v2174
        %v2799 = vpack.c.b16 %v2191, %v2175
        %v2800 = vpack.c.b16 %v2192, %v2176
        %v2801 = vpack.c.b16 %v2193, %v2177
        %v2802 = vpack.c.b16 %v2194, %v2178
        %v2803 = vpack.c.b16 %v2195, %v2179
        %v2804 = vpack.c.b16 %v2196, %v2180
        %v2805 = vpack.c.b16 %v2197, %v2181
        %v2806 = vpack.c.b16 %v2198, %v2182
        %v2807 = vpack.c.b16 %v2199, %v2183
        %v2808 = vpack.c.b16 %v2200, %v2184
        %v2809 = vpack.c.b16 %v2201, %v2185
        %v2810 = vpack.c.b16 %v2202, %v2186
        %v2811 = vpack.c.b16 %v2203, %v2187
        %v2812 = vpack.c.b16 %v2204, %v2188
        %v2813 = vpack.c.b16 %v2205, %v2189
        %v2814 = vpack.c.b16 %v2222, %v2206
        %v2815 = vpack.c.b16 %v2223, %v2207
        %v2816 = vpack.c.b16 %v2224, %v2208
        %v2817 = vpack.c.b16 %v2225, %v2209
        %v2818 = vpack.c.b16 %v2226, %v2210
        %v2819 = vpack.c.b16 %v2227, %v2211
        %v2820 = vpack.c.b16 %v2228, %v2212
        %v2821 = vpack.c.b16 %v2229, %v2213
        %v2822 = vpack.c.b16 %v2230, %v2214
        %v2823 = vpack.c.b16 %v2231, %v2215
        %v2824 = vpack.c.b16 %v2232, %v2216
        %v2825 = vpack.c.b16 %v2233, %v2217
        %v2826 = vpack.c.b16 %v2234, %v2218
        %v2827 = vpack.c.b16 %v2235, %v2219
        %v2828 = vpack.c.b16 %v2236, %v2220
        %v2829 = vpack.c.b16 %v2237, %v2221
        %v2830 = vpack.c.b16 %v2254, %v2238
        %v2831 = vpack.c.b16 %v2255, %v2239
        %v2832 = vpack.c.b16 %v2256, %v2240
        %v2833 = vpack.c.b16 %v2257, %v2241
        %v2834 = vpack.c.b16 %v2258, %v2242
        %v2835 = vpack.c.b16 %v2259, %v2243
        %v2836 = vpack.c.b16 %v2260, %v2244
        %v2837 = vpack.c.b16 %v2261, %v2245
        %v2838 = vpack.c.b16 %v2262, %v2246
        %v2839 = vpack.c.b16 %v2263, %v2247
        %v2840 = vpack.c.b16 %v2264, %v2248
        %v2841 = vpack.c.b16 %v2265, %v2249
        %v2842 = vpack.c.b16 %v2266, %v2250
        %v2843 = vpack.c.b16 %v2267, %v2251
        %v2844 = vpack.c.b16 %v2268, %v2252
        %v2845 = vpack.c.b16 %v2269, %v2253
        %v2846 = vpack.c.b16 %v2286, %v2270
        %v2847 = vpack.c.b16 %v2287, %v2271
        %v2848 = vpack.c.b16 %v2288, %v2272
        %v2849 = vpack.c.b16 %v2289, %v2273
        %v2850 = vpack.c.b16 %v2290, %v2274
        %v2851 = vpack.c.b16 %v2291, %v2275
        %v2852 = vpack.c.b16 %v2292, %v2276
        %v2853 = vpack.c.b16 %v2293, %v2277
        %v2854 = vpack.c.b16 %v2294, %v2278
        %v2855 = vpack.c.b16 %v2295, %v2279
        %v2856 = vpack.c.b16 %v2296, %v2280
        %v2857 = vpack.c.b16 %v2297, %v2281
        %v2858 = vpack.c.b16 %v2298, %v2282
        %v2859 = vpack.c.b16 %v2299, %v2283
        %v2860 = vpack.c.b16 %v2300, %v2284
        %v2861 = vpack.c.b16 %v2301, %v2285
        %v2862 = vpack.c.b16 %v2318, %v2302
        %v2863 = vpack.c.b16 %v2319, %v2303
        %v2864 = vpack.c.b16 %v2320, %v2304
        %v2865 = vpack.c.b16 %v2321, %v2305
        %v2866 = vpack.c.b16 %v2322, %v2306
        %v2867 = vpack.c.b16 %v2323, %v2307
        %v2868 = vpack.c.b16 %v2324, %v2308
        %v2869 = vpack.c.b16 %v2325, %v2309
        %v2870 = vpack.c.b16 %v2326, %v2310
        %v2871 = vpack.c.b16 %v2327, %v2311
        %v2872 = vpack.c.b16 %v2328, %v2312
        %v2873 = vpack.c.b16 %v2329, %v2313
        %v2874 = vpack.c.b16 %v2330, %v2314
        %v2875 = vpack.c.b16 %v2331, %v2315
        %v2876 = vpack.c.b16 %v2332, %v2316
        %v2877 = vpack.c.b16 %v2333, %v2317
        %v2878 = vpack.c.b16 %v2350, %v2334
        %v2879 = vpack.c.b16 %v2351, %v2335
        %v2880 = vpack.c.b16 %v2352, %v2336
        %v2881 = vpack.c.b16 %v2353, %v2337
        %v2882 = vpack.c.b16 %v2354, %v2338
        %v2883 = vpack.c.b16 %v2355, %v2339
        %v2884 = vpack.c.b16 %v2356, %v2340
        %v2885 = vpack.c.b16 %v2357, %v2341
        %v2886 = vpack.c.b16 %v2358, %v2342
        %v2887 = vpack.c.b16 %v2359, %v2343
        %v2888 = vpack.c.b16 %v2360, %v2344
        %v2889 = vpack.c.b16 %v2361, %v2345
        %v2890 = vpack.c.b16 %v2362, %v2346
        %v2891 = vpack.c.b16 %v2363, %v2347
        %v2892 = vpack.c.b16 %v2364, %v2348
        %v2893 = vpack.c.b16 %v2365, %v2349
        %v2894 = vpack.c.b16 %v2382, %v2366
        %v2895 = vpack.c.b16 %v2383, %v2367
        %v2896 = vpack.c.b16 %v2384, %v2368
        %v2897 = vpack.c.b16 %v2385, %v2369
        %v2898 = vpack.c.b16 %v2386, %v2370
        %v2899 = vpack.c.b16 %v2387, %v2371
        %v2900 = vpack.c.b16 %v2388, %v2372
        %v2901 = vpack.c.b16 %v2389, %v2373
        %v2902 = vpack.c.b16 %v2390, %v2374
        %v2903 = vpack.c.b16 %v2391, %v2375
        %v2904 = vpack.c.b16 %v2392, %v2376
        %v2905 = vpack.c.b16 %v2393, %v2377
        %v2906 = vpack.c.b16 %v2394, %v2378
        %v2907 = vpack.c.b16 %v2395, %v2379
        %v2908 = vpack.c.b16 %v2396, %v2380
        %v2909 = vpack.c.b16 %v2397, %v2381
        %3422 = vmatprep.subr.bf16.mxu0 %v2399
        %3423 = vmatpush1.bf16.msra.mxu0 %v2398
        %3424 = vmatprep.subr.bf16.mxu0 %v2415
        %3425 = vmatpush1.bf16.msra.mxu0 %v2414
        %3426 = vmatprep.subr.bf16.mxu0 %v2431
        %3427 = vmatpush1.bf16.msra.mxu0 %v2430
        %3428 = vmatprep.subr.bf16.mxu0 %v2447
        %3429 = vmatpush1.bf16.msra.mxu0 %v2446
        %3430 = vmatprep.subr.bf16.mxu0 %v2463
        %3431 = vmatpush1.bf16.msra.mxu0 %v2462
        %3432 = vmatprep.subr.bf16.mxu0 %v2479
        %3433 = vmatpush1.bf16.msra.mxu0 %v2478
        %3434 = vmatprep.subr.bf16.mxu0 %v2495
        %3435 = vmatpush1.bf16.msra.mxu0 %v2494
        %3436 = vmatprep.subr.bf16.mxu0 %v2511
        %3437 = vmatpush1.bf16.msra.mxu0 %v2510
        %3438 = vmatprep.subr.bf16.mxu0 %v2527
        %3439 = vmatpush1.bf16.msra.mxu0 %v2526
        %3440 = vmatprep.subr.bf16.mxu0 %v2543
        %3441 = vmatpush1.bf16.msra.mxu0 %v2542
        %3442 = vmatprep.subr.bf16.mxu0 %v2559
        %3443 = vmatpush1.bf16.msra.mxu0 %v2558
        %3444 = vmatprep.subr.bf16.mxu0 %v2575
        %3445 = vmatpush1.bf16.msra.mxu0 %v2574
        %3446 = vmatprep.subr.bf16.mxu0 %v2591
        %3447 = vmatpush1.bf16.msra.mxu0 %v2590
        %3448 = vmatprep.subr.bf16.mxu0 %v2607
        %3449 = vmatpush1.bf16.msra.mxu0 %v2606
        %3450 = vmatprep.subr.bf16.mxu0 %v2623
        %3451 = vmatpush1.bf16.msra.mxu0 %v2622
        %3452 = vmatprep.subr.bf16.mxu0 %v2639
        %3453 = vmatpush1.bf16.msra.mxu0 %v2638
        %3454 = vmatprep.mubr.bf16.mxu0 %v263
        %3455 = vmatmul.mubr.bf16.gmra.mrb[0].mxu0 %v262
        %v3456 = vpop.f32.mrb[0].mxu0
        %v3457 = vadd.f32 %v785, %v3456
        %v3458 = vpop.f32.mrb[0].mxu0
        %v3459 = vadd.f32 %v789, %v3458
        %v3460 = vpop.f32.mrb[0].mxu0
        %v3461 = vpop.f32.mrb[0].mxu0
        %3462 = vdwg.mxu0
        %3463 = vmatprep.subr.bf16.mxu0 %v2655
        %3464 = vmatpush1.bf16.msra.mxu0 %v2654
        %3465 = vmatprep.subr.bf16.mxu0 %v2671
        %3466 = vmatpush1.bf16.msra.mxu0 %v2670
        %3467 = vmatprep.subr.bf16.mxu0 %v2687
        %3468 = vmatpush1.bf16.msra.mxu0 %v2686
        %3469 = vmatprep.subr.bf16.mxu0 %v2703
        %3470 = vmatpush1.bf16.msra.mxu0 %v2702
        %3471 = vmatprep.subr.bf16.mxu0 %v2719
        %3472 = vmatpush1.bf16.msra.mxu0 %v2718
        %3473 = vmatprep.subr.bf16.mxu0 %v2735
        %3474 = vmatpush1.bf16.msra.mxu0 %v2734
        %3475 = vmatprep.subr.bf16.mxu0 %v2751
        %3476 = vmatpush1.bf16.msra.mxu0 %v2750
        %3477 = vmatprep.subr.bf16.mxu0 %v2767
        %3478 = vmatpush1.bf16.msra.mxu0 %v2766
        %3479 = vmatprep.subr.bf16.mxu0 %v2783
        %3480 = vmatpush1.bf16.msra.mxu0 %v2782
        %3481 = vmatprep.subr.bf16.mxu0 %v2799
        %3482 = vmatpush1.bf16.msra.mxu0 %v2798
        %3483 = vmatprep.subr.bf16.mxu0 %v2815
        %3484 = vmatpush1.bf16.msra.mxu0 %v2814
        %3485 = vmatprep.subr.bf16.mxu0 %v2831
        %3486 = vmatpush1.bf16.msra.mxu0 %v2830
        %3487 = vmatprep.subr.bf16.mxu0 %v2847
        %3488 = vmatpush1.bf16.msra.mxu0 %v2846
        %3489 = vmatprep.subr.bf16.mxu0 %v2863
        %3490 = vmatpush1.bf16.msra.mxu0 %v2862
        %3491 = vmatprep.subr.bf16.mxu0 %v2879
        %3492 = vmatpush1.bf16.msra.mxu0 %v2878
        %3493 = vmatprep.subr.bf16.mxu0 %v2895
        %3494 = vmatpush1.bf16.msra.mxu0 %v2894
        %3495 = vmatprep.mubr.bf16.mxu0 %v265
        %3496 = vmatmul.mubr.bf16.gmra.mrb[0].mxu0 %v264
        %v3497 = vpop.f32.mrb[0].mxu0
        %v3498 = vadd.f32 %v3457, %v3497
        %v3499 = vpop.f32.mrb[0].mxu0
        %v3500 = vadd.f32 %v3459, %v3499
        %v3501 = vpop.f32.mrb[0].mxu0
        %v3502 = vpop.f32.mrb[0].mxu0
        %3503 = vdwg.mxu0
        %3504 = vmatprep.subr.bf16.mxu0 %v2401
        %3505 = vmatpush1.bf16.msra.mxu0 %v2400
        %3506 = vmatprep.subr.bf16.mxu0 %v2417
        %3507 = vmatpush1.bf16.msra.mxu0 %v2416
        %3508 = vmatprep.subr.bf16.mxu0 %v2433
        %3509 = vmatpush1.bf16.msra.mxu0 %v2432
        %3510 = vmatprep.subr.bf16.mxu0 %v2449
        %3511 = vmatpush1.bf16.msra.mxu0 %v2448
        %3512 = vmatprep.subr.bf16.mxu0 %v2465
        %3513 = vmatpush1.bf16.msra.mxu0 %v2464
        %3514 = vmatprep.subr.bf16.mxu0 %v2481
        %3515 = vmatpush1.bf16.msra.mxu0 %v2480
        %3516 = vmatprep.subr.bf16.mxu0 %v2497
        %3517 = vmatpush1.bf16.msra.mxu0 %v2496
        %3518 = vmatprep.subr.bf16.mxu0 %v2513
        %3519 = vmatpush1.bf16.msra.mxu0 %v2512
        %3520 = vmatprep.subr.bf16.mxu0 %v2529
        %3521 = vmatpush1.bf16.msra.mxu0 %v2528
        %3522 = vmatprep.subr.bf16.mxu0 %v2545
        %3523 = vmatpush1.bf16.msra.mxu0 %v2544
        %3524 = vmatprep.subr.bf16.mxu0 %v2561
        %3525 = vmatpush1.bf16.msra.mxu0 %v2560
        %3526 = vmatprep.subr.bf16.mxu0 %v2577
        %3527 = vmatpush1.bf16.msra.mxu0 %v2576
        %3528 = vmatprep.subr.bf16.mxu0 %v2593
        %3529 = vmatpush1.bf16.msra.mxu0 %v2592
        %3530 = vmatprep.subr.bf16.mxu0 %v2609
        %3531 = vmatpush1.bf16.msra.mxu0 %v2608
        %3532 = vmatprep.subr.bf16.mxu0 %v2625
        %3533 = vmatpush1.bf16.msra.mxu0 %v2624
        %3534 = vmatprep.subr.bf16.mxu0 %v2641
        %3535 = vmatpush1.bf16.msra.mxu0 %v2640
        %3536 = vmatprep.mubr.bf16.mxu0 %v263
        %3537 = vmatmul.mubr.bf16.gmra.mrb[0].mxu0 %v262
        %v3538 = vpop.f32.mrb[0].mxu0
        %v3539 = vadd.f32 %v793, %v3538
        %v3540 = vpop.f32.mrb[0].mxu0
        %v3541 = vadd.f32 %v797, %v3540
        %v3542 = vpop.f32.mrb[0].mxu0
        %v3543 = vpop.f32.mrb[0].mxu0
        %3544 = vdwg.mxu0
        %3545 = vmatprep.subr.bf16.mxu0 %v2657
        %3546 = vmatpush1.bf16.msra.mxu0 %v2656
        %3547 = vmatprep.subr.bf16.mxu0 %v2673
        %3548 = vmatpush1.bf16.msra.mxu0 %v2672
        %3549 = vmatprep.subr.bf16.mxu0 %v2689
        %3550 = vmatpush1.bf16.msra.mxu0 %v2688
        %3551 = vmatprep.subr.bf16.mxu0 %v2705
        %3552 = vmatpush1.bf16.msra.mxu0 %v2704
        %3553 = vmatprep.subr.bf16.mxu0 %v2721
        %3554 = vmatpush1.bf16.msra.mxu0 %v2720
        %3555 = vmatprep.subr.bf16.mxu0 %v2737
        %3556 = vmatpush1.bf16.msra.mxu0 %v2736
        %3557 = vmatprep.subr.bf16.mxu0 %v2753
        %3558 = vmatpush1.bf16.msra.mxu0 %v2752
        %3559 = vmatprep.subr.bf16.mxu0 %v2769
        %3560 = vmatpush1.bf16.msra.mxu0 %v2768
        %3561 = vmatprep.subr.bf16.mxu0 %v2785
        %3562 = vmatpush1.bf16.msra.mxu0 %v2784
        %3563 = vmatprep.subr.bf16.mxu0 %v2801
        %3564 = vmatpush1.bf16.msra.mxu0 %v2800
        %3565 = vmatprep.subr.bf16.mxu0 %v2817
        %3566 = vmatpush1.bf16.msra.mxu0 %v2816
        %3567 = vmatprep.subr.bf16.mxu0 %v2833
        %3568 = vmatpush1.bf16.msra.mxu0 %v2832
        %3569 = vmatprep.subr.bf16.mxu0 %v2849
        %3570 = vmatpush1.bf16.msra.mxu0 %v2848
        %3571 = vmatprep.subr.bf16.mxu0 %v2865
        %3572 = vmatpush1.bf16.msra.mxu0 %v2864
        %3573 = vmatprep.subr.bf16.mxu0 %v2881
        %3574 = vmatpush1.bf16.msra.mxu0 %v2880
        %3575 = vmatprep.subr.bf16.mxu0 %v2897
        %3576 = vmatpush1.bf16.msra.mxu0 %v2896
        %3577 = vmatprep.mubr.bf16.mxu0 %v265
        %3578 = vmatmul.mubr.bf16.gmra.mrb[0].mxu0 %v264
        %v3579 = vpop.f32.mrb[0].mxu0
        %v3580 = vadd.f32 %v3539, %v3579
        %v3581 = vpop.f32.mrb[0].mxu0
        %v3582 = vadd.f32 %v3541, %v3581
        %v3583 = vpop.f32.mrb[0].mxu0
        %v3584 = vpop.f32.mrb[0].mxu0
        %3585 = vdwg.mxu0
        %3586 = vmatprep.subr.bf16.mxu0 %v2403
        %3587 = vmatpush1.bf16.msra.mxu0 %v2402
        %3588 = vmatprep.subr.bf16.mxu0 %v2419
        %3589 = vmatpush1.bf16.msra.mxu0 %v2418
        %3590 = vmatprep.subr.bf16.mxu0 %v2435
        %3591 = vmatpush1.bf16.msra.mxu0 %v2434
        %3592 = vmatprep.subr.bf16.mxu0 %v2451
        %3593 = vmatpush1.bf16.msra.mxu0 %v2450
        %3594 = vmatprep.subr.bf16.mxu0 %v2467
        %3595 = vmatpush1.bf16.msra.mxu0 %v2466
        %3596 = vmatprep.subr.bf16.mxu0 %v2483
        %3597 = vmatpush1.bf16.msra.mxu0 %v2482
        %3598 = vmatprep.subr.bf16.mxu0 %v2499
        %3599 = vmatpush1.bf16.msra.mxu0 %v2498
        %3600 = vmatprep.subr.bf16.mxu0 %v2515
        %3601 = vmatpush1.bf16.msra.mxu0 %v2514
        %3602 = vmatprep.subr.bf16.mxu0 %v2531
        %3603 = vmatpush1.bf16.msra.mxu0 %v2530
        %3604 = vmatprep.subr.bf16.mxu0 %v2547
        %3605 = vmatpush1.bf16.msra.mxu0 %v2546
        %3606 = vmatprep.subr.bf16.mxu0 %v2563
        %3607 = vmatpush1.bf16.msra.mxu0 %v2562
        %3608 = vmatprep.subr.bf16.mxu0 %v2579
        %3609 = vmatpush1.bf16.msra.mxu0 %v2578
        %3610 = vmatprep.subr.bf16.mxu0 %v2595
        %3611 = vmatpush1.bf16.msra.mxu0 %v2594
        %3612 = vmatprep.subr.bf16.mxu0 %v2611
        %3613 = vmatpush1.bf16.msra.mxu0 %v2610
        %3614 = vmatprep.subr.bf16.mxu0 %v2627
        %3615 = vmatpush1.bf16.msra.mxu0 %v2626
        %3616 = vmatprep.subr.bf16.mxu0 %v2643
        %3617 = vmatpush1.bf16.msra.mxu0 %v2642
        %3618 = vmatprep.mubr.bf16.mxu0 %v263
        %3619 = vmatmul.mubr.bf16.gmra.mrb[0].mxu0 %v262
        %v3620 = vpop.f32.mrb[0].mxu0
        %v3621 = vadd.f32 %v801, %v3620
        %v3622 = vpop.f32.mrb[0].mxu0
        %v3623 = vadd.f32 %v805, %v3622
        %v3624 = vpop.f32.mrb[0].mxu0
        %v3625 = vpop.f32.mrb[0].mxu0
        %3626 = vdwg.mxu0
        %3627 = vmatprep.subr.bf16.mxu0 %v2659
        %3628 = vmatpush1.bf16.msra.mxu0 %v2658
        %3629 = vmatprep.subr.bf16.mxu0 %v2675
        %3630 = vmatpush1.bf16.msra.mxu0 %v2674
        %3631 = vmatprep.subr.bf16.mxu0 %v2691
        %3632 = vmatpush1.bf16.msra.mxu0 %v2690
        %3633 = vmatprep.subr.bf16.mxu0 %v2707
        %3634 = vmatpush1.bf16.msra.mxu0 %v2706
        %3635 = vmatprep.subr.bf16.mxu0 %v2723
        %3636 = vmatpush1.bf16.msra.mxu0 %v2722
        %3637 = vmatprep.subr.bf16.mxu0 %v2739
        %3638 = vmatpush1.bf16.msra.mxu0 %v2738
        %3639 = vmatprep.subr.bf16.mxu0 %v2755
        %3640 = vmatpush1.bf16.msra.mxu0 %v2754
        %3641 = vmatprep.subr.bf16.mxu0 %v2771
        %3642 = vmatpush1.bf16.msra.mxu0 %v2770
        %3643 = vmatprep.subr.bf16.mxu0 %v2787
        %3644 = vmatpush1.bf16.msra.mxu0 %v2786
        %3645 = vmatprep.subr.bf16.mxu0 %v2803
        %3646 = vmatpush1.bf16.msra.mxu0 %v2802
        %3647 = vmatprep.subr.bf16.mxu0 %v2819
        %3648 = vmatpush1.bf16.msra.mxu0 %v2818
        %3649 = vmatprep.subr.bf16.mxu0 %v2835
        %3650 = vmatpush1.bf16.msra.mxu0 %v2834
        %3651 = vmatprep.subr.bf16.mxu0 %v2851
        %3652 = vmatpush1.bf16.msra.mxu0 %v2850
        %3653 = vmatprep.subr.bf16.mxu0 %v2867
        %3654 = vmatpush1.bf16.msra.mxu0 %v2866
        %3655 = vmatprep.subr.bf16.mxu0 %v2883
        %3656 = vmatpush1.bf16.msra.mxu0 %v2882
        %3657 = vmatprep.subr.bf16.mxu0 %v2899
        %3658 = vmatpush1.bf16.msra.mxu0 %v2898
        %3659 = vmatprep.mubr.bf16.mxu0 %v265
        %3660 = vmatmul.mubr.bf16.gmra.mrb[0].mxu0 %v264
        %v3661 = vpop.f32.mrb[0].mxu0
        %v3662 = vadd.f32 %v3621, %v3661
        %v3663 = vpop.f32.mrb[0].mxu0
        %v3664 = vadd.f32 %v3623, %v3663
        %v3665 = vpop.f32.mrb[0].mxu0
        %v3666 = vpop.f32.mrb[0].mxu0
        %3667 = vdwg.mxu0
        %3668 = vmatprep.subr.bf16.mxu0 %v2405
        %3669 = vmatpush1.bf16.msra.mxu0 %v2404
        %3670 = vmatprep.subr.bf16.mxu0 %v2421
        %3671 = vmatpush1.bf16.msra.mxu0 %v2420
        %3672 = vmatprep.subr.bf16.mxu0 %v2437
        %3673 = vmatpush1.bf16.msra.mxu0 %v2436
        %3674 = vmatprep.subr.bf16.mxu0 %v2453
        %3675 = vmatpush1.bf16.msra.mxu0 %v2452
        %3676 = vmatprep.subr.bf16.mxu0 %v2469
        %3677 = vmatpush1.bf16.msra.mxu0 %v2468
        %3678 = vmatprep.subr.bf16.mxu0 %v2485
        %3679 = vmatpush1.bf16.msra.mxu0 %v2484
        %3680 = vmatprep.subr.bf16.mxu0 %v2501
        %3681 = vmatpush1.bf16.msra.mxu0 %v2500
        %3682 = vmatprep.subr.bf16.mxu0 %v2517
        %3683 = vmatpush1.bf16.msra.mxu0 %v2516
        %3684 = vmatprep.subr.bf16.mxu0 %v2533
        %3685 = vmatpush1.bf16.msra.mxu0 %v2532
        %3686 = vmatprep.subr.bf16.mxu0 %v2549
        %3687 = vmatpush1.bf16.msra.mxu0 %v2548
        %3688 = vmatprep.subr.bf16.mxu0 %v2565
        %3689 = vmatpush1.bf16.msra.mxu0 %v2564
        %3690 = vmatprep.subr.bf16.mxu0 %v2581
        %3691 = vmatpush1.bf16.msra.mxu0 %v2580
        %3692 = vmatprep.subr.bf16.mxu0 %v2597
        %3693 = vmatpush1.bf16.msra.mxu0 %v2596
        %3694 = vmatprep.subr.bf16.mxu0 %v2613
        %3695 = vmatpush1.bf16.msra.mxu0 %v2612
        %3696 = vmatprep.subr.bf16.mxu0 %v2629
        %3697 = vmatpush1.bf16.msra.mxu0 %v2628
        %3698 = vmatprep.subr.bf16.mxu0 %v2645
        %3699 = vmatpush1.bf16.msra.mxu0 %v2644
        %3700 = vmatprep.mubr.bf16.mxu0 %v263
        %3701 = vmatmul.mubr.bf16.gmra.mrb[0].mxu0 %v262
        %v3702 = vpop.f32.mrb[0].mxu0
        %v3703 = vadd.f32 %v809, %v3702
        %v3704 = vpop.f32.mrb[0].mxu0
        %v3705 = vadd.f32 %v813, %v3704
        %v3706 = vpop.f32.mrb[0].mxu0
        %v3707 = vpop.f32.mrb[0].mxu0
        %3708 = vdwg.mxu0
        %3709 = vmatprep.subr.bf16.mxu0 %v2661
        %3710 = vmatpush1.bf16.msra.mxu0 %v2660
        %3711 = vmatprep.subr.bf16.mxu0 %v2677
        %3712 = vmatpush1.bf16.msra.mxu0 %v2676
        %3713 = vmatprep.subr.bf16.mxu0 %v2693
        %3714 = vmatpush1.bf16.msra.mxu0 %v2692
        %3715 = vmatprep.subr.bf16.mxu0 %v2709
        %3716 = vmatpush1.bf16.msra.mxu0 %v2708
        %3717 = vmatprep.subr.bf16.mxu0 %v2725
        %3718 = vmatpush1.bf16.msra.mxu0 %v2724
        %3719 = vmatprep.subr.bf16.mxu0 %v2741
        %3720 = vmatpush1.bf16.msra.mxu0 %v2740
        %3721 = vmatprep.subr.bf16.mxu0 %v2757
        %3722 = vmatpush1.bf16.msra.mxu0 %v2756
        %3723 = vmatprep.subr.bf16.mxu0 %v2773
        %3724 = vmatpush1.bf16.msra.mxu0 %v2772
        %3725 = vmatprep.subr.bf16.mxu0 %v2789
        %3726 = vmatpush1.bf16.msra.mxu0 %v2788
        %3727 = vmatprep.subr.bf16.mxu0 %v2805
        %3728 = vmatpush1.bf16.msra.mxu0 %v2804
        %3729 = vmatprep.subr.bf16.mxu0 %v2821
        %3730 = vmatpush1.bf16.msra.mxu0 %v2820
        %3731 = vmatprep.subr.bf16.mxu0 %v2837
        %3732 = vmatpush1.bf16.msra.mxu0 %v2836
        %3733 = vmatprep.subr.bf16.mxu0 %v2853
        %3734 = vmatpush1.bf16.msra.mxu0 %v2852
        %3735 = vmatprep.subr.bf16.mxu0 %v2869
        %3736 = vmatpush1.bf16.msra.mxu0 %v2868
        %3737 = vmatprep.subr.bf16.mxu0 %v2885
        %3738 = vmatpush1.bf16.msra.mxu0 %v2884
        %3739 = vmatprep.subr.bf16.mxu0 %v2901
        %3740 = vmatpush1.bf16.msra.mxu0 %v2900
        %3741 = vmatprep.mubr.bf16.mxu0 %v265
        %3742 = vmatmul.mubr.bf16.gmra.mrb[0].mxu0 %v264
        %v3743 = vpop.f32.mrb[0].mxu0
        %v3744 = vadd.f32 %v3703, %v3743
        %v3745 = vpop.f32.mrb[0].mxu0
        %v3746 = vadd.f32 %v3705, %v3745
        %v3747 = vpop.f32.mrb[0].mxu0
        %v3748 = vpop.f32.mrb[0].mxu0
        %3749 = vdwg.mxu0
        %3750 = vmatprep.subr.bf16.mxu0 %v2407
        %3751 = vmatpush1.bf16.msra.mxu0 %v2406
        %3752 = vmatprep.subr.bf16.mxu0 %v2423
        %3753 = vmatpush1.bf16.msra.mxu0 %v2422
        %3754 = vmatprep.subr.bf16.mxu0 %v2439
        %3755 = vmatpush1.bf16.msra.mxu0 %v2438
        %3756 = vmatprep.subr.bf16.mxu0 %v2455
        %3757 = vmatpush1.bf16.msra.mxu0 %v2454
        %3758 = vmatprep.subr.bf16.mxu0 %v2471
        %3759 = vmatpush1.bf16.msra.mxu0 %v2470
        %3760 = vmatprep.subr.bf16.mxu0 %v2487
        %3761 = vmatpush1.bf16.msra.mxu0 %v2486
        %3762 = vmatprep.subr.bf16.mxu0 %v2503
        %3763 = vmatpush1.bf16.msra.mxu0 %v2502
        %3764 = vmatprep.subr.bf16.mxu0 %v2519
        %3765 = vmatpush1.bf16.msra.mxu0 %v2518
        %3766 = vmatprep.subr.bf16.mxu0 %v2535
        %3767 = vmatpush1.bf16.msra.mxu0 %v2534
        %3768 = vmatprep.subr.bf16.mxu0 %v2551
        %3769 = vmatpush1.bf16.msra.mxu0 %v2550
        %3770 = vmatprep.subr.bf16.mxu0 %v2567
        %3771 = vmatpush1.bf16.msra.mxu0 %v2566
        %3772 = vmatprep.subr.bf16.mxu0 %v2583
        %3773 = vmatpush1.bf16.msra.mxu0 %v2582
        %3774 = vmatprep.subr.bf16.mxu0 %v2599
        %3775 = vmatpush1.bf16.msra.mxu0 %v2598
        %3776 = vmatprep.subr.bf16.mxu0 %v2615
        %3777 = vmatpush1.bf16.msra.mxu0 %v2614
        %3778 = vmatprep.subr.bf16.mxu0 %v2631
        %3779 = vmatpush1.bf16.msra.mxu0 %v2630
        %3780 = vmatprep.subr.bf16.mxu0 %v2647
        %3781 = vmatpush1.bf16.msra.mxu0 %v2646
        %3782 = vmatprep.mubr.bf16.mxu0 %v263
        %3783 = vmatmul.mubr.bf16.gmra.mrb[0].mxu0 %v262
        %v3784 = vpop.f32.mrb[0].mxu0
        %v3785 = vadd.f32 %v817, %v3784
        %v3786 = vpop.f32.mrb[0].mxu0
        %v3787 = vadd.f32 %v821, %v3786
        %v3788 = vpop.f32.mrb[0].mxu0
        %v3789 = vpop.f32.mrb[0].mxu0
        %3790 = vdwg.mxu0
        %3791 = vmatprep.subr.bf16.mxu0 %v2663
        %3792 = vmatpush1.bf16.msra.mxu0 %v2662
        %3793 = vmatprep.subr.bf16.mxu0 %v2679
        %3794 = vmatpush1.bf16.msra.mxu0 %v2678
        %3795 = vmatprep.subr.bf16.mxu0 %v2695
        %3796 = vmatpush1.bf16.msra.mxu0 %v2694
        %3797 = vmatprep.subr.bf16.mxu0 %v2711
        %3798 = vmatpush1.bf16.msra.mxu0 %v2710
        %3799 = vmatprep.subr.bf16.mxu0 %v2727
        %3800 = vmatpush1.bf16.msra.mxu0 %v2726
        %3801 = vmatprep.subr.bf16.mxu0 %v2743
        %3802 = vmatpush1.bf16.msra.mxu0 %v2742
        %3803 = vmatprep.subr.bf16.mxu0 %v2759
        %3804 = vmatpush1.bf16.msra.mxu0 %v2758
        %3805 = vmatprep.subr.bf16.mxu0 %v2775
        %3806 = vmatpush1.bf16.msra.mxu0 %v2774
        %3807 = vmatprep.subr.bf16.mxu0 %v2791
        %3808 = vmatpush1.bf16.msra.mxu0 %v2790
        %3809 = vmatprep.subr.bf16.mxu0 %v2807
        %3810 = vmatpush1.bf16.msra.mxu0 %v2806
        %3811 = vmatprep.subr.bf16.mxu0 %v2823
        %3812 = vmatpush1.bf16.msra.mxu0 %v2822
        %3813 = vmatprep.subr.bf16.mxu0 %v2839
        %3814 = vmatpush1.bf16.msra.mxu0 %v2838
        %3815 = vmatprep.subr.bf16.mxu0 %v2855
        %3816 = vmatpush1.bf16.msra.mxu0 %v2854
        %3817 = vmatprep.subr.bf16.mxu0 %v2871
        %3818 = vmatpush1.bf16.msra.mxu0 %v2870
        %3819 = vmatprep.subr.bf16.mxu0 %v2887
        %3820 = vmatpush1.bf16.msra.mxu0 %v2886
        %3821 = vmatprep.subr.bf16.mxu0 %v2903
        %3822 = vmatpush1.bf16.msra.mxu0 %v2902
        %3823 = vmatprep.mubr.bf16.mxu0 %v265
        %3824 = vmatmul.mubr.bf16.gmra.mrb[0].mxu0 %v264
        %v3825 = vpop.f32.mrb[0].mxu0
        %v3826 = vadd.f32 %v3785, %v3825
        %v3827 = vpop.f32.mrb[0].mxu0
        %v3828 = vadd.f32 %v3787, %v3827
        %v3829 = vpop.f32.mrb[0].mxu0
        %v3830 = vpop.f32.mrb[0].mxu0
        %3831 = vdwg.mxu0
        %3832 = vmatprep.subr.bf16.mxu0 %v2409
        %3833 = vmatpush1.bf16.msra.mxu0 %v2408
        %3834 = vmatprep.subr.bf16.mxu0 %v2425
        %3835 = vmatpush1.bf16.msra.mxu0 %v2424
        %3836 = vmatprep.subr.bf16.mxu0 %v2441
        %3837 = vmatpush1.bf16.msra.mxu0 %v2440
        %3838 = vmatprep.subr.bf16.mxu0 %v2457
        %3839 = vmatpush1.bf16.msra.mxu0 %v2456
        %3840 = vmatprep.subr.bf16.mxu0 %v2473
        %3841 = vmatpush1.bf16.msra.mxu0 %v2472
        %3842 = vmatprep.subr.bf16.mxu0 %v2489
        %3843 = vmatpush1.bf16.msra.mxu0 %v2488
        %3844 = vmatprep.subr.bf16.mxu0 %v2505
        %3845 = vmatpush1.bf16.msra.mxu0 %v2504
        %3846 = vmatprep.subr.bf16.mxu0 %v2521
        %3847 = vmatpush1.bf16.msra.mxu0 %v2520
        %3848 = vmatprep.subr.bf16.mxu0 %v2537
        %3849 = vmatpush1.bf16.msra.mxu0 %v2536
        %3850 = vmatprep.subr.bf16.mxu0 %v2553
        %3851 = vmatpush1.bf16.msra.mxu0 %v2552
        %3852 = vmatprep.subr.bf16.mxu0 %v2569
        %3853 = vmatpush1.bf16.msra.mxu0 %v2568
        %3854 = vmatprep.subr.bf16.mxu0 %v2585
        %3855 = vmatpush1.bf16.msra.mxu0 %v2584
        %3856 = vmatprep.subr.bf16.mxu0 %v2601
        %3857 = vmatpush1.bf16.msra.mxu0 %v2600
        %3858 = vmatprep.subr.bf16.mxu0 %v2617
        %3859 = vmatpush1.bf16.msra.mxu0 %v2616
        %3860 = vmatprep.subr.bf16.mxu0 %v2633
        %3861 = vmatpush1.bf16.msra.mxu0 %v2632
        %3862 = vmatprep.subr.bf16.mxu0 %v2649
        %3863 = vmatpush1.bf16.msra.mxu0 %v2648
        %3864 = vmatprep.mubr.bf16.mxu0 %v263
        %3865 = vmatmul.mubr.bf16.gmra.mrb[0].mxu0 %v262
        %v3866 = vpop.f32.mrb[0].mxu0
        %v3867 = vadd.f32 %v825, %v3866
        %v3868 = vpop.f32.mrb[0].mxu0
        %v3869 = vadd.f32 %v829, %v3868
        %v3870 = vpop.f32.mrb[0].mxu0
        %v3871 = vpop.f32.mrb[0].mxu0
        %3872 = vdwg.mxu0
        %3873 = vmatprep.subr.bf16.mxu0 %v2665
        %3874 = vmatpush1.bf16.msra.mxu0 %v2664
        %3875 = vmatprep.subr.bf16.mxu0 %v2681
        %3876 = vmatpush1.bf16.msra.mxu0 %v2680
        %3877 = vmatprep.subr.bf16.mxu0 %v2697
        %3878 = vmatpush1.bf16.msra.mxu0 %v2696
        %3879 = vmatprep.subr.bf16.mxu0 %v2713
        %3880 = vmatpush1.bf16.msra.mxu0 %v2712
        %3881 = vmatprep.subr.bf16.mxu0 %v2729
        %3882 = vmatpush1.bf16.msra.mxu0 %v2728
        %3883 = vmatprep.subr.bf16.mxu0 %v2745
        %3884 = vmatpush1.bf16.msra.mxu0 %v2744
        %3885 = vmatprep.subr.bf16.mxu0 %v2761
        %3886 = vmatpush1.bf16.msra.mxu0 %v2760
        %3887 = vmatprep.subr.bf16.mxu0 %v2777
        %3888 = vmatpush1.bf16.msra.mxu0 %v2776
        %3889 = vmatprep.subr.bf16.mxu0 %v2793
        %3890 = vmatpush1.bf16.msra.mxu0 %v2792
        %3891 = vmatprep.subr.bf16.mxu0 %v2809
        %3892 = vmatpush1.bf16.msra.mxu0 %v2808
        %3893 = vmatprep.subr.bf16.mxu0 %v2825
        %3894 = vmatpush1.bf16.msra.mxu0 %v2824
        %3895 = vmatprep.subr.bf16.mxu0 %v2841
        %3896 = vmatpush1.bf16.msra.mxu0 %v2840
        %3897 = vmatprep.subr.bf16.mxu0 %v2857
        %3898 = vmatpush1.bf16.msra.mxu0 %v2856
        %3899 = vmatprep.subr.bf16.mxu0 %v2873
        %3900 = vmatpush1.bf16.msra.mxu0 %v2872
        %3901 = vmatprep.subr.bf16.mxu0 %v2889
        %3902 = vmatpush1.bf16.msra.mxu0 %v2888
        %3903 = vmatprep.subr.bf16.mxu0 %v2905
        %3904 = vmatpush1.bf16.msra.mxu0 %v2904
        %3905 = vmatprep.mubr.bf16.mxu0 %v265
        %3906 = vmatmul.mubr.bf16.gmra.mrb[0].mxu0 %v264
        %v3907 = vpop.f32.mrb[0].mxu0
        %v3908 = vadd.f32 %v3867, %v3907
        %v3909 = vpop.f32.mrb[0].mxu0
        %v3910 = vadd.f32 %v3869, %v3909
        %v3911 = vpop.f32.mrb[0].mxu0
        %v3912 = vpop.f32.mrb[0].mxu0
        %3913 = vdwg.mxu0
        %3914 = vmatprep.subr.bf16.mxu0 %v2411
        %3915 = vmatpush1.bf16.msra.mxu0 %v2410
        %3916 = vmatprep.subr.bf16.mxu0 %v2427
        %3917 = vmatpush1.bf16.msra.mxu0 %v2426
        %3918 = vmatprep.subr.bf16.mxu0 %v2443
        %3919 = vmatpush1.bf16.msra.mxu0 %v2442
        %3920 = vmatprep.subr.bf16.mxu0 %v2459
        %3921 = vmatpush1.bf16.msra.mxu0 %v2458
        %3922 = vmatprep.subr.bf16.mxu0 %v2475
        %3923 = vmatpush1.bf16.msra.mxu0 %v2474
        %3924 = vmatprep.subr.bf16.mxu0 %v2491
        %3925 = vmatpush1.bf16.msra.mxu0 %v2490
        %3926 = vmatprep.subr.bf16.mxu0 %v2507
        %3927 = vmatpush1.bf16.msra.mxu0 %v2506
        %3928 = vmatprep.subr.bf16.mxu0 %v2523
        %3929 = vmatpush1.bf16.msra.mxu0 %v2522
        %3930 = vmatprep.subr.bf16.mxu0 %v2539
        %3931 = vmatpush1.bf16.msra.mxu0 %v2538
        %3932 = vmatprep.subr.bf16.mxu0 %v2555
        %3933 = vmatpush1.bf16.msra.mxu0 %v2554
        %3934 = vmatprep.subr.bf16.mxu0 %v2571
        %3935 = vmatpush1.bf16.msra.mxu0 %v2570
        %3936 = vmatprep.subr.bf16.mxu0 %v2587
        %3937 = vmatpush1.bf16.msra.mxu0 %v2586
        %3938 = vmatprep.subr.bf16.mxu0 %v2603
        %3939 = vmatpush1.bf16.msra.mxu0 %v2602
        %3940 = vmatprep.subr.bf16.mxu0 %v2619
        %3941 = vmatpush1.bf16.msra.mxu0 %v2618
        %3942 = vmatprep.subr.bf16.mxu0 %v2635
        %3943 = vmatpush1.bf16.msra.mxu0 %v2634
        %3944 = vmatprep.subr.bf16.mxu0 %v2651
        %3945 = vmatpush1.bf16.msra.mxu0 %v2650
        %3946 = vmatprep.mubr.bf16.mxu0 %v263
        %3947 = vmatmul.mubr.bf16.gmra.mrb[0].mxu0 %v262
        %v3948 = vpop.f32.mrb[0].mxu0
        %v3949 = vadd.f32 %v833, %v3948
        %v3950 = vpop.f32.mrb[0].mxu0
        %v3951 = vadd.f32 %v837, %v3950
        %v3952 = vpop.f32.mrb[0].mxu0
        %v3953 = vpop.f32.mrb[0].mxu0
        %3954 = vdwg.mxu0
        %3955 = vmatprep.subr.bf16.mxu0 %v2667
        %3956 = vmatpush1.bf16.msra.mxu0 %v2666
        %3957 = vmatprep.subr.bf16.mxu0 %v2683
        %3958 = vmatpush1.bf16.msra.mxu0 %v2682
        %3959 = vmatprep.subr.bf16.mxu0 %v2699
        %3960 = vmatpush1.bf16.msra.mxu0 %v2698
        %3961 = vmatprep.subr.bf16.mxu0 %v2715
        %3962 = vmatpush1.bf16.msra.mxu0 %v2714
        %3963 = vmatprep.subr.bf16.mxu0 %v2731
        %3964 = vmatpush1.bf16.msra.mxu0 %v2730
        %3965 = vmatprep.subr.bf16.mxu0 %v2747
        %3966 = vmatpush1.bf16.msra.mxu0 %v2746
        %3967 = vmatprep.subr.bf16.mxu0 %v2763
        %3968 = vmatpush1.bf16.msra.mxu0 %v2762
        %3969 = vmatprep.subr.bf16.mxu0 %v2779
        %3970 = vmatpush1.bf16.msra.mxu0 %v2778
        %3971 = vmatprep.subr.bf16.mxu0 %v2795
        %3972 = vmatpush1.bf16.msra.mxu0 %v2794
        %3973 = vmatprep.subr.bf16.mxu0 %v2811
        %3974 = vmatpush1.bf16.msra.mxu0 %v2810
        %3975 = vmatprep.subr.bf16.mxu0 %v2827
        %3976 = vmatpush1.bf16.msra.mxu0 %v2826
        %3977 = vmatprep.subr.bf16.mxu0 %v2843
        %3978 = vmatpush1.bf16.msra.mxu0 %v2842
        %3979 = vmatprep.subr.bf16.mxu0 %v2859
        %3980 = vmatpush1.bf16.msra.mxu0 %v2858
        %3981 = vmatprep.subr.bf16.mxu0 %v2875
        %3982 = vmatpush1.bf16.msra.mxu0 %v2874
        %3983 = vmatprep.subr.bf16.mxu0 %v2891
        %3984 = vmatpush1.bf16.msra.mxu0 %v2890
        %3985 = vmatprep.subr.bf16.mxu0 %v2907
        %3986 = vmatpush1.bf16.msra.mxu0 %v2906
        %3987 = vmatprep.mubr.bf16.mxu0 %v265
        %3988 = vmatmul.mubr.bf16.gmra.mrb[0].mxu0 %v264
        %v3989 = vpop.f32.mrb[0].mxu0
        %v3990 = vadd.f32 %v3949, %v3989
        %v3991 = vpop.f32.mrb[0].mxu0
        %v3992 = vadd.f32 %v3951, %v3991
        %v3993 = vpop.f32.mrb[0].mxu0
        %v3994 = vpop.f32.mrb[0].mxu0
        %3995 = vdwg.mxu0
        %3996 = vmatprep.subr.bf16.mxu0 %v2413
        %3997 = vmatpush1.bf16.msra.mxu0 %v2412
        %3998 = vmatprep.subr.bf16.mxu0 %v2429
        %3999 = vmatpush1.bf16.msra.mxu0 %v2428
        %4000 = vmatprep.subr.bf16.mxu0 %v2445
        %4001 = vmatpush1.bf16.msra.mxu0 %v2444
        %4002 = vmatprep.subr.bf16.mxu0 %v2461
        %4003 = vmatpush1.bf16.msra.mxu0 %v2460
        %4004 = vmatprep.subr.bf16.mxu0 %v2477
        %4005 = vmatpush1.bf16.msra.mxu0 %v2476
        %4006 = vmatprep.subr.bf16.mxu0 %v2493
        %4007 = vmatpush1.bf16.msra.mxu0 %v2492
        %4008 = vmatprep.subr.bf16.mxu0 %v2509
        %4009 = vmatpush1.bf16.msra.mxu0 %v2508
        %4010 = vmatprep.subr.bf16.mxu0 %v2525
        %4011 = vmatpush1.bf16.msra.mxu0 %v2524
        %4012 = vmatprep.subr.bf16.mxu0 %v2541
        %4013 = vmatpush1.bf16.msra.mxu0 %v2540
        %4014 = vmatprep.subr.bf16.mxu0 %v2557
        %4015 = vmatpush1.bf16.msra.mxu0 %v2556
        %4016 = vmatprep.subr.bf16.mxu0 %v2573
        %4017 = vmatpush1.bf16.msra.mxu0 %v2572
        %4018 = vmatprep.subr.bf16.mxu0 %v2589
        %4019 = vmatpush1.bf16.msra.mxu0 %v2588
        %4020 = vmatprep.subr.bf16.mxu0 %v2605
        %4021 = vmatpush1.bf16.msra.mxu0 %v2604
        %4022 = vmatprep.subr.bf16.mxu0 %v2621
        %4023 = vmatpush1.bf16.msra.mxu0 %v2620
        %4024 = vmatprep.subr.bf16.mxu0 %v2637
        %4025 = vmatpush1.bf16.msra.mxu0 %v2636
        %4026 = vmatprep.subr.bf16.mxu0 %v2653
        %4027 = vmatpush1.bf16.msra.mxu0 %v2652
        %4028 = vmatprep.mubr.bf16.mxu0 %v263
        %4029 = vmatmul.mubr.bf16.gmra.mrb[0].mxu0 %v262
        %v4030 = vpop.f32.mrb[0].mxu0
        %v4031 = vadd.f32 %v841, %v4030
        %v4032 = vpop.f32.mrb[0].mxu0
        %v4033 = vadd.f32 %v845, %v4032
        %v4034 = vpop.f32.mrb[0].mxu0
        %v4035 = vpop.f32.mrb[0].mxu0
        %4036 = vdwg.mxu0
        %4037 = vmatprep.subr.bf16.mxu0 %v2669
        %4038 = vmatpush1.bf16.msra.mxu0 %v2668
        %4039 = vmatprep.subr.bf16.mxu0 %v2685
        %4040 = vmatpush1.bf16.msra.mxu0 %v2684
        %4041 = vmatprep.subr.bf16.mxu0 %v2701
        %4042 = vmatpush1.bf16.msra.mxu0 %v2700
        %4043 = vmatprep.subr.bf16.mxu0 %v2717
        %4044 = vmatpush1.bf16.msra.mxu0 %v2716
        %4045 = vmatprep.subr.bf16.mxu0 %v2733
        %4046 = vmatpush1.bf16.msra.mxu0 %v2732
        %4047 = vmatprep.subr.bf16.mxu0 %v2749
        %4048 = vmatpush1.bf16.msra.mxu0 %v2748
        %4049 = vmatprep.subr.bf16.mxu0 %v2765
        %4050 = vmatpush1.bf16.msra.mxu0 %v2764
        %4051 = vmatprep.subr.bf16.mxu0 %v2781
        %4052 = vmatpush1.bf16.msra.mxu0 %v2780
        %4053 = vmatprep.subr.bf16.mxu0 %v2797
        %4054 = vmatpush1.bf16.msra.mxu0 %v2796
        %4055 = vmatprep.subr.bf16.mxu0 %v2813
        %4056 = vmatpush1.bf16.msra.mxu0 %v2812
        %4057 = vmatprep.subr.bf16.mxu0 %v2829
        %4058 = vmatpush1.bf16.msra.mxu0 %v2828
        %4059 = vmatprep.subr.bf16.mxu0 %v2845
        %4060 = vmatpush1.bf16.msra.mxu0 %v2844
        %4061 = vmatprep.subr.bf16.mxu0 %v2861
        %4062 = vmatpush1.bf16.msra.mxu0 %v2860
        %4063 = vmatprep.subr.bf16.mxu0 %v2877
        %4064 = vmatpush1.bf16.msra.mxu0 %v2876
        %4065 = vmatprep.subr.bf16.mxu0 %v2893
        %4066 = vmatpush1.bf16.msra.mxu0 %v2892
        %4067 = vmatprep.subr.bf16.mxu0 %v2909
        %4068 = vmatpush1.bf16.msra.mxu0 %v2908
        %4069 = vmatprep.mubr.bf16.mxu0 %v265
        %4070 = vmatmul.mubr.bf16.gmra.mrb[0].mxu0 %v264
        %v4071 = vpop.f32.mrb[0].mxu0
        %v4072 = vadd.f32 %v4031, %v4071
        %v4073 = vpop.f32.mrb[0].mxu0
        %v4074 = vadd.f32 %v4033, %v4073
        %v4075 = vpop.f32.mrb[0].mxu0
        %v4076 = vpop.f32.mrb[0].mxu0
        %4077 = vdwg.mxu0
        %v4078 = vmax.f32 %v3498, 0.0
        %v4079 = vmax.f32 %v3500, 0.0
        %v4080 = vmax.f32 %v3580, 0.0
        %v4081 = vmax.f32 %v3582, 0.0
        %v4082 = vmax.f32 %v3662, 0.0
        %v4083 = vmax.f32 %v3664, 0.0
        %v4084 = vmax.f32 %v3744, 0.0
        %v4085 = vmax.f32 %v3746, 0.0
        %v4086 = vmax.f32 %v3826, 0.0
        %v4087 = vmax.f32 %v3828, 0.0
        %v4088 = vmax.f32 %v3908, 0.0
        %v4089 = vmax.f32 %v3910, 0.0
        %v4090 = vmax.f32 %v3990, 0.0
        %v4091 = vmax.f32 %v3992, 0.0
        %v4092 = vmax.f32 %v4072, 0.0
        %v4093 = vmax.f32 %v4074, 0.0
        %v4110 = vcombine.low %v4078, %v4079
        %v4111 = vcombine.low %v4080, %v4081
        %v4113 = vunpack.c.l.s4 1983009808
        %v4114 = vunpack.c.0.s8 %v4113
        %v4115 = vlaneseq
        %v4116 = vshrl.u32 %v4115, 7
        %v4117 = vsub.s32 %v4114, %v4116
        %v4118 = vrot.slane %v4110, %v4117
        %v4120 = vunpack.c.l.s4 1983009808
        %v4121 = vunpack.c.0.s8 %v4120
        %v4122 = vlaneseq
        %v4123 = vshrl.u32 %v4122, 7
        %v4124 = vsub.s32 %v4121, %v4123
        %v4125 = vrot.slane %v4111, %v4124
        %v4126 = vcombine.low %v4118, %v4125
        %v4127 = vcombine.low %v4082, %v4083
        %v4128 = vcombine.low %v4084, %v4085
        %v4130 = vunpack.c.l.s4 1983009808
        %v4131 = vunpack.c.0.s8 %v4130
        %v4132 = vlaneseq
        %v4133 = vshrl.u32 %v4132, 7
        %v4134 = vsub.s32 %v4131, %v4133
        %v4135 = vrot.slane %v4127, %v4134
        %v4137 = vunpack.c.l.s4 1983009808
        %v4138 = vunpack.c.0.s8 %v4137
        %v4139 = vlaneseq
        %v4140 = vshrl.u32 %v4139, 7
        %v4141 = vsub.s32 %v4138, %v4140
        %v4142 = vrot.slane %v4128, %v4141
        %v4143 = vcombine.low %v4135, %v4142
        %v4144 = vcombine.low %v4086, %v4087
        %v4145 = vcombine.low %v4088, %v4089
        %v4147 = vunpack.c.l.s4 1983009808
        %v4148 = vunpack.c.0.s8 %v4147
        %v4149 = vlaneseq
        %v4150 = vshrl.u32 %v4149, 7
        %v4151 = vsub.s32 %v4148, %v4150
        %v4152 = vrot.slane %v4144, %v4151
        %v4154 = vunpack.c.l.s4 1983009808
        %v4155 = vunpack.c.0.s8 %v4154
        %v4156 = vlaneseq
        %v4157 = vshrl.u32 %v4156, 7
        %v4158 = vsub.s32 %v4155, %v4157
        %v4159 = vrot.slane %v4145, %v4158
        %v4160 = vcombine.low %v4152, %v4159
        %v4161 = vcombine.low %v4090, %v4091
        %v4162 = vcombine.low %v4092, %v4093
        %v4164 = vunpack.c.l.s4 1983009808
        %v4165 = vunpack.c.0.s8 %v4164
        %v4166 = vlaneseq
        %v4167 = vshrl.u32 %v4166, 7
        %v4168 = vsub.s32 %v4165, %v4167
        %v4169 = vrot.slane %v4161, %v4168
        %v4171 = vunpack.c.l.s4 1983009808
        %v4172 = vunpack.c.0.s8 %v4171
        %v4173 = vlaneseq
        %v4174 = vshrl.u32 %v4173, 7
        %v4175 = vsub.s32 %v4172, %v4174
        %v4176 = vrot.slane %v4162, %v4175
        %v4177 = vcombine.low %v4169, %v4176
        %4182 = vst [vmem:[%s236] sm:$0xff] %v4126
        %4183 = vst [vmem:[%s236 + $0x8] sm:$0xff] %v4143
        %4184 = vst [vmem:[%s236 + $0x10] sm:$0xff] %v4160
        %4185 = vst [vmem:[%s236 + $0x18] sm:$0xff] %v4177
        %s4186 = sand.u32 %s102, 1
        %s4187 = scalar_lea.sflag [#allocation4], %s4186
        %s4188 = sand.u32 %s102, 1
        %s4189 = smul.addr %s4188, 32
        %s4190 = scalar_lea.vmem [#allocation8], %s4189
        // Predicated region
        $region45: #{tpu_custom_call.1} parent=31 // pred_check
          %p4191 = pneg %p112
        $region46: #{tpu_custom_call.1} parent=31 // pred_check_branch
          %4193 = sbr.rel (%p4191) target = $region48
        $region47: #{tpu_custom_call.1} parent=31 // pred_region
          %s4194 = smul.u32 16, %s21
          %s4196 = ssub.s32 512, 512
          %4197 = vsyncadd %s4187, %s4196
          %s4198 = smul.addr %s4194, 32
          %s4199 = scalar_lea.hbm %s3, %s4198
          %s4201 = sshll.u32 %s4190, 4
          %s4202 = int_to_ptr.vmem [resolvable:$true] %s4201
          %4204 = dma.vmem_to_hbm [thread:$0]  %s4202, 512, %s4199, %s4187
        $region48: #{tpu_custom_call.1} parent=31 // pred_fallthru
          _
      $region32: #{tpu_custom_call.1} parent=5 // pred_fallthru
        _
      %p4205 = scmp.le.s32.totalorder 2, %s16
      // Predicated region
      $region49: #{tpu_custom_call.1} parent=5 // pred_check
        %p4206 = pneg %p4205
      $region50: #{tpu_custom_call.1} parent=5 // pred_check_branch
        %4208 = sbr.rel (%p4206) target = $region52
      $region51: #{tpu_custom_call.1} parent=5 // pred_region
        %s4209 = ssub.s32 %s16, 2
        // Predicated region
        $region53: #{tpu_custom_call.1} parent=51 // pred_check
          %p4210 = pneg %p118
        $region54: #{tpu_custom_call.1} parent=51 // pred_check_branch
          %4212 = sbr.rel (%p4210) target = $region56
        $region55: #{tpu_custom_call.1} parent=51 // pred_region
          %s4213 = sand.u32 %s103, 1
          %s4214 = scalar_lea.sflag [#allocation4], %s4213
          %s4215 = sand.u32 %s103, 1
          %s4216 = smul.addr %s4215, 32
          %s4217 = scalar_lea.vmem [#allocation8], %s4216
          %4218 = dma.done %s4214, 512
        $region56: #{tpu_custom_call.1} parent=51 // pred_fallthru
          _
      $region52: #{tpu_custom_call.1} parent=5 // pred_fallthru
        _
    $region6: #{tpu_custom_call.1} parent=1 // loop_footer
      %s20 = sadd.s32 1, %s16
    $region7: #{tpu_custom_call.1} parent=1 // loop_footer_branch
      %15 = sbr.rel target = $region3
    $region8: #{tpu_custom_call.1} parent=1 // loop_exit
      _
    %4219 = vsyncpa [#allocation3], 1
    %s4220 = scalar_lea.sflag [#allocation3], 1
    %4221 = vsyncpa %s4220, 1
    %4222 = vsyncpa [#allocation6], 1
    %s4223 = scalar_lea.sflag [#allocation6], 1
    %4224 = vsyncpa %s4223, 1
    %4225 = vsyncpa [#allocation4], 1
    %s4226 = scalar_lea.sflag [#allocation4], 1
    %4227 = vsyncpa %s4226, 1

</llo_original>
